<compile_context>
chip_gen: v7x
topology: tpu7x:2x2x1
jax: 0.10.0
libtpu: 0.0.40
codegen_flags: <defaults>
</compile_context>

<pallas_src>
import math
from functools import partial

import jax
import jax.numpy as jnp
from jax import lax
from jax.experimental import pallas as pl
from jax.experimental.pallas import tpu as pltpu

_GELU_C = math.sqrt(2.0 / math.pi)
_VMEM_LIMIT_BYTES = 48 * 1024 * 1024    # explicit scoped-VMEM cap (< v7x's 64 MiB physical)
_VMEM_BUDGET_BYTES = 40 * 1024 * 1024   # tile-picker budget (headroom under the cap)


def gelu_tanh(v):
    return 0.5 * v * (1.0 + jnp.tanh(_GELU_C * (v + 0.044715 * (v * v * v))))


# ---------------------------------------------------------------------------
# Fused CrossFormerBlock kernel (one tile = several whole attention windows)
# ---------------------------------------------------------------------------
def fused_block_kernel(x_ref, bias_ref,
                       ln1g_ref, ln1b_ref, wqkv_ref, bqkv_ref, wp_ref, bp_ref,
                       ln2g_ref, ln2b_ref, w1_ref, b1_ref, w2_ref, b2_ref,
                       o_ref, attn_buf):
    xf = x_ref[...]                                   # (TOK, C) f32, TOK = WB * N
    TOK, C = xf.shape
    nh, N, _ = bias_ref.shape
    WB = TOK // N
    hd = C // nh

    def layernorm(v, g, b):
        mu = jnp.mean(v, axis=-1, keepdims=True)
        var = jnp.mean(jnp.square(v - mu), axis=-1, keepdims=True)
        return (v - mu) * lax.rsqrt(var + 1e-5) * g + b

    # ---------------- attention ----------------
    xn = layernorm(xf, ln1g_ref[...], ln1b_ref[...])
    # Fused QKV: one wide bf16 matmul (attention scale already folded into q columns).
    qkv = jnp.dot(xn.astype(jnp.bfloat16), wqkv_ref[...],
                  preferred_element_type=jnp.float32) + bqkv_ref[...]
    bias = bias_ref[...]

    for h in range(nh):
        q_h = qkv[:, h * hd:(h + 1) * hd].astype(jnp.bfloat16).reshape(WB, N, hd)
        k_h = qkv[:, C + h * hd:C + (h + 1) * hd].astype(jnp.bfloat16).reshape(WB, N, hd)
        v_h = qkv[:, 2 * C + h * hd:2 * C + (h + 1) * hd].astype(jnp.bfloat16).reshape(WB, N, hd)

        s = jnp.einsum('wnd,wmd->wnm', q_h, k_h,
                       preferred_element_type=jnp.float32) + bias[h][None]
        m = jnp.max(s, axis=-1, keepdims=True)
        e = jnp.exp(s - m)
        l = jnp.sum(e, axis=-1, keepdims=True)
        o_h = jnp.einsum('wnm,wmd->wnd', e.astype(jnp.bfloat16), v_h,
                         preferred_element_type=jnp.float32)
        o_h = o_h * (1.0 / l)                         # softmax normalization folded after attn@v
        # "concat" of heads = cheap lane-block stores into one VMEM buffer
        attn_buf[:, h * hd:(h + 1) * hd] = o_h.reshape(TOK, hd)

    # Single wide output projection over the full C contraction depth.
    attn_out = jnp.dot(attn_buf[...].astype(jnp.bfloat16), wp_ref[...],
                       preferred_element_type=jnp.float32) + bp_ref[...]
    x1 = xf + attn_out                                # residual 1

    # ---------------- MLP ----------------
    xn2 = layernorm(x1, ln2g_ref[...], ln2b_ref[...])
    h1 = jnp.dot(xn2.astype(jnp.bfloat16), w1_ref[...],
                 preferred_element_type=jnp.float32) + b1_ref[...]
    h1 = gelu_tanh(h1)
    mlp = jnp.dot(h1.astype(jnp.bfloat16), w2_ref[...],
                  preferred_element_type=jnp.float32) + b2_ref[...]

    o_ref[...] = (x1 + mlp).astype(o_ref.dtype)       # residual 2


# ---------------------------------------------------------------------------
# VMEM model + tile picker
# ---------------------------------------------------------------------------
def _block_vmem_bytes(tok, C, hidden, nh, N):
    f32, bf16 = 4, 2
    io = 2 * (tok * C * f32) * 2                                    # x + out tiles, double-buffered
    wts = 2 * bf16 * (C * 3 * C + C * C + C * hidden + hidden * C)  # wqkv/wp/w1/w2, 2 buffers each
    vecs = 2 * f32 * (3 * C + 6 * C + 2 * hidden)                   # biases + LN params (generous)
    bias = 2 * f32 * nh * N * N
    inter = tok * (f32 * (C + 3 * C + C + hidden + 2 * C)           # xn, qkv, attn_buf, h1, x1, mlp
                   + bf16 * (C + 3 * C + C + hidden))               # bf16 operand copies
    return io + wts + vecs + bias + inter


def _pick_windows_per_step(B_, N, C, hidden, nh, vmem_budget=_VMEM_BUDGET_BYTES):
    """Largest divisor of B_ whose tile fits the VMEM budget; keep >=2 grid steps
    when possible so v7x's two TensorCores can both be used (negligible cost on
    single-TensorCore v5e/v6e)."""
    divs = [w for w in range(1, B_ + 1) if B_ % w == 0]
    ok = [w for w in divs
          if ((w * N) % 8 == 0 or w == B_)
          and _block_vmem_bytes(w * N, C, hidden, nh, N) <= vmem_budget]
    if not ok:
        ok = [1]
    multi = [w for w in ok if B_ // w >= 2]
    pool = multi if multi else ok
    return max(pool)


def run_block_pallas(xg, arrs):
    """xg: (B_, N, C) window-grouped tokens (f32). arrs: prepared block arrays."""
    B_, N, C = xg.shape
    rel_bias = arrs['rel_bias']
    nh = rel_bias.shape[0]
    hidden = arrs['w1'].shape[1]

    xf = xg.reshape(B_ * N, C)                        # fold windows into a 2-D M = B_*N slab
    WB = _pick_windows_per_step(B_, N, C, hidden, nh)
    TOK = WB * N
    grid = (B_ // WB,)

    weights = (arrs['ln1_g'], arrs['ln1_b'], arrs['wqkv'], arrs['bqkv'],
               arrs['wp'], arrs['bp'], arrs['ln2_g'], arrs['ln2_b'],
               arrs['w1'], arrs['b1'], arrs['w2'], arrs['b2'])

    in_specs = [pl.BlockSpec((TOK, C), lambda i: (i, 0)),
                pl.BlockSpec(rel_bias.shape, lambda i: (0, 0, 0))]
    # TODO(synk): for large-C stages these grid-invariant weights would ideally be
    # single-buffered; the VMEM model above conservatively accounts for 2 buffers.
    in_specs += [pl.BlockSpec(w.shape, lambda i: (0, 0)) for w in weights]

    yf = pl.pallas_call(
        fused_block_kernel,
        out_shape=jax.ShapeDtypeStruct((B_ * N, C), jnp.float32),
        grid_spec=pltpu.PrefetchScalarGridSpec(
            num_scalar_prefetch=0,
            grid=grid,
            in_specs=in_specs,
            out_specs=pl.BlockSpec((TOK, C), lambda i: (i, 0)),
            scratch_shapes=[pltpu.VMEM((TOK, C), jnp.float32)],
        ),
        compiler_params=pltpu.CompilerParams(
            dimension_semantics=("parallel",),
            vmem_limit_bytes=_VMEM_LIMIT_BYTES),
    )(xf, rel_bias, *weights)
    return yf.reshape(B_, N, C)


# ---------------------------------------------------------------------------
# Window (LSDA) grouping — layout plumbing, fused by XLA under jit
# ---------------------------------------------------------------------------
def group_tokens(x, H, W, lsda_flag, group_size, interval):
    B, L, C = x.shape
    xi = x.reshape(B, H, W, C)
    if lsda_flag == 0:                                # SDA
        G = group_size
        xg = xi.reshape(B, H // G, G, W // G, G, C)
        xg = xg.transpose(0, 1, 3, 2, 4, 5).reshape(-1, G * G, C)
        return xg
    I = interval                                      # LDA
    Gh, Gw = H // I, W // I
    xg = xi.reshape(B, Gh, I, Gw, I, C)
    xg = xg.transpose(0, 2, 4, 1, 3, 5).reshape(-1, Gh * Gw, C)
    return xg


def ungroup_tokens(y, B, H, W, C, lsda_flag, group_size, interval):
    if lsda_flag == 0:
        G = group_size
        y = y.reshape(B, H // G, W // G, G, G, C).transpose(0, 1, 3, 2, 4, 5)
    else:
        I = interval
        Gh, Gw = H // I, W // I
        y = y.reshape(B, I, I, Gh, Gw, C).transpose(0, 3, 1, 4, 2, 5)
    return y.reshape(B, H * W, C)


def regroup_tokens(yg, B, H, W, C, from_layout, to_layout):
    """Block i's ungroup + block i+1's group as one composite permutation (XLA fuses)."""
    x = ungroup_tokens(yg, B, H, W, C, from_layout[0], from_layout[1], from_layout[2])
    return group_tokens(x, H, W, to_layout[0], to_layout[1], to_layout[2])


# ---------------------------------------------------------------------------
# DynamicPosBias (residual=False) + relative-position-index gather — precomputed
# once per block config in plain JAX (fed to the kernel as a dense (nh, N, N) bias).
# ---------------------------------------------------------------------------
def relative_position_bias(Gh, Gw, pp, num_heads):
    ph = jnp.arange(1 - Gh, Gh, dtype=jnp.float32)
    pw = jnp.arange(1 - Gw, Gw, dtype=jnp.float32)
    bh, bw = jnp.meshgrid(ph, pw, indexing='ij')
    biases = jnp.stack([bh.reshape(-1), bw.reshape(-1)], axis=1)      # (nB, 2)

    def ln(v, g, b):
        mu = jnp.mean(v, -1, keepdims=True)
        var = jnp.mean(jnp.square(v - mu), -1, keepdims=True)
        return (v - mu) * lax.rsqrt(var + 1e-5) * g + b

    pos = biases @ pp['w_proj'] + pp['b_proj']
    pos = jnp.maximum(ln(pos, pp['ln1_g'], pp['ln1_b']), 0.0) @ pp['w1'] + pp['b1']
    pos = jnp.maximum(ln(pos, pp['ln2_g'], pp['ln2_b']), 0.0) @ pp['w2'] + pp['b2']
    pos = jnp.maximum(ln(pos, pp['ln3_g'], pp['ln3_b']), 0.0) @ pp['w3'] + pp['b3']

    ch, cw = jnp.arange(Gh), jnp.arange(Gw)
    mh, mw = jnp.meshgrid(ch, cw, indexing='ij')
    coords = jnp.stack([mh.reshape(-1), mw.reshape(-1)])               # (2, N)
    rel = (coords[:, :, None] - coords[:, None, :]).transpose(1, 2, 0)  # (N, N, 2)
    idx = (rel[..., 0] + Gh - 1) * (2 * Gw - 1) + (rel[..., 1] + Gw - 1)

    rpb = pos[idx.reshape(-1)].reshape(Gh * Gw, Gh * Gw, num_heads)
    return rpb.transpose(2, 0, 1).astype(jnp.float32)                 # (nh, N, N)


# ---------------------------------------------------------------------------
# One-time parameter preparation (QKV fusion, scale folding, bf16 weight cast,
# dense relative-position bias per block config)
# ---------------------------------------------------------------------------
def prepare_block_params(p, num_heads, Gh, Gw):
    C = p['wq'].shape[0]
    hidden = p['w1'].shape[1]
    hd = C // num_heads
    scale = hd ** (-0.5)
    wqkv = jnp.concatenate([p['wq'] * scale, p['wk'], p['wv']], axis=1).astype(jnp.bfloat16)
    bqkv = jnp.concatenate([p['bq'] * scale, p['bk'], p['bv']]).reshape(1, 3 * C)
    return dict(
        rel_bias=relative_position_bias(Gh, Gw, p['pos'], num_heads),
        ln1_g=p['ln1_g'].reshape(1, C), ln1_b=p['ln1_b'].reshape(1, C),
        wqkv=wqkv, bqkv=bqkv.astype(jnp.float32),
        wp=p['wp'].astype(jnp.bfloat16), bp=p['bp'].reshape(1, C),
        ln2_g=p['ln2_g'].reshape(1, C), ln2_b=p['ln2_b'].reshape(1, C),
        w1=p['w1'].astype(jnp.bfloat16), b1=p['b1'].reshape(1, hidden),
        w2=p['w2'].astype(jnp.bfloat16), b2=p['b2'].reshape(1, C),
    )


def prepare_stage(block_params, H, W, cfg):
    group_size0, interval, nh = cfg['group_size'], cfg['interval'], cfg['num_heads']
    layouts, arrays = [], []
    for i, p in enumerate(block_params):
        lsda_flag = 0 if i % 2 == 0 else 1
        group_size = group_size0
        if min(H, W) <= group_size:                   # same adjustment as the PyTorch block
            lsda_flag = 0
            group_size = min(H, W)
        size_div = interval if lsda_flag == 1 else group_size
        assert H % size_div == 0 and W % size_div == 0, (
            "demo uses H,W divisible by group_size/interval (no padding / no mask)")
        if lsda_flag == 0:
            Gh = Gw = group_size
        else:
            Gh, Gw = H // interval, W // interval
        layouts.append((lsda_flag, group_size, interval, Gh, Gw))
        arrays.append(prepare_block_params(p, nh, Gh, Gw))
    return tuple(layouts), tuple(arrays)


# ---------------------------------------------------------------------------
# Stage forward (Pallas), jitted so all inter-block layout plumbing fuses
# ---------------------------------------------------------------------------
@partial(jax.jit, static_argnames=("H", "W", "layouts"))
def stage_forward_pallas(x, block_arrays, *, H, W, layouts):
    B, L, C = x.shape
    assert L == H * W
    yg, prev = None, None
    for layout, arrs in zip(layouts, block_arrays):
        if prev is None:
            xg = group_tokens(x, H, W, layout[0], layout[1], layout[2])
        else:
            xg = regroup_tokens(yg, B, H, W, C, prev, layout)
        yg = run_block_pallas(xg, arrs)
        prev = layout
    x_out = ungroup_tokens(yg, B, H, W, C, prev[0], prev[1], prev[2])
    feat = x_out.reshape(B, H, W, C).transpose(0, 3, 1, 2)   # (B, C, H, W)
    return feat, x_out                                       # downsample is None


# ---------------------------------------------------------------------------
# Plain-JAX f32 reference (mirrors the PyTorch forward, eval mode)
# ---------------------------------------------------------------------------
def run_block_ref(xg, rel_bias, p):
    B_, N, C = xg.shape
    nh = rel_bias.shape[0]
    hd = C // nh
    scale = hd ** (-0.5)

    def layernorm(v, g, b):
        mu = jnp.mean(v, -1, keepdims=True)
        var = jnp.mean(jnp.square(v - mu), -1, keepdims=True)
        return (v - mu) * lax.rsqrt(var + 1e-5) * g + b

    xn = layernorm(xg, p['ln1_g'], p['ln1_b'])
    q = xn @ p['wq'] + p['bq']
    k = xn @ p['wk'] + p['bk']
    v = xn @ p['wv'] + p['bv']

    def heads(t):
        return t.reshape(B_, N, nh, hd).transpose(0, 2, 1, 3)   # (B_, nh, N, hd)

    qh, kh, vh = heads(q) * scale, heads(k), heads(v)
    attn = jnp.einsum('bhnd,bhmd->bhnm', qh, kh) + rel_bias[None]
    attn = jax.nn.softmax(attn, axis=-1)
    out = jnp.einsum('bhnm,bhmd->bhnd', attn, vh)
    out = out.transpose(0, 2, 1, 3).reshape(B_, N, C)
    out = out @ p['wp'] + p['bp']

    x1 = xg + out
    xn2 = layernorm(x1, p['ln2_g'], p['ln2_b'])
    h1 = gelu_tanh(xn2 @ p['w1'] + p['b1'])
    mlp = h1 @ p['w2'] + p['b2']
    return x1 + mlp


def crossformer_block_ref(x, H, W, p, cfg, lsda_flag):
    B, L, C = x.shape
    group_size, interval, nh = cfg['group_size'], cfg['interval'], cfg['num_heads']
    if min(H, W) <= group_size:
        lsda_flag = 0
        group_size = min(H, W)
    size_div = interval if lsda_flag == 1 else group_size
    assert H % size_div == 0 and W % size_div == 0
    if lsda_flag == 0:
        Gh = Gw = group_size
    else:
        Gh, Gw = H // interval, W // interval
    xg = group_tokens(x, H, W, lsda_flag, group_size, interval)
    rel_bias = relative_position_bias(Gh, Gw, p['pos'], nh)
    yg = run_block_ref(xg, rel_bias, p)
    return ungroup_tokens(yg, B, H, W, C, lsda_flag, group_size, interval)


def stage_forward_ref(x, H, W, block_params, cfg):
    for i, p in enumerate(block_params):
        lsda_flag = 0 if i % 2 == 0 else 1
        x = crossformer_block_ref(x, H, W, p, cfg, lsda_flag)
    B, L, C = x.shape
    feat = x.reshape(B, H, W, C).transpose(0, 3, 1, 2)
    return feat, x


# ---------------------------------------------------------------------------
# Synthetic parameters
# ---------------------------------------------------------------------------
def make_block_params(key, C, num_heads, hidden, pos_dim):
    ks = iter(jax.random.split(key, 32))

    def w(shape, s):
        return jax.random.normal(next(ks), shape, jnp.float32) * s

    return dict(
        ln1_g=1.0 + w((C,), 0.05), ln1_b=w((C,), 0.05),
        wq=w((C, C), 0.08), wk=w((C, C), 0.08), wv=w((C, C), 0.08),
        bq=w((C,), 0.02), bk=w((C,), 0.02), bv=w((C,), 0.02),
        wp=w((C, C), 0.08), bp=w((C,), 0.02),
        ln2_g=1.0 + w((C,), 0.05), ln2_b=w((C,), 0.05),
        w1=w((C, hidden), 0.08), b1=w((hidden,), 0.02),
        w2=w((hidden, C), 0.08), b2=w((C,), 0.02),
        pos=dict(
            w_proj=w((2, pos_dim), 0.2), b_proj=w((pos_dim,), 0.02),
            ln1_g=1.0 + w((pos_dim,), 0.05), ln1_b=w((pos_dim,), 0.05),
            w1=w((pos_dim, pos_dim), 0.2), b1=w((pos_dim,), 0.02),
            ln2_g=1.0 + w((pos_dim,), 0.05), ln2_b=w((pos_dim,), 0.05),
            w2=w((pos_dim, pos_dim), 0.2), b2=w((pos_dim,), 0.02),
            ln3_g=1.0 + w((pos_dim,), 0.05), ln3_b=w((pos_dim,), 0.05),
            w3=w((pos_dim, num_heads), 0.2), b3=w((num_heads,), 0.02),
        ),
    )


def make_stage_params(key, depth, C, num_heads, mlp_ratio):
    hidden = int(C * mlp_ratio)
    pos_dim = (C // 4) // 4               # DynamicPosBias(dim=C//4).pos_dim
    keys = jax.random.split(key, depth)
    return [make_block_params(k, C, num_heads, hidden, pos_dim) for k in keys]


# ---------------------------------------------------------------------------
if __name__ == "__main__":
    # Stage(dim=64, depth=2, num_heads=4, group_size=4, interval=2, mlp_ratio=4)
    B, C, H, W = 2, 64, 8, 8
    depth, num_heads, group_size, interval, mlp_ratio = 2, 4, 4, 2, 4.0
    cfg = dict(group_size=group_size, interval=interval, num_heads=num_heads)

    key = jax.random.PRNGKey(0)
    kx, kp = jax.random.split(key)
    x = jax.random.normal(kx, (B, H * W, C), jnp.float32)   # (B, L, C) tokens
    params = make_stage_params(kp, depth, C, num_heads, mlp_ratio)

    # One-time precompute: fused/bf16 weights + dense relative-position biases.
    layouts, block_arrays = prepare_stage(params, H, W, cfg)

    feat, x_out = stage_forward_pallas(x, block_arrays, H=H, W=W, layouts=layouts)
    feat = jax.block_until_ready(feat)
    x_out = jax.block_until_ready(x_out)

    feat_ref, x_ref_out = stage_forward_ref(x, H, W, params, cfg)

    assert feat.shape == (B, C, H, W)
    assert x_out.shape == (B, H * W, C)
    # bf16 matmul operands (f32 accumulation) => loosened tolerance vs. the f32 reference.
    err_abs = float(jnp.max(jnp.abs(x_out - x_ref_out)))
    err_rel = float(jnp.linalg.norm(x_out - x_ref_out) / jnp.linalg.norm(x_ref_out))
    err_feat = float(jnp.max(jnp.abs(feat - feat_ref)))
    assert err_abs < 0.2 and err_feat < 0.2 and err_rel < 0.03, (err_abs, err_feat, err_rel)

    print("KERNEL_OK")
</pallas_src>

<mosaic_0001>
module attributes {stable_mosaic.version = 11 : i64} {
  func.func @fused_block_kernel(%arg0: i32, %arg1: memref<64x64xf32, #tpu.memory_space<vmem>>, %arg2: memref<4x16x16xf32, #tpu.memory_space<vmem>>, %arg3: memref<1x64xf32, #tpu.memory_space<vmem>>, %arg4: memref<1x64xf32, #tpu.memory_space<vmem>>, %arg5: memref<64x192xbf16, #tpu.memory_space<vmem>>, %arg6: memref<1x192xf32, #tpu.memory_space<vmem>>, %arg7: memref<64x64xbf16, #tpu.memory_space<vmem>>, %arg8: memref<1x64xf32, #tpu.memory_space<vmem>>, %arg9: memref<1x64xf32, #tpu.memory_space<vmem>>, %arg10: memref<1x64xf32, #tpu.memory_space<vmem>>, %arg11: memref<64x256xbf16, #tpu.memory_space<vmem>>, %arg12: memref<1x256xf32, #tpu.memory_space<vmem>>, %arg13: memref<256x64xbf16, #tpu.memory_space<vmem>>, %arg14: memref<1x64xf32, #tpu.memory_space<vmem>>, %arg15: memref<64x64xf32, #tpu.memory_space<vmem>>, %arg16: memref<64x64xf32, #tpu.memory_space<vmem>>) attributes {dimension_semantics = [#tpu.dimension_semantics<parallel>], iteration_bounds = array<i64: 2>, scalar_prefetch = 0 : i64, scratch_operands = 1 : i64, tpu.core_type = #tpu.core_type<tc>, window_params = [{transform_indices = @transform_0, window_bounds = array<i64: 64, 64>}, {pipeline_mode = #tpu.pipeline_mode<synchronous>, transform_indices = @transform_1, window_bounds = array<i64: 4, 16, 16>}, {pipeline_mode = #tpu.pipeline_mode<synchronous>, transform_indices = @transform_2, window_bounds = array<i64: 1, 64>}, {pipeline_mode = #tpu.pipeline_mode<synchronous>, transform_indices = @transform_3, window_bounds = array<i64: 1, 64>}, {pipeline_mode = #tpu.pipeline_mode<synchronous>, transform_indices = @transform_4, window_bounds = array<i64: 64, 192>}, {pipeline_mode = #tpu.pipeline_mode<synchronous>, transform_indices = @transform_5, window_bounds = array<i64: 1, 192>}, {pipeline_mode = #tpu.pipeline_mode<synchronous>, transform_indices = @transform_6, window_bounds = array<i64: 64, 64>}, {pipeline_mode = #tpu.pipeline_mode<synchronous>, transform_indices = @transform_7, window_bounds = array<i64: 1, 64>}, {pipeline_mode = #tpu.pipeline_mode<synchronous>, transform_indices = @transform_8, window_bounds = array<i64: 1, 64>}, {pipeline_mode = #tpu.pipeline_mode<synchronous>, transform_indices = @transform_9, window_bounds = array<i64: 1, 64>}, {pipeline_mode = #tpu.pipeline_mode<synchronous>, transform_indices = @transform_10, window_bounds = array<i64: 64, 256>}, {pipeline_mode = #tpu.pipeline_mode<synchronous>, transform_indices = @transform_11, window_bounds = array<i64: 1, 256>}, {pipeline_mode = #tpu.pipeline_mode<synchronous>, transform_indices = @transform_12, window_bounds = array<i64: 256, 64>}, {pipeline_mode = #tpu.pipeline_mode<synchronous>, transform_indices = @transform_13, window_bounds = array<i64: 1, 64>}, {transform_indices = @transform_14, window_bounds = array<i64: 64, 64>}]} {
    %c0 = arith.constant 0 : index
    %c0_0 = arith.constant 0 : index
    %0 = vector.load %arg1[%c0, %c0_0] : memref<64x64xf32, #tpu.memory_space<vmem>>, vector<64x64xf32>
    %c0_1 = arith.constant 0 : index
    %c0_2 = arith.constant 0 : index
    %1 = vector.load %arg3[%c0_1, %c0_2] : memref<1x64xf32, #tpu.memory_space<vmem>>, vector<1x64xf32>
    %c0_3 = arith.constant 0 : index
    %c0_4 = arith.constant 0 : index
    %2 = vector.load %arg4[%c0_3, %c0_4] : memref<1x64xf32, #tpu.memory_space<vmem>>, vector<1x64xf32>
    %cst = arith.constant dense<0.000000e+00> : vector<64xf32>
    %3 = vector.multi_reduction <add>, %0, %cst [1] : vector<64x64xf32> to vector<64xf32>
    %4 = vector.shape_cast %3 : vector<64xf32> to vector<64x1xf32>
    %cst_5 = arith.constant 6.400000e+01 : f32
    %5 = vector.broadcast %cst_5 : f32 to vector<64x1xf32>
    %6 = arith.divf %4, %5 : vector<64x1xf32>
    %7 = vector.broadcast %6 : vector<64x1xf32> to vector<64x64xf32>
    %8 = arith.subf %0, %7 : vector<64x64xf32>
    %9 = arith.mulf %8, %8 : vector<64x64xf32>
    %cst_6 = arith.constant dense<0.000000e+00> : vector<64xf32>
    %10 = vector.multi_reduction <add>, %9, %cst_6 [1] : vector<64x64xf32> to vector<64xf32>
    %11 = vector.shape_cast %10 : vector<64xf32> to vector<64x1xf32>
    %cst_7 = arith.constant 6.400000e+01 : f32
    %12 = vector.broadcast %cst_7 : f32 to vector<64x1xf32>
    %13 = arith.divf %11, %12 : vector<64x1xf32>
    %14 = vector.broadcast %6 : vector<64x1xf32> to vector<64x64xf32>
    %15 = arith.subf %0, %14 : vector<64x64xf32>
    %cst_8 = arith.constant 9.99999974E-6 : f32
    %16 = vector.broadcast %cst_8 : f32 to vector<64x1xf32>
    %17 = arith.addf %13, %16 : vector<64x1xf32>
    %18 = math.rsqrt %17 : vector<64x1xf32>
    %19 = vector.broadcast %18 : vector<64x1xf32> to vector<64x64xf32>
    %20 = arith.mulf %15, %19 : vector<64x64xf32>
    %21 = vector.broadcast %1 : vector<1x64xf32> to vector<64x64xf32>
    %22 = arith.mulf %20, %21 : vector<64x64xf32>
    %23 = vector.broadcast %2 : vector<1x64xf32> to vector<64x64xf32>
    %24 = arith.addf %22, %23 : vector<64x64xf32>
    %25 = arith.truncf %24 : vector<64x64xf32> to vector<64x64xbf16>
    %c0_9 = arith.constant 0 : index
    %c0_10 = arith.constant 0 : index
    %26 = vector.load %arg5[%c0_9, %c0_10] : memref<64x192xbf16, #tpu.memory_space<vmem>>, vector<64x192xbf16>
    %cst_11 = arith.constant dense<0.000000e+00> : vector<64x192xf32>
    %27 = tpu.matmul %25, %26, %cst_11 {dimension_numbers = #tpu.dot_dimension_numbers<[1], [0], [0], [1], [0, 0, 1, 1], [], []>} : vector<64x64xbf16>, vector<64x192xbf16>, vector<64x192xf32> -> vector<64x192xf32>
    %c0_12 = arith.constant 0 : index
    %c0_13 = arith.constant 0 : index
    %28 = vector.load %arg6[%c0_12, %c0_13] : memref<1x192xf32, #tpu.memory_space<vmem>>, vector<1x192xf32>
    %29 = vector.broadcast %28 : vector<1x192xf32> to vector<64x192xf32>
    %30 = arith.addf %27, %29 : vector<64x192xf32>
    %c0_14 = arith.constant 0 : index
    %c0_15 = arith.constant 0 : index
    %c0_16 = arith.constant 0 : index
    %31 = vector.load %arg2[%c0_14, %c0_15, %c0_16] : memref<4x16x16xf32, #tpu.memory_space<vmem>>, vector<4x16x16xf32>
    %32 = vector.extract_strided_slice %30 {offsets = [0, 0], sizes = [64, 16], strides = [1, 1]} : vector<64x192xf32> to vector<64x16xf32>
    %33 = arith.truncf %32 : vector<64x16xf32> to vector<64x16xbf16>
    %34 = vector.shape_cast %33 : vector<64x16xbf16> to vector<4x16x16xbf16>
    %35 = vector.extract_strided_slice %30 {offsets = [0, 64], sizes = [64, 16], strides = [1, 1]} : vector<64x192xf32> to vector<64x16xf32>
    %36 = arith.truncf %35 : vector<64x16xf32> to vector<64x16xbf16>
    %37 = vector.shape_cast %36 : vector<64x16xbf16> to vector<4x16x16xbf16>
    %38 = vector.extract_strided_slice %30 {offsets = [0, 128], sizes = [64, 16], strides = [1, 1]} : vector<64x192xf32> to vector<64x16xf32>
    %39 = arith.truncf %38 : vector<64x16xf32> to vector<64x16xbf16>
    %40 = vector.shape_cast %39 : vector<64x16xbf16> to vector<4x16x16xbf16>
    "tpu.trace_start"() <{level = 10 : i32, message = "wnd,wmd->wnm"}> : () -> ()
    %cst_17 = arith.constant dense<0.000000e+00> : vector<4x16x16xf32>
    %41 = tpu.matmul %34, %37, %cst_17 {dimension_numbers = #tpu.dot_dimension_numbers<[2], [2], [1], [1], [0, 0, 0, 1, 1, 1], [0], [0]>} : vector<4x16x16xbf16>, vector<4x16x16xbf16>, vector<4x16x16xf32> -> vector<4x16x16xf32>
    "tpu.trace_stop"() : () -> ()
    %42 = vector.extract_strided_slice %31 {offsets = [0, 0, 0], sizes = [1, 16, 16], strides = [1, 1, 1]} : vector<4x16x16xf32> to vector<1x16x16xf32>
    %43 = vector.shape_cast %42 : vector<1x16x16xf32> to vector<16x16xf32>
    %44 = vector.shape_cast %43 : vector<16x16xf32> to vector<1x16x16xf32>
    %45 = vector.broadcast %44 : vector<1x16x16xf32> to vector<4x16x16xf32>
    %46 = arith.addf %41, %45 : vector<4x16x16xf32>
    %cst_18 = arith.constant dense<0xFF800000> : vector<4x16xf32>
    %47 = vector.multi_reduction <maximumf>, %46, %cst_18 [2] : vector<4x16x16xf32> to vector<4x16xf32>
    %48 = vector.shape_cast %47 : vector<4x16xf32> to vector<4x16x1xf32>
    %49 = vector.broadcast %48 : vector<4x16x1xf32> to vector<4x16x16xf32>
    %50 = arith.subf %46, %49 : vector<4x16x16xf32>
    %51 = math.exp %50 : vector<4x16x16xf32>
    %cst_19 = arith.constant dense<0.000000e+00> : vector<4x16xf32>
    %52 = vector.multi_reduction <add>, %51, %cst_19 [2] : vector<4x16x16xf32> to vector<4x16xf32>
    %53 = vector.shape_cast %52 : vector<4x16xf32> to vector<4x16x1xf32>
    %54 = arith.truncf %51 : vector<4x16x16xf32> to vector<4x16x16xbf16>
    "tpu.trace_start"() <{level = 10 : i32, message = "wnm,wmd->wnd"}> : () -> ()
    %cst_20 = arith.constant dense<0.000000e+00> : vector<4x16x16xf32>
    %55 = tpu.matmul %54, %40, %cst_20 {dimension_numbers = #tpu.dot_dimension_numbers<[2], [1], [1], [2], [0, 0, 0, 1, 1, 2], [0], [0]>} : vector<4x16x16xbf16>, vector<4x16x16xbf16>, vector<4x16x16xf32> -> vector<4x16x16xf32>
    "tpu.trace_stop"() : () -> ()
    %cst_21 = arith.constant 1.000000e+00 : f32
    %56 = vector.broadcast %cst_21 : f32 to vector<4x16x1xf32>
    %57 = arith.divf %56, %53 : vector<4x16x1xf32>
    %58 = vector.broadcast %57 : vector<4x16x1xf32> to vector<4x16x16xf32>
    %59 = arith.mulf %55, %58 : vector<4x16x16xf32>
    %60 = vector.shape_cast %59 : vector<4x16x16xf32> to vector<64x16xf32>
    %c0_22 = arith.constant 0 : index
    %c0_23 = arith.constant 0 : index
    %61 = vector.load %arg16[%c0_22, %c0_23] : memref<64x64xf32, #tpu.memory_space<vmem>>, vector<64x16xf32>
    tpu.vector_store %arg16[%c0_22, %c0_23], %60 {strides = array<i32>} : memref<64x64xf32, #tpu.memory_space<vmem>>, vector<64x16xf32>,
    %62 = vector.extract_strided_slice %30 {offsets = [0, 16], sizes = [64, 16], strides = [1, 1]} : vector<64x192xf32> to vector<64x16xf32>
    %63 = arith.truncf %62 : vector<64x16xf32> to vector<64x16xbf16>
    %64 = vector.shape_cast %63 : vector<64x16xbf16> to vector<4x16x16xbf16>
    %65 = vector.extract_strided_slice %30 {offsets = [0, 80], sizes = [64, 16], strides = [1, 1]} : vector<64x192xf32> to vector<64x16xf32>
    %66 = arith.truncf %65 : vector<64x16xf32> to vector<64x16xbf16>
    %67 = vector.shape_cast %66 : vector<64x16xbf16> to vector<4x16x16xbf16>
    %68 = vector.extract_strided_slice %30 {offsets = [0, 144], sizes = [64, 16], strides = [1, 1]} : vector<64x192xf32> to vector<64x16xf32>
    %69 = arith.truncf %68 : vector<64x16xf32> to vector<64x16xbf16>
    %70 = vector.shape_cast %69 : vector<64x16xbf16> to vector<4x16x16xbf16>
    "tpu.trace_start"() <{level = 10 : i32, message = "wnd,wmd->wnm"}> : () -> ()
    %cst_24 = arith.constant dense<0.000000e+00> : vector<4x16x16xf32>
    %71 = tpu.matmul %64, %67, %cst_24 {dimension_numbers = #tpu.dot_dimension_numbers<[2], [2], [1], [1], [0, 0, 0, 1, 1, 1], [0], [0]>} : vector<4x16x16xbf16>, vector<4x16x16xbf16>, vector<4x16x16xf32> -> vector<4x16x16xf32>
    "tpu.trace_stop"() : () -> ()
    %72 = vector.extract_strided_slice %31 {offsets = [1, 0, 0], sizes = [1, 16, 16], strides = [1, 1, 1]} : vector<4x16x16xf32> to vector<1x16x16xf32>
    %73 = vector.shape_cast %72 : vector<1x16x16xf32> to vector<16x16xf32>
    %74 = vector.shape_cast %73 : vector<16x16xf32> to vector<1x16x16xf32>
    %75 = vector.broadcast %74 : vector<1x16x16xf32> to vector<4x16x16xf32>
    %76 = arith.addf %71, %75 : vector<4x16x16xf32>
    %cst_25 = arith.constant dense<0xFF800000> : vector<4x16xf32>
    %77 = vector.multi_reduction <maximumf>, %76, %cst_25 [2] : vector<4x16x16xf32> to vector<4x16xf32>
    %78 = vector.shape_cast %77 : vector<4x16xf32> to vector<4x16x1xf32>
    %79 = vector.broadcast %78 : vector<4x16x1xf32> to vector<4x16x16xf32>
    %80 = arith.subf %76, %79 : vector<4x16x16xf32>
    %81 = math.exp %80 : vector<4x16x16xf32>
    %cst_26 = arith.constant dense<0.000000e+00> : vector<4x16xf32>
    %82 = vector.multi_reduction <add>, %81, %cst_26 [2] : vector<4x16x16xf32> to vector<4x16xf32>
    %83 = vector.shape_cast %82 : vector<4x16xf32> to vector<4x16x1xf32>
    %84 = arith.truncf %81 : vector<4x16x16xf32> to vector<4x16x16xbf16>
    "tpu.trace_start"() <{level = 10 : i32, message = "wnm,wmd->wnd"}> : () -> ()
    %cst_27 = arith.constant dense<0.000000e+00> : vector<4x16x16xf32>
    %85 = tpu.matmul %84, %70, %cst_27 {dimension_numbers = #tpu.dot_dimension_numbers<[2], [1], [1], [2], [0, 0, 0, 1, 1, 2], [0], [0]>} : vector<4x16x16xbf16>, vector<4x16x16xbf16>, vector<4x16x16xf32> -> vector<4x16x16xf32>
    "tpu.trace_stop"() : () -> ()
    %cst_28 = arith.constant 1.000000e+00 : f32
    %86 = vector.broadcast %cst_28 : f32 to vector<4x16x1xf32>
    %87 = arith.divf %86, %83 : vector<4x16x1xf32>
    %88 = vector.broadcast %87 : vector<4x16x1xf32> to vector<4x16x16xf32>
    %89 = arith.mulf %85, %88 : vector<4x16x16xf32>
    %90 = vector.shape_cast %89 : vector<4x16x16xf32> to vector<64x16xf32>
    %c0_29 = arith.constant 0 : index
    %c16 = arith.constant 16 : index
    %91 = vector.load %arg16[%c0_29, %c16] : memref<64x64xf32, #tpu.memory_space<vmem>>, vector<64x16xf32>
    tpu.vector_store %arg16[%c0_29, %c16], %90 {strides = array<i32>} : memref<64x64xf32, #tpu.memory_space<vmem>>, vector<64x16xf32>,
    %92 = vector.extract_strided_slice %30 {offsets = [0, 32], sizes = [64, 16], strides = [1, 1]} : vector<64x192xf32> to vector<64x16xf32>
    %93 = arith.truncf %92 : vector<64x16xf32> to vector<64x16xbf16>
    %94 = vector.shape_cast %93 : vector<64x16xbf16> to vector<4x16x16xbf16>
    %95 = vector.extract_strided_slice %30 {offsets = [0, 96], sizes = [64, 16], strides = [1, 1]} : vector<64x192xf32> to vector<64x16xf32>
    %96 = arith.truncf %95 : vector<64x16xf32> to vector<64x16xbf16>
    %97 = vector.shape_cast %96 : vector<64x16xbf16> to vector<4x16x16xbf16>
    %98 = vector.extract_strided_slice %30 {offsets = [0, 160], sizes = [64, 16], strides = [1, 1]} : vector<64x192xf32> to vector<64x16xf32>
    %99 = arith.truncf %98 : vector<64x16xf32> to vector<64x16xbf16>
    %100 = vector.shape_cast %99 : vector<64x16xbf16> to vector<4x16x16xbf16>
    "tpu.trace_start"() <{level = 10 : i32, message = "wnd,wmd->wnm"}> : () -> ()
    %cst_30 = arith.constant dense<0.000000e+00> : vector<4x16x16xf32>
    %101 = tpu.matmul %94, %97, %cst_30 {dimension_numbers = #tpu.dot_dimension_numbers<[2], [2], [1], [1], [0, 0, 0, 1, 1, 1], [0], [0]>} : vector<4x16x16xbf16>, vector<4x16x16xbf16>, vector<4x16x16xf32> -> vector<4x16x16xf32>
    "tpu.trace_stop"() : () -> ()
    %102 = vector.extract_strided_slice %31 {offsets = [2, 0, 0], sizes = [1, 16, 16], strides = [1, 1, 1]} : vector<4x16x16xf32> to vector<1x16x16xf32>
    %103 = vector.shape_cast %102 : vector<1x16x16xf32> to vector<16x16xf32>
    %104 = vector.shape_cast %103 : vector<16x16xf32> to vector<1x16x16xf32>
    %105 = vector.broadcast %104 : vector<1x16x16xf32> to vector<4x16x16xf32>
    %106 = arith.addf %101, %105 : vector<4x16x16xf32>
    %cst_31 = arith.constant dense<0xFF800000> : vector<4x16xf32>
    %107 = vector.multi_reduction <maximumf>, %106, %cst_31 [2] : vector<4x16x16xf32> to vector<4x16xf32>
    %108 = vector.shape_cast %107 : vector<4x16xf32> to vector<4x16x1xf32>
    %109 = vector.broadcast %108 : vector<4x16x1xf32> to vector<4x16x16xf32>
    %110 = arith.subf %106, %109 : vector<4x16x16xf32>
    %111 = math.exp %110 : vector<4x16x16xf32>
    %cst_32 = arith.constant dense<0.000000e+00> : vector<4x16xf32>
    %112 = vector.multi_reduction <add>, %111, %cst_32 [2] : vector<4x16x16xf32> to vector<4x16xf32>
    %113 = vector.shape_cast %112 : vector<4x16xf32> to vector<4x16x1xf32>
    %114 = arith.truncf %111 : vector<4x16x16xf32> to vector<4x16x16xbf16>
    "tpu.trace_start"() <{level = 10 : i32, message = "wnm,wmd->wnd"}> : () -> ()
    %cst_33 = arith.constant dense<0.000000e+00> : vector<4x16x16xf32>
    %115 = tpu.matmul %114, %100, %cst_33 {dimension_numbers = #tpu.dot_dimension_numbers<[2], [1], [1], [2], [0, 0, 0, 1, 1, 2], [0], [0]>} : vector<4x16x16xbf16>, vector<4x16x16xbf16>, vector<4x16x16xf32> -> vector<4x16x16xf32>
    "tpu.trace_stop"() : () -> ()
    %cst_34 = arith.constant 1.000000e+00 : f32
    %116 = vector.broadcast %cst_34 : f32 to vector<4x16x1xf32>
    %117 = arith.divf %116, %113 : vector<4x16x1xf32>
    %118 = vector.broadcast %117 : vector<4x16x1xf32> to vector<4x16x16xf32>
    %119 = arith.mulf %115, %118 : vector<4x16x16xf32>
    %120 = vector.shape_cast %119 : vector<4x16x16xf32> to vector<64x16xf32>
    %c0_35 = arith.constant 0 : index
    %c32 = arith.constant 32 : index
    %121 = vector.load %arg16[%c0_35, %c32] : memref<64x64xf32, #tpu.memory_space<vmem>>, vector<64x16xf32>
    tpu.vector_store %arg16[%c0_35, %c32], %120 {strides = array<i32>} : memref<64x64xf32, #tpu.memory_space<vmem>>, vector<64x16xf32>,
    %122 = vector.extract_strided_slice %30 {offsets = [0, 48], sizes = [64, 16], strides = [1, 1]} : vector<64x192xf32> to vector<64x16xf32>
    %123 = arith.truncf %122 : vector<64x16xf32> to vector<64x16xbf16>
    %124 = vector.shape_cast %123 : vector<64x16xbf16> to vector<4x16x16xbf16>
    %125 = vector.extract_strided_slice %30 {offsets = [0, 112], sizes = [64, 16], strides = [1, 1]} : vector<64x192xf32> to vector<64x16xf32>
    %126 = arith.truncf %125 : vector<64x16xf32> to vector<64x16xbf16>
    %127 = vector.shape_cast %126 : vector<64x16xbf16> to vector<4x16x16xbf16>
    %128 = vector.extract_strided_slice %30 {offsets = [0, 176], sizes = [64, 16], strides = [1, 1]} : vector<64x192xf32> to vector<64x16xf32>
    %129 = arith.truncf %128 : vector<64x16xf32> to vector<64x16xbf16>
    %130 = vector.shape_cast %129 : vector<64x16xbf16> to vector<4x16x16xbf16>
    "tpu.trace_start"() <{level = 10 : i32, message = "wnd,wmd->wnm"}> : () -> ()
    %cst_36 = arith.constant dense<0.000000e+00> : vector<4x16x16xf32>
    %131 = tpu.matmul %124, %127, %cst_36 {dimension_numbers = #tpu.dot_dimension_numbers<[2], [2], [1], [1], [0, 0, 0, 1, 1, 1], [0], [0]>} : vector<4x16x16xbf16>, vector<4x16x16xbf16>, vector<4x16x16xf32> -> vector<4x16x16xf32>
    "tpu.trace_stop"() : () -> ()
    %132 = vector.extract_strided_slice %31 {offsets = [3, 0, 0], sizes = [1, 16, 16], strides = [1, 1, 1]} : vector<4x16x16xf32> to vector<1x16x16xf32>
    %133 = vector.shape_cast %132 : vector<1x16x16xf32> to vector<16x16xf32>
    %134 = vector.shape_cast %133 : vector<16x16xf32> to vector<1x16x16xf32>
    %135 = vector.broadcast %134 : vector<1x16x16xf32> to vector<4x16x16xf32>
    %136 = arith.addf %131, %135 : vector<4x16x16xf32>
    %cst_37 = arith.constant dense<0xFF800000> : vector<4x16xf32>
    %137 = vector.multi_reduction <maximumf>, %136, %cst_37 [2] : vector<4x16x16xf32> to vector<4x16xf32>
    %138 = vector.shape_cast %137 : vector<4x16xf32> to vector<4x16x1xf32>
    %139 = vector.broadcast %138 : vector<4x16x1xf32> to vector<4x16x16xf32>
    %140 = arith.subf %136, %139 : vector<4x16x16xf32>
    %141 = math.exp %140 : vector<4x16x16xf32>
    %cst_38 = arith.constant dense<0.000000e+00> : vector<4x16xf32>
    %142 = vector.multi_reduction <add>, %141, %cst_38 [2] : vector<4x16x16xf32> to vector<4x16xf32>
    %143 = vector.shape_cast %142 : vector<4x16xf32> to vector<4x16x1xf32>
    %144 = arith.truncf %141 : vector<4x16x16xf32> to vector<4x16x16xbf16>
    "tpu.trace_start"() <{level = 10 : i32, message = "wnm,wmd->wnd"}> : () -> ()
    %cst_39 = arith.constant dense<0.000000e+00> : vector<4x16x16xf32>
    %145 = tpu.matmul %144, %130, %cst_39 {dimension_numbers = #tpu.dot_dimension_numbers<[2], [1], [1], [2], [0, 0, 0, 1, 1, 2], [0], [0]>} : vector<4x16x16xbf16>, vector<4x16x16xbf16>, vector<4x16x16xf32> -> vector<4x16x16xf32>
    "tpu.trace_stop"() : () -> ()
    %cst_40 = arith.constant 1.000000e+00 : f32
    %146 = vector.broadcast %cst_40 : f32 to vector<4x16x1xf32>
    %147 = arith.divf %146, %143 : vector<4x16x1xf32>
    %148 = vector.broadcast %147 : vector<4x16x1xf32> to vector<4x16x16xf32>
    %149 = arith.mulf %145, %148 : vector<4x16x16xf32>
    %150 = vector.shape_cast %149 : vector<4x16x16xf32> to vector<64x16xf32>
    %c0_41 = arith.constant 0 : index
    %c48 = arith.constant 48 : index
    %151 = vector.load %arg16[%c0_41, %c48] : memref<64x64xf32, #tpu.memory_space<vmem>>, vector<64x16xf32>
    tpu.vector_store %arg16[%c0_41, %c48], %150 {strides = array<i32>} : memref<64x64xf32, #tpu.memory_space<vmem>>, vector<64x16xf32>,
    %c0_42 = arith.constant 0 : index
    %c0_43 = arith.constant 0 : index
    %152 = vector.load %arg16[%c0_42, %c0_43] : memref<64x64xf32, #tpu.memory_space<vmem>>, vector<64x64xf32>
    %153 = arith.truncf %152 : vector<64x64xf32> to vector<64x64xbf16>
    %c0_44 = arith.constant 0 : index
    %c0_45 = arith.constant 0 : index
    %154 = vector.load %arg7[%c0_44, %c0_45] : memref<64x64xbf16, #tpu.memory_space<vmem>>, vector<64x64xbf16>
    %cst_46 = arith.constant dense<0.000000e+00> : vector<64x64xf32>
    %155 = tpu.matmul %153, %154, %cst_46 {dimension_numbers = #tpu.dot_dimension_numbers<[1], [0], [0], [1], [0, 0, 1, 1], [], []>} : vector<64x64xbf16>, vector<64x64xbf16>, vector<64x64xf32> -> vector<64x64xf32>
    %c0_47 = arith.constant 0 : index
    %c0_48 = arith.constant 0 : index
    %156 = vector.load %arg8[%c0_47, %c0_48] : memref<1x64xf32, #tpu.memory_space<vmem>>, vector<1x64xf32>
    %157 = vector.broadcast %156 : vector<1x64xf32> to vector<64x64xf32>
    %158 = arith.addf %155, %157 : vector<64x64xf32>
    %159 = arith.addf %0, %158 : vector<64x64xf32>
    %c0_49 = arith.constant 0 : index
    %c0_50 = arith.constant 0 : index
    %160 = vector.load %arg9[%c0_49, %c0_50] : memref<1x64xf32, #tpu.memory_space<vmem>>, vector<1x64xf32>
    %c0_51 = arith.constant 0 : index
    %c0_52 = arith.constant 0 : index
    %161 = vector.load %arg10[%c0_51, %c0_52] : memref<1x64xf32, #tpu.memory_space<vmem>>, vector<1x64xf32>
    %cst_53 = arith.constant dense<0.000000e+00> : vector<64xf32>
    %162 = vector.multi_reduction <add>, %159, %cst_53 [1] : vector<64x64xf32> to vector<64xf32>
    %163 = vector.shape_cast %162 : vector<64xf32> to vector<64x1xf32>
    %cst_54 = arith.constant 6.400000e+01 : f32
    %164 = vector.broadcast %cst_54 : f32 to vector<64x1xf32>
    %165 = arith.divf %163, %164 : vector<64x1xf32>
    %166 = vector.broadcast %165 : vector<64x1xf32> to vector<64x64xf32>
    %167 = arith.subf %159, %166 : vector<64x64xf32>
    %168 = arith.mulf %167, %167 : vector<64x64xf32>
    %cst_55 = arith.constant dense<0.000000e+00> : vector<64xf32>
    %169 = vector.multi_reduction <add>, %168, %cst_55 [1] : vector<64x64xf32> to vector<64xf32>
    %170 = vector.shape_cast %169 : vector<64xf32> to vector<64x1xf32>
    %cst_56 = arith.constant 6.400000e+01 : f32
    %171 = vector.broadcast %cst_56 : f32 to vector<64x1xf32>
    %172 = arith.divf %170, %171 : vector<64x1xf32>
    %173 = vector.broadcast %165 : vector<64x1xf32> to vector<64x64xf32>
    %174 = arith.subf %159, %173 : vector<64x64xf32>
    %cst_57 = arith.constant 9.99999974E-6 : f32
    %175 = vector.broadcast %cst_57 : f32 to vector<64x1xf32>
    %176 = arith.addf %172, %175 : vector<64x1xf32>
    %177 = math.rsqrt %176 : vector<64x1xf32>
    %178 = vector.broadcast %177 : vector<64x1xf32> to vector<64x64xf32>
    %179 = arith.mulf %174, %178 : vector<64x64xf32>
    %180 = vector.broadcast %160 : vector<1x64xf32> to vector<64x64xf32>
    %181 = arith.mulf %179, %180 : vector<64x64xf32>
    %182 = vector.broadcast %161 : vector<1x64xf32> to vector<64x64xf32>
    %183 = arith.addf %181, %182 : vector<64x64xf32>
    %184 = arith.truncf %183 : vector<64x64xf32> to vector<64x64xbf16>
    %c0_58 = arith.constant 0 : index
    %c0_59 = arith.constant 0 : index
    %185 = vector.load %arg11[%c0_58, %c0_59] : memref<64x256xbf16, #tpu.memory_space<vmem>>, vector<64x256xbf16>
    %cst_60 = arith.constant dense<0.000000e+00> : vector<64x256xf32>
    %186 = tpu.matmul %184, %185, %cst_60 {dimension_numbers = #tpu.dot_dimension_numbers<[1], [0], [0], [1], [0, 0, 1, 1], [], []>} : vector<64x64xbf16>, vector<64x256xbf16>, vector<64x256xf32> -> vector<64x256xf32>
    %c0_61 = arith.constant 0 : index
    %c0_62 = arith.constant 0 : index
    %187 = vector.load %arg12[%c0_61, %c0_62] : memref<1x256xf32, #tpu.memory_space<vmem>>, vector<1x256xf32>
    %188 = vector.broadcast %187 : vector<1x256xf32> to vector<64x256xf32>
    %189 = arith.addf %186, %188 : vector<64x256xf32>
    %cst_63 = arith.constant 5.000000e-01 : f32
    %190 = vector.broadcast %cst_63 : f32 to vector<64x256xf32>
    %191 = arith.mulf %190, %189 : vector<64x256xf32>
    %192 = arith.mulf %189, %189 : vector<64x256xf32>
    %193 = arith.mulf %192, %189 : vector<64x256xf32>
    %cst_64 = arith.constant 4.471500e-02 : f32
    %194 = vector.broadcast %cst_64 : f32 to vector<64x256xf32>
    %195 = arith.mulf %194, %193 : vector<64x256xf32>
    %196 = arith.addf %189, %195 : vector<64x256xf32>
    %cst_65 = arith.constant 0.797884583 : f32
    %197 = vector.broadcast %cst_65 : f32 to vector<64x256xf32>
    %198 = arith.mulf %197, %196 : vector<64x256xf32>
    %199 = math.tanh %198 : vector<64x256xf32>
    %cst_66 = arith.constant 1.000000e+00 : f32
    %200 = vector.broadcast %cst_66 : f32 to vector<64x256xf32>
    %201 = arith.addf %200, %199 : vector<64x256xf32>
    %202 = arith.mulf %191, %201 : vector<64x256xf32>
    %203 = arith.truncf %202 : vector<64x256xf32> to vector<64x256xbf16>
    %c0_67 = arith.constant 0 : index
    %c0_68 = arith.constant 0 : index
    %204 = vector.load %arg13[%c0_67, %c0_68] : memref<256x64xbf16, #tpu.memory_space<vmem>>, vector<256x64xbf16>
    %cst_69 = arith.constant dense<0.000000e+00> : vector<64x64xf32>
    %205 = tpu.matmul %203, %204, %cst_69 {dimension_numbers = #tpu.dot_dimension_numbers<[1], [0], [0], [1], [0, 0, 1, 1], [], []>} : vector<64x256xbf16>, vector<256x64xbf16>, vector<64x64xf32> -> vector<64x64xf32>
    %c0_70 = arith.constant 0 : index
    %c0_71 = arith.constant 0 : index
    %206 = vector.load %arg14[%c0_70, %c0_71] : memref<1x64xf32, #tpu.memory_space<vmem>>, vector<1x64xf32>
    %207 = vector.broadcast %206 : vector<1x64xf32> to vector<64x64xf32>
    %208 = arith.addf %205, %207 : vector<64x64xf32>
    %209 = arith.addf %159, %208 : vector<64x64xf32>
    %c0_72 = arith.constant 0 : index
    %c0_73 = arith.constant 0 : index
    %210 = vector.load %arg15[%c0_72, %c0_73] : memref<64x64xf32, #tpu.memory_space<vmem>>, vector<64x64xf32>
    tpu.vector_store %arg15[%c0_72, %c0_73], %209 {strides = array<i32>} : memref<64x64xf32, #tpu.memory_space<vmem>>, vector<64x64xf32>,
    return
  }
  func.func @transform_0(%arg0: i32) -> (i32, i32) {
    %c0_i32 = arith.constant 0 : i32
    %c0_i32_0 = arith.constant 0 : i32
    return %arg0, %c0_i32 : i32, i32
  }
  func.func @transform_1(%arg0: i32) -> (i32, i32, i32) {
    %c0_i32 = arith.constant 0 : i32
    %c0_i32_0 = arith.constant 0 : i32
    %c0_i32_1 = arith.constant 0 : i32
    %c0_i32_2 = arith.constant 0 : i32
    return %c0_i32, %c0_i32_0, %c0_i32_1 : i32, i32, i32
  }
  func.func @transform_2(%arg0: i32) -> (i32, i32) {
    %c0_i32 = arith.constant 0 : i32
    %c0_i32_0 = arith.constant 0 : i32
    %c0_i32_1 = arith.constant 0 : i32
    return %c0_i32, %c0_i32_0 : i32, i32
  }
  func.func @transform_3(%arg0: i32) -> (i32, i32) {
    %c0_i32 = arith.constant 0 : i32
    %c0_i32_0 = arith.constant 0 : i32
    %c0_i32_1 = arith.constant 0 : i32
    return %c0_i32, %c0_i32_0 : i32, i32
  }
  func.func @transform_4(%arg0: i32) -> (i32, i32) {
    %c0_i32 = arith.constant 0 : i32
    %c0_i32_0 = arith.constant 0 : i32
    %c0_i32_1 = arith.constant 0 : i32
    return %c0_i32, %c0_i32_0 : i32, i32
  }
  func.func @transform_5(%arg0: i32) -> (i32, i32) {
    %c0_i32 = arith.constant 0 : i32
    %c0_i32_0 = arith.constant 0 : i32
    %c0_i32_1 = arith.constant 0 : i32
    return %c0_i32, %c0_i32_0 : i32, i32
  }
  func.func @transform_6(%arg0: i32) -> (i32, i32) {
    %c0_i32 = arith.constant 0 : i32
    %c0_i32_0 = arith.constant 0 : i32
    %c0_i32_1 = arith.constant 0 : i32
    return %c0_i32, %c0_i32_0 : i32, i32
  }
  func.func @transform_7(%arg0: i32) -> (i32, i32) {
    %c0_i32 = arith.constant 0 : i32
    %c0_i32_0 = arith.constant 0 : i32
    %c0_i32_1 = arith.constant 0 : i32
    return %c0_i32, %c0_i32_0 : i32, i32
  }
  func.func @transform_8(%arg0: i32) -> (i32, i32) {
    %c0_i32 = arith.constant 0 : i32
    %c0_i32_0 = arith.constant 0 : i32
    %c0_i32_1 = arith.constant 0 : i32
    return %c0_i32, %c0_i32_0 : i32, i32
  }
  func.func @transform_9(%arg0: i32) -> (i32, i32) {
    %c0_i32 = arith.constant 0 : i32
    %c0_i32_0 = arith.constant 0 : i32
    %c0_i32_1 = arith.constant 0 : i32
    return %c0_i32, %c0_i32_0 : i32, i32
  }
  func.func @transform_10(%arg0: i32) -> (i32, i32) {
    %c0_i32 = arith.constant 0 : i32
    %c0_i32_0 = arith.constant 0 : i32
    %c0_i32_1 = arith.constant 0 : i32
    return %c0_i32, %c0_i32_0 : i32, i32
  }
  func.func @transform_11(%arg0: i32) -> (i32, i32) {
    %c0_i32 = arith.constant 0 : i32
    %c0_i32_0 = arith.constant 0 : i32
    %c0_i32_1 = arith.constant 0 : i32
    return %c0_i32, %c0_i32_0 : i32, i32
  }
  func.func @transform_12(%arg0: i32) -> (i32, i32) {
    %c0_i32 = arith.constant 0 : i32
    %c0_i32_0 = arith.constant 0 : i32
    %c0_i32_1 = arith.constant 0 : i32
    return %c0_i32, %c0_i32_0 : i32, i32
  }
  func.func @transform_13(%arg0: i32) -> (i32, i32) {
    %c0_i32 = arith.constant 0 : i32
    %c0_i32_0 = arith.constant 0 : i32
    %c0_i32_1 = arith.constant 0 : i32
    return %c0_i32, %c0_i32_0 : i32, i32
  }
  func.func @transform_14(%arg0: i32) -> (i32, i32) {
    %c0_i32 = arith.constant 0 : i32
    %c0_i32_0 = arith.constant 0 : i32
    return %arg0, %c0_i32 : i32, i32
  }
}

</mosaic_0001>

<llo_original>
// kernel: stage_forward_pallas.2
$region0: #{stage_forward_pallas.2}
  #allocation0 [shape = 'u32[]', space=smem, size = 0x4, offset = 0x4, fixed_abs, tag = 'smem constant byte address 0x4 - core index']
  #allocation1 [shape = 'u32[144,128]{1,0:T(1,128)}', space=vmem, size = 0x12000, scoped, tag = 'internal scratch']
  #allocation2 [shape = 'f32[64,64]{1,0:T(8,128)}', space=vmem, size = 0x8000, scoped, tag = 'scratch operand']
  %s0 = inlined_call_operand.vmem [shape: f32[128,64], index: 0, kind: input, shape index: {}]
  %s1 = inlined_call_operand.vmem [shape: f32[4,16,16], index: 1, kind: input, shape index: {}]
  %s2 = inlined_call_operand.vmem [shape: f32[1,64], index: 2, kind: input, shape index: {}]
  %s3 = inlined_call_operand.vmem [shape: f32[1,64], index: 3, kind: input, shape index: {}]
  %s4 = inlined_call_operand.vmem [shape: bf16[64,192], index: 4, kind: input, shape index: {}]
  %s5 = inlined_call_operand.vmem [shape: f32[1,192], index: 5, kind: input, shape index: {}]
  %s6 = inlined_call_operand.vmem [shape: bf16[64,64], index: 6, kind: input, shape index: {}]
  %s7 = inlined_call_operand.vmem [shape: f32[1,64], index: 7, kind: input, shape index: {}]
  %s8 = inlined_call_operand.vmem [shape: f32[1,64], index: 8, kind: input, shape index: {}]
  %s9 = inlined_call_operand.vmem [shape: f32[1,64], index: 9, kind: input, shape index: {}]
  %s10 = inlined_call_operand.vmem [shape: bf16[64,256], index: 10, kind: input, shape index: {}]
  %s11 = inlined_call_operand.vmem [shape: f32[1,256], index: 11, kind: input, shape index: {}]
  %s12 = inlined_call_operand.vmem [shape: bf16[256,64], index: 12, kind: input, shape index: {}]
  %s13 = inlined_call_operand.vmem [shape: f32[1,64], index: 13, kind: input, shape index: {}]
  %s14 = inlined_call_operand.vmem [shape: f32[128,64], index: 14, kind: output, shape index: {}]
  %s15 = sld [smem:[#allocation0]]
  $region89: #{stage_forward_pallas.2} parent=0
    _
  %s17 = ssub.s32 1, %s15
  %s18 = scalar_select 0, %s17, %s15
  loop: start=0, step=1, limit=4
  $region2: #{stage_forward_pallas.2} parent=0 // loop_pre_header
    _
  $region3: #{stage_forward_pallas.2} parent=0 // loop_header
    %s20 = sphi 0, %s24
    %p21 = scmp.ge.s32.totalorder %s20, 4
    %s30 = sphi 0, %s32
    %s33 = sphi 0, %s30
    %s34 = sphi 0, %s33
    %s50 = sphi 0, %s34
    %s54 = sphi 0, %s54
    %s56 = sphi 0, %s54
    %s57 = sphi 0, %s56
    %s71 = sphi 0, %s57
    %s75 = sphi 0, %s75
    %s77 = sphi 0, %s75
    %s78 = sphi 0, %s77
    %s92 = sphi 0, %s78
    %s96 = sphi 0, %s96
    %s98 = sphi 0, %s96
    %s99 = sphi 0, %s98
    %s113 = sphi 0, %s99
    %s117 = sphi 0, %s117
    %s119 = sphi 0, %s117
    %s120 = sphi 0, %s119
    %s134 = sphi 0, %s120
    %s138 = sphi 0, %s138
    %s140 = sphi 0, %s138
    %s141 = sphi 0, %s140
    %s155 = sphi 0, %s141
    %s159 = sphi 0, %s159
    %s161 = sphi 0, %s159
    %s162 = sphi 0, %s161
    %s176 = sphi 0, %s162
    %s180 = sphi 0, %s180
    %s182 = sphi 0, %s180
    %s183 = sphi 0, %s182
    %s197 = sphi 0, %s183
    %s201 = sphi 0, %s201
    %s203 = sphi 0, %s201
    %s204 = sphi 0, %s203
    %s218 = sphi 0, %s204
    %s222 = sphi 0, %s222
    %s224 = sphi 0, %s222
    %s225 = sphi 0, %s224
    %s239 = sphi 0, %s225
    %s243 = sphi 0, %s243
    %s245 = sphi 0, %s243
    %s246 = sphi 0, %s245
    %s260 = sphi 0, %s246
    %s264 = sphi 0, %s264
    %s266 = sphi 0, %s264
    %s267 = sphi 0, %s266
    %s281 = sphi 0, %s267
    %s285 = sphi 0, %s285
    %s287 = sphi 0, %s285
    %s288 = sphi 0, %s287
    %s302 = sphi 0, %s288
    %s306 = sphi 0, %s306
    %s308 = sphi 0, %s306
    %s309 = sphi 0, %s308
    %s323 = sphi 0, %s309
    %s329 = sphi 0, %s331
    %s332 = sphi 0, %s329
    %s333 = sphi 0, %s332
    %s349 = sphi 0, %s333
  $region4: #{stage_forward_pallas.2} parent=0 // loop_header_branch
    %23 = sbr.rel (%p21) target = $region8
  $region5: #{stage_forward_pallas.2} parent=0 // loop_body
    %s25 = ssub.s32 %s20, 1
    %s26 = ssub.s32 %s20, 2
    %s27 = sadd.s32 %s20, 1
    %s28 = ssub.s32 %s20, %s27
    %p29 = scmp.eq.s32.totalorder %s28, 0
    %s31 = sadd.s32 %s30, 1
    %s32 = scalar_select %p29, %s30, %s31
    %p35 = pneg %p29
    %p36 = scmp.eq.s32.totalorder %s20, 1
    %p37 = por %p35, %p36
    %p38 = scmp.ne.s32.totalorder %s30, %s33
    %p39 = scmp.eq.s32.totalorder %s20, 0
    %p40 = por %p38, %p39
    %p41 = scmp.ne.s32.totalorder %s30, %s33
    %p42 = scmp.eq.s32.totalorder %s25, 1
    %p43 = por %p41, %p42
    %p44 = scmp.ne.s32.totalorder %s33, %s34
    %p45 = scmp.eq.s32.totalorder %s25, 0
    %p46 = por %p44, %p45
    %p47 = scmp.ne.s32.totalorder %s33, %s34
    %p48 = scmp.eq.s32.totalorder %s26, 1
    %p49 = por %p47, %p48
    %p51 = scmp.ne.s32.totalorder %s34, %s50
    %p52 = scmp.eq.s32.totalorder %s26, 0
    %p53 = por %p51, %p52
    %s55 = sadd.s32 %s54, 1
    %p58 = scmp.eq.s32.totalorder %s20, 1
    %p59 = scmp.ne.s32.totalorder %s54, %s56
    %p60 = scmp.eq.s32.totalorder %s20, 0
    %p61 = por %p59, %p60
    %p62 = scmp.ne.s32.totalorder %s54, %s56
    %p63 = scmp.eq.s32.totalorder %s25, 1
    %p64 = por %p62, %p63
    %p65 = scmp.ne.s32.totalorder %s56, %s57
    %p66 = scmp.eq.s32.totalorder %s25, 0
    %p67 = por %p65, %p66
    %p68 = scmp.ne.s32.totalorder %s56, %s57
    %p69 = scmp.eq.s32.totalorder %s26, 1
    %p70 = por %p68, %p69
    %p72 = scmp.ne.s32.totalorder %s57, %s71
    %p73 = scmp.eq.s32.totalorder %s26, 0
    %p74 = por %p72, %p73
    %s76 = sadd.s32 %s75, 1
    %p79 = scmp.eq.s32.totalorder %s20, 1
    %p80 = scmp.ne.s32.totalorder %s75, %s77
    %p81 = scmp.eq.s32.totalorder %s20, 0
    %p82 = por %p80, %p81
    %p83 = scmp.ne.s32.totalorder %s75, %s77
    %p84 = scmp.eq.s32.totalorder %s25, 1
    %p85 = por %p83, %p84
    %p86 = scmp.ne.s32.totalorder %s77, %s78
    %p87 = scmp.eq.s32.totalorder %s25, 0
    %p88 = por %p86, %p87
    %p89 = scmp.ne.s32.totalorder %s77, %s78
    %p90 = scmp.eq.s32.totalorder %s26, 1
    %p91 = por %p89, %p90
    %p93 = scmp.ne.s32.totalorder %s78, %s92
    %p94 = scmp.eq.s32.totalorder %s26, 0
    %p95 = por %p93, %p94
    %s97 = sadd.s32 %s96, 1
    %p100 = scmp.eq.s32.totalorder %s20, 1
    %p101 = scmp.ne.s32.totalorder %s96, %s98
    %p102 = scmp.eq.s32.totalorder %s20, 0
    %p103 = por %p101, %p102
    %p104 = scmp.ne.s32.totalorder %s96, %s98
    %p105 = scmp.eq.s32.totalorder %s25, 1
    %p106 = por %p104, %p105
    %p107 = scmp.ne.s32.totalorder %s98, %s99
    %p108 = scmp.eq.s32.totalorder %s25, 0
    %p109 = por %p107, %p108
    %p110 = scmp.ne.s32.totalorder %s98, %s99
    %p111 = scmp.eq.s32.totalorder %s26, 1
    %p112 = por %p110, %p111
    %p114 = scmp.ne.s32.totalorder %s99, %s113
    %p115 = scmp.eq.s32.totalorder %s26, 0
    %p116 = por %p114, %p115
    %s118 = sadd.s32 %s117, 1
    %p121 = scmp.eq.s32.totalorder %s20, 1
    %p122 = scmp.ne.s32.totalorder %s117, %s119
    %p123 = scmp.eq.s32.totalorder %s20, 0
    %p124 = por %p122, %p123
    %p125 = scmp.ne.s32.totalorder %s117, %s119
    %p126 = scmp.eq.s32.totalorder %s25, 1
    %p127 = por %p125, %p126
    %p128 = scmp.ne.s32.totalorder %s119, %s120
    %p129 = scmp.eq.s32.totalorder %s25, 0
    %p130 = por %p128, %p129
    %p131 = scmp.ne.s32.totalorder %s119, %s120
    %p132 = scmp.eq.s32.totalorder %s26, 1
    %p133 = por %p131, %p132
    %p135 = scmp.ne.s32.totalorder %s120, %s134
    %p136 = scmp.eq.s32.totalorder %s26, 0
    %p137 = por %p135, %p136
    %s139 = sadd.s32 %s138, 1
    %p142 = scmp.eq.s32.totalorder %s20, 1
    %p143 = scmp.ne.s32.totalorder %s138, %s140
    %p144 = scmp.eq.s32.totalorder %s20, 0
    %p145 = por %p143, %p144
    %p146 = scmp.ne.s32.totalorder %s138, %s140
    %p147 = scmp.eq.s32.totalorder %s25, 1
    %p148 = por %p146, %p147
    %p149 = scmp.ne.s32.totalorder %s140, %s141
    %p150 = scmp.eq.s32.totalorder %s25, 0
    %p151 = por %p149, %p150
    %p152 = scmp.ne.s32.totalorder %s140, %s141
    %p153 = scmp.eq.s32.totalorder %s26, 1
    %p154 = por %p152, %p153
    %p156 = scmp.ne.s32.totalorder %s141, %s155
    %p157 = scmp.eq.s32.totalorder %s26, 0
    %p158 = por %p156, %p157
    %s160 = sadd.s32 %s159, 1
    %p163 = scmp.eq.s32.totalorder %s20, 1
    %p164 = scmp.ne.s32.totalorder %s159, %s161
    %p165 = scmp.eq.s32.totalorder %s20, 0
    %p166 = por %p164, %p165
    %p167 = scmp.ne.s32.totalorder %s159, %s161
    %p168 = scmp.eq.s32.totalorder %s25, 1
    %p169 = por %p167, %p168
    %p170 = scmp.ne.s32.totalorder %s161, %s162
    %p171 = scmp.eq.s32.totalorder %s25, 0
    %p172 = por %p170, %p171
    %p173 = scmp.ne.s32.totalorder %s161, %s162
    %p174 = scmp.eq.s32.totalorder %s26, 1
    %p175 = por %p173, %p174
    %p177 = scmp.ne.s32.totalorder %s162, %s176
    %p178 = scmp.eq.s32.totalorder %s26, 0
    %p179 = por %p177, %p178
    %s181 = sadd.s32 %s180, 1
    %p184 = scmp.eq.s32.totalorder %s20, 1
    %p185 = scmp.ne.s32.totalorder %s180, %s182
    %p186 = scmp.eq.s32.totalorder %s20, 0
    %p187 = por %p185, %p186
    %p188 = scmp.ne.s32.totalorder %s180, %s182
    %p189 = scmp.eq.s32.totalorder %s25, 1
    %p190 = por %p188, %p189
    %p191 = scmp.ne.s32.totalorder %s182, %s183
    %p192 = scmp.eq.s32.totalorder %s25, 0
    %p193 = por %p191, %p192
    %p194 = scmp.ne.s32.totalorder %s182, %s183
    %p195 = scmp.eq.s32.totalorder %s26, 1
    %p196 = por %p194, %p195
    %p198 = scmp.ne.s32.totalorder %s183, %s197
    %p199 = scmp.eq.s32.totalorder %s26, 0
    %p200 = por %p198, %p199
    %s202 = sadd.s32 %s201, 1
    %p205 = scmp.eq.s32.totalorder %s20, 1
    %p206 = scmp.ne.s32.totalorder %s201, %s203
    %p207 = scmp.eq.s32.totalorder %s20, 0
    %p208 = por %p206, %p207
    %p209 = scmp.ne.s32.totalorder %s201, %s203
    %p210 = scmp.eq.s32.totalorder %s25, 1
    %p211 = por %p209, %p210
    %p212 = scmp.ne.s32.totalorder %s203, %s204
    %p213 = scmp.eq.s32.totalorder %s25, 0
    %p214 = por %p212, %p213
    %p215 = scmp.ne.s32.totalorder %s203, %s204
    %p216 = scmp.eq.s32.totalorder %s26, 1
    %p217 = por %p215, %p216
    %p219 = scmp.ne.s32.totalorder %s204, %s218
    %p220 = scmp.eq.s32.totalorder %s26, 0
    %p221 = por %p219, %p220
    %s223 = sadd.s32 %s222, 1
    %p226 = scmp.eq.s32.totalorder %s20, 1
    %p227 = scmp.ne.s32.totalorder %s222, %s224
    %p228 = scmp.eq.s32.totalorder %s20, 0
    %p229 = por %p227, %p228
    %p230 = scmp.ne.s32.totalorder %s222, %s224
    %p231 = scmp.eq.s32.totalorder %s25, 1
    %p232 = por %p230, %p231
    %p233 = scmp.ne.s32.totalorder %s224, %s225
    %p234 = scmp.eq.s32.totalorder %s25, 0
    %p235 = por %p233, %p234
    %p236 = scmp.ne.s32.totalorder %s224, %s225
    %p237 = scmp.eq.s32.totalorder %s26, 1
    %p238 = por %p236, %p237
    %p240 = scmp.ne.s32.totalorder %s225, %s239
    %p241 = scmp.eq.s32.totalorder %s26, 0
    %p242 = por %p240, %p241
    %s244 = sadd.s32 %s243, 1
    %p247 = scmp.eq.s32.totalorder %s20, 1
    %p248 = scmp.ne.s32.totalorder %s243, %s245
    %p249 = scmp.eq.s32.totalorder %s20, 0
    %p250 = por %p248, %p249
    %p251 = scmp.ne.s32.totalorder %s243, %s245
    %p252 = scmp.eq.s32.totalorder %s25, 1
    %p253 = por %p251, %p252
    %p254 = scmp.ne.s32.totalorder %s245, %s246
    %p255 = scmp.eq.s32.totalorder %s25, 0
    %p256 = por %p254, %p255
    %p257 = scmp.ne.s32.totalorder %s245, %s246
    %p258 = scmp.eq.s32.totalorder %s26, 1
    %p259 = por %p257, %p258
    %p261 = scmp.ne.s32.totalorder %s246, %s260
    %p262 = scmp.eq.s32.totalorder %s26, 0
    %p263 = por %p261, %p262
    %s265 = sadd.s32 %s264, 1
    %p268 = scmp.eq.s32.totalorder %s20, 1
    %p269 = scmp.ne.s32.totalorder %s264, %s266
    %p270 = scmp.eq.s32.totalorder %s20, 0
    %p271 = por %p269, %p270
    %p272 = scmp.ne.s32.totalorder %s264, %s266
    %p273 = scmp.eq.s32.totalorder %s25, 1
    %p274 = por %p272, %p273
    %p275 = scmp.ne.s32.totalorder %s266, %s267
    %p276 = scmp.eq.s32.totalorder %s25, 0
    %p277 = por %p275, %p276
    %p278 = scmp.ne.s32.totalorder %s266, %s267
    %p279 = scmp.eq.s32.totalorder %s26, 1
    %p280 = por %p278, %p279
    %p282 = scmp.ne.s32.totalorder %s267, %s281
    %p283 = scmp.eq.s32.totalorder %s26, 0
    %p284 = por %p282, %p283
    %s286 = sadd.s32 %s285, 1
    %p289 = scmp.eq.s32.totalorder %s20, 1
    %p290 = scmp.ne.s32.totalorder %s285, %s287
    %p291 = scmp.eq.s32.totalorder %s20, 0
    %p292 = por %p290, %p291
    %p293 = scmp.ne.s32.totalorder %s285, %s287
    %p294 = scmp.eq.s32.totalorder %s25, 1
    %p295 = por %p293, %p294
    %p296 = scmp.ne.s32.totalorder %s287, %s288
    %p297 = scmp.eq.s32.totalorder %s25, 0
    %p298 = por %p296, %p297
    %p299 = scmp.ne.s32.totalorder %s287, %s288
    %p300 = scmp.eq.s32.totalorder %s26, 1
    %p301 = por %p299, %p300
    %p303 = scmp.ne.s32.totalorder %s288, %s302
    %p304 = scmp.eq.s32.totalorder %s26, 0
    %p305 = por %p303, %p304
    %s307 = sadd.s32 %s306, 1
    %p310 = scmp.eq.s32.totalorder %s20, 1
    %p311 = scmp.ne.s32.totalorder %s306, %s308
    %p312 = scmp.eq.s32.totalorder %s20, 0
    %p313 = por %p311, %p312
    %p314 = scmp.ne.s32.totalorder %s306, %s308
    %p315 = scmp.eq.s32.totalorder %s25, 1
    %p316 = por %p314, %p315
    %p317 = scmp.ne.s32.totalorder %s308, %s309
    %p318 = scmp.eq.s32.totalorder %s25, 0
    %p319 = por %p317, %p318
    %p320 = scmp.ne.s32.totalorder %s308, %s309
    %p321 = scmp.eq.s32.totalorder %s26, 1
    %p322 = por %p320, %p321
    %p324 = scmp.ne.s32.totalorder %s309, %s323
    %p325 = scmp.eq.s32.totalorder %s26, 0
    %p326 = por %p324, %p325
    %s327 = ssub.s32 %s20, %s27
    %p328 = scmp.eq.s32.totalorder %s327, 0
    %s330 = sadd.s32 %s329, 1
    %s331 = scalar_select %p328, %s329, %s330
    %p334 = pneg %p328
    %p335 = scmp.eq.s32.totalorder %s20, 1
    %p336 = por %p334, %p335
    %p337 = scmp.ne.s32.totalorder %s329, %s332
    %p338 = scmp.eq.s32.totalorder %s20, 0
    %p339 = por %p337, %p338
    %p340 = scmp.ne.s32.totalorder %s329, %s332
    %p341 = scmp.eq.s32.totalorder %s25, 1
    %p342 = por %p340, %p341
    %p343 = scmp.ne.s32.totalorder %s332, %s333
    %p344 = scmp.eq.s32.totalorder %s25, 0
    %p345 = por %p343, %p344
    %p346 = scmp.ne.s32.totalorder %s332, %s333
    %p347 = scmp.eq.s32.totalorder %s26, 1
    %p348 = por %p346, %p347
    %p350 = scmp.ne.s32.totalorder %s333, %s349
    %p351 = scmp.eq.s32.totalorder %s26, 0
    %p352 = por %p350, %p351
    %p353 = scmp.le.s32.totalorder 1, %s20
    %p354 = scmp.lt.s32.totalorder %s20, 3
    %p355 = pnand %p353, %p354
    %p356 = pneg %p355
    // Predicated region
    $region9: #{stage_forward_pallas.2} parent=5 // pred_check
      _
    $region10: #{stage_forward_pallas.2} parent=5 // pred_check_branch
      %358 = sbr.rel (%p355) target = $region12
    $region11: #{stage_forward_pallas.2} parent=5 // pred_region
      %s359 = ssub.s32 %s20, 1
      // Predicated region
      $region13: #{stage_forward_pallas.2} parent=11 // pred_check
        %p360 = pneg %p67
      $region14: #{stage_forward_pallas.2} parent=11 // pred_check_branch
        %362 = sbr.rel (%p360) target = $region16
      $region15: #{stage_forward_pallas.2} parent=11 // pred_region
        _
      $region16: #{stage_forward_pallas.2} parent=11 // pred_fallthru
        _
      // Predicated region
      $region17: #{stage_forward_pallas.2} parent=11 // pred_check
        %p363 = pneg %p88
      $region18: #{stage_forward_pallas.2} parent=11 // pred_check_branch
        %365 = sbr.rel (%p363) target = $region20
      $region19: #{stage_forward_pallas.2} parent=11 // pred_region
        _
      $region20: #{stage_forward_pallas.2} parent=11 // pred_fallthru
        _
      // Predicated region
      $region21: #{stage_forward_pallas.2} parent=11 // pred_check
        %p366 = pneg %p109
      $region22: #{stage_forward_pallas.2} parent=11 // pred_check_branch
        %368 = sbr.rel (%p366) target = $region24
      $region23: #{stage_forward_pallas.2} parent=11 // pred_region
        _
      $region24: #{stage_forward_pallas.2} parent=11 // pred_fallthru
        _
      // Predicated region
      $region25: #{stage_forward_pallas.2} parent=11 // pred_check
        %p369 = pneg %p130
      $region26: #{stage_forward_pallas.2} parent=11 // pred_check_branch
        %371 = sbr.rel (%p369) target = $region28
      $region27: #{stage_forward_pallas.2} parent=11 // pred_region
        _
      $region28: #{stage_forward_pallas.2} parent=11 // pred_fallthru
        _
      // Predicated region
      $region29: #{stage_forward_pallas.2} parent=11 // pred_check
        %p372 = pneg %p151
      $region30: #{stage_forward_pallas.2} parent=11 // pred_check_branch
        %374 = sbr.rel (%p372) target = $region32
      $region31: #{stage_forward_pallas.2} parent=11 // pred_region
        _
      $region32: #{stage_forward_pallas.2} parent=11 // pred_fallthru
        _
      // Predicated region
      $region33: #{stage_forward_pallas.2} parent=11 // pred_check
        %p375 = pneg %p172
      $region34: #{stage_forward_pallas.2} parent=11 // pred_check_branch
        %377 = sbr.rel (%p375) target = $region36
      $region35: #{stage_forward_pallas.2} parent=11 // pred_region
        _
      $region36: #{stage_forward_pallas.2} parent=11 // pred_fallthru
        _
      // Predicated region
      $region37: #{stage_forward_pallas.2} parent=11 // pred_check
        %p378 = pneg %p193
      $region38: #{stage_forward_pallas.2} parent=11 // pred_check_branch
        %380 = sbr.rel (%p378) target = $region40
      $region39: #{stage_forward_pallas.2} parent=11 // pred_region
        _
      $region40: #{stage_forward_pallas.2} parent=11 // pred_fallthru
        _
      // Predicated region
      $region41: #{stage_forward_pallas.2} parent=11 // pred_check
        %p381 = pneg %p214
      $region42: #{stage_forward_pallas.2} parent=11 // pred_check_branch
        %383 = sbr.rel (%p381) target = $region44
      $region43: #{stage_forward_pallas.2} parent=11 // pred_region
        _
      $region44: #{stage_forward_pallas.2} parent=11 // pred_fallthru
        _
      // Predicated region
      $region45: #{stage_forward_pallas.2} parent=11 // pred_check
        %p384 = pneg %p235
      $region46: #{stage_forward_pallas.2} parent=11 // pred_check_branch
        %386 = sbr.rel (%p384) target = $region48
      $region47: #{stage_forward_pallas.2} parent=11 // pred_region
        _
      $region48: #{stage_forward_pallas.2} parent=11 // pred_fallthru
        _
      // Predicated region
      $region49: #{stage_forward_pallas.2} parent=11 // pred_check
        %p387 = pneg %p256
      $region50: #{stage_forward_pallas.2} parent=11 // pred_check_branch
        %389 = sbr.rel (%p387) target = $region52
      $region51: #{stage_forward_pallas.2} parent=11 // pred_region
        _
      $region52: #{stage_forward_pallas.2} parent=11 // pred_fallthru
        _
      // Predicated region
      $region53: #{stage_forward_pallas.2} parent=11 // pred_check
        %p390 = pneg %p277
      $region54: #{stage_forward_pallas.2} parent=11 // pred_check_branch
        %392 = sbr.rel (%p390) target = $region56
      $region55: #{stage_forward_pallas.2} parent=11 // pred_region
        _
      $region56: #{stage_forward_pallas.2} parent=11 // pred_fallthru
        _
      // Predicated region
      $region57: #{stage_forward_pallas.2} parent=11 // pred_check
        %p393 = pneg %p298
      $region58: #{stage_forward_pallas.2} parent=11 // pred_check_branch
        %395 = sbr.rel (%p393) target = $region60
      $region59: #{stage_forward_pallas.2} parent=11 // pred_region
        _
      $region60: #{stage_forward_pallas.2} parent=11 // pred_fallthru
        _
      // Predicated region
      $region61: #{stage_forward_pallas.2} parent=11 // pred_check
        %p396 = pneg %p319
      $region62: #{stage_forward_pallas.2} parent=11 // pred_check_branch
        %398 = sbr.rel (%p396) target = $region64
      $region63: #{stage_forward_pallas.2} parent=11 // pred_region
        _
      $region64: #{stage_forward_pallas.2} parent=11 // pred_fallthru
        _
    $region12: #{stage_forward_pallas.2} parent=5 // pred_fallthru
      _
    %p399 = scmp.lt.s32.totalorder %s20, 2
    // Predicated region
    $region65: #{stage_forward_pallas.2} parent=5 // pred_check
      %p400 = pneg %p399
    $region66: #{stage_forward_pallas.2} parent=5 // pred_check_branch
      %402 = sbr.rel (%p400) target = $region68
    $region67: #{stage_forward_pallas.2} parent=5 // pred_region
      // Predicated region
      $region69: #{stage_forward_pallas.2} parent=67 // pred_check
        %p403 = pneg %p40
      $region70: #{stage_forward_pallas.2} parent=67 // pred_check_branch
        %405 = sbr.rel (%p403) target = $region72
      $region71: #{stage_forward_pallas.2} parent=67 // pred_region
        %s406 = smul.u32 8, %s20
        %p407 = scmp.lt.s32.totalorder %s406, 15
        %s408 = scalar_select %p407, %s406, 15
        %s409 = smul.addr %s408, 8
        %s410 = scalar_lea.vmem %s0, %s409
        %s411 = smul.u32 8, %s20
      $region72: #{stage_forward_pallas.2} parent=67 // pred_fallthru
        _
    $region68: #{stage_forward_pallas.2} parent=5 // pred_fallthru
      _
    %p412 = scmp.le.s32.totalorder 1, %s20
    %p413 = scmp.lt.s32.totalorder %s20, 3
    %p414 = pnand %p412, %p413
    %p415 = pneg %p414
    // Predicated region
    $region73: #{stage_forward_pallas.2} parent=5 // pred_check
      _
    $region74: #{stage_forward_pallas.2} parent=5 // pred_check_branch
      %417 = sbr.rel (%p414) target = $region76
    $region75: #{stage_forward_pallas.2} parent=5 // pred_region
      %s418 = ssub.s32 %s20, 1
      %s419 = smul.u32 8, %s25
      %p420 = scmp.lt.s32.totalorder %s419, 15
      %s421 = scalar_select %p420, %s419, 15
      %s422 = smul.addr %s421, 8
      %s423 = scalar_lea.vmem %s0, %s422
      %p424 = pneg %p46
      %p425 = pneg %p43
      %p426 = pneg %p67
      %p427 = pneg %p64
      %p428 = pneg %p88
      %p429 = pneg %p85
      %p430 = pneg %p109
      %p431 = pneg %p106
      %p432 = pneg %p130
      %p433 = pneg %p127
      %p434 = pneg %p151
      %p435 = pneg %p148
      %p436 = pneg %p172
      %p437 = pneg %p169
      %p438 = pneg %p193
      %p439 = pneg %p190
      %p440 = pneg %p214
      %p441 = pneg %p211
      %p442 = pneg %p235
      %p443 = pneg %p232
      %p444 = pneg %p256
      %p445 = pneg %p253
      %p446 = pneg %p277
      %p447 = pneg %p274
      %p448 = pneg %p298
      %p449 = pneg %p295
      %p450 = pneg %p319
      %p451 = pneg %p316
      %p452 = pneg %p345
      %p453 = pneg %p342
      %s454 = smul.u32 8, %s25
      %p455 = scmp.lt.s32.totalorder %s454, 15
      %s456 = scalar_select %p455, %s454, 15
      %s457 = smul.addr %s456, 8
      %s458 = scalar_lea.vmem %s14, %s457
      %s459 = smul.u32 8, %s25
      %p460 = scmp.lt.s32.totalorder %s459, 15
      %s461 = scalar_select %p460, %s459, 15
      %s462 = smul.addr %s461, 8
      %s463 = scalar_lea.vmem %s0, %s462
      %s464 = smul.u32 8, %s25
      %s465 = smul.u32 8, %s25
      %p466 = scmp.lt.s32.totalorder %s465, 15
      %s467 = scalar_select %p466, %s465, 15
      %s468 = smul.addr %s467, 8
      %s469 = scalar_lea.vmem %s14, %s468
      %s470 = smul.u32 8, %s25
      %v472 = vld [vmem:[%s463] sm:$0xff]
      %v473 = vld [vmem:[%s463 + $0x8] sm:$0xff]
      %v474 = vld [vmem:[%s463 + $0x10] sm:$0xff]
      %v475 = vld [vmem:[%s463 + $0x18] sm:$0xff]
      %v476 = vld [vmem:[%s463 + $0x20] sm:$0xff]
      %v477 = vld [vmem:[%s463 + $0x28] sm:$0xff]
      %v478 = vld [vmem:[%s463 + $0x30] sm:$0xff]
      %v479 = vld [vmem:[%s463 + $0x38] sm:$0xff]
      %v480 = vld [vmem:[%s2] sm:$0x1]
      %v481 = vld [vmem:[%s3] sm:$0x1]
      %vm482 = vcmask 523264
      %v483 = vsel %vm482, %v472, 0.0
      %484 = vadd.xlane.f32.xlu0 %v483
      %v485 = vpop.xlane.xlu0 %484
      %v486 = vsel %vm482, %v473, 0.0
      %487 = vadd.xlane.f32.xlu0 %v486
      %v488 = vpop.xlane.xlu0 %487
      %v489 = vsel %vm482, %v474, 0.0
      %490 = vadd.xlane.f32.xlu0 %v489
      %v491 = vpop.xlane.xlu0 %490
      %v492 = vsel %vm482, %v475, 0.0
      %493 = vadd.xlane.f32.xlu0 %v492
      %v494 = vpop.xlane.xlu0 %493
      %v495 = vsel %vm482, %v476, 0.0
      %496 = vadd.xlane.f32.xlu0 %v495
      %v497 = vpop.xlane.xlu0 %496
      %v498 = vsel %vm482, %v477, 0.0
      %499 = vadd.xlane.f32.xlu0 %v498
      %v500 = vpop.xlane.xlu0 %499
      %v501 = vsel %vm482, %v478, 0.0
      %502 = vadd.xlane.f32.xlu0 %v501
      %v503 = vpop.xlane.xlu0 %502
      %v504 = vsel %vm482, %v479, 0.0
      %505 = vadd.xlane.f32.xlu0 %v504
      %v506 = vpop.xlane.xlu0 %505
      %v507 = vrcp.pop 64.0
      %v508 = vmul.f32 %v485, %v507
      %v509 = vmul.f32 %v488, %v507
      %v510 = vmul.f32 %v491, %v507
      %v511 = vmul.f32 %v494, %v507
      %v512 = vmul.f32 %v497, %v507
      %v513 = vmul.f32 %v500, %v507
      %v514 = vmul.f32 %v503, %v507
      %v515 = vmul.f32 %v506, %v507
      %v516 = vsub.f32 %v472, %v508
      %v517 = vsub.f32 %v473, %v509
      %v518 = vsub.f32 %v474, %v510
      %v519 = vsub.f32 %v475, %v511
      %v520 = vsub.f32 %v476, %v512
      %v521 = vsub.f32 %v477, %v513
      %v522 = vsub.f32 %v478, %v514
      %v523 = vsub.f32 %v479, %v515
      %v524 = vmul.f32 %v516, %v516
      %v525 = vmul.f32 %v517, %v517
      %v526 = vmul.f32 %v518, %v518
      %v527 = vmul.f32 %v519, %v519
      %v528 = vmul.f32 %v520, %v520
      %v529 = vmul.f32 %v521, %v521
      %v530 = vmul.f32 %v522, %v522
      %v531 = vmul.f32 %v523, %v523
      %v532 = vsel %vm482, %v524, 0.0
      %533 = vadd.xlane.f32.xlu0 %v532
      %v534 = vpop.xlane.xlu0 %533
      %v535 = vsel %vm482, %v525, 0.0
      %536 = vadd.xlane.f32.xlu0 %v535
      %v537 = vpop.xlane.xlu0 %536
      %v538 = vsel %vm482, %v526, 0.0
      %539 = vadd.xlane.f32.xlu0 %v538
      %v540 = vpop.xlane.xlu0 %539
      %v541 = vsel %vm482, %v527, 0.0
      %542 = vadd.xlane.f32.xlu0 %v541
      %v543 = vpop.xlane.xlu0 %542
      %v544 = vsel %vm482, %v528, 0.0
      %545 = vadd.xlane.f32.xlu0 %v544
      %v546 = vpop.xlane.xlu0 %545
      %v547 = vsel %vm482, %v529, 0.0
      %548 = vadd.xlane.f32.xlu0 %v547
      %v549 = vpop.xlane.xlu0 %548
      %v550 = vsel %vm482, %v530, 0.0
      %551 = vadd.xlane.f32.xlu0 %v550
      %v552 = vpop.xlane.xlu0 %551
      %v553 = vsel %vm482, %v531, 0.0
      %554 = vadd.xlane.f32.xlu0 %v553
      %v555 = vpop.xlane.xlu0 %554
      %v556 = vmul.f32 %v534, %v507
      %v557 = vmul.f32 %v537, %v507
      %v558 = vmul.f32 %v540, %v507
      %v559 = vmul.f32 %v543, %v507
      %v560 = vmul.f32 %v546, %v507
      %v561 = vmul.f32 %v549, %v507
      %v562 = vmul.f32 %v552, %v507
      %v563 = vmul.f32 %v555, %v507
      %v564 = vadd.f32 %v556, 1e-05
      %v565 = vadd.f32 %v557, 1e-05
      %v566 = vadd.f32 %v558, 1e-05
      %v567 = vadd.f32 %v559, 1e-05
      %v568 = vadd.f32 %v560, 1e-05
      %v569 = vadd.f32 %v561, 1e-05
      %v570 = vadd.f32 %v562, 1e-05
      %v571 = vadd.f32 %v563, 1e-05
      %v572 = vrsqrt.pop %v564
      %v573 = vrsqrt.pop %v565
      %v574 = vrsqrt.pop %v566
      %v575 = vrsqrt.pop %v567
      %v576 = vrsqrt.pop %v568
      %v577 = vrsqrt.pop %v569
      %v578 = vrsqrt.pop %v570
      %v579 = vrsqrt.pop %v571
      %v580 = vmul.f32 %v516, %v572
      %v581 = vmul.f32 %v517, %v573
      %v582 = vmul.f32 %v518, %v574
      %v583 = vmul.f32 %v519, %v575
      %v584 = vmul.f32 %v520, %v576
      %v585 = vmul.f32 %v521, %v577
      %v586 = vmul.f32 %v522, %v578
      %v587 = vmul.f32 %v523, %v579
      %v589 = vlaneseq
      %v590 = vshrl.u32 %v589, 7
      %v591 = vsub.s32 0, %v590
      %v592 = vrot.slane %v480, %v591
      %v594 = vmul.f32 %v580, %v592
      %v595 = vmul.f32 %v581, %v592
      %v596 = vmul.f32 %v582, %v592
      %v597 = vmul.f32 %v583, %v592
      %v598 = vmul.f32 %v584, %v592
      %v599 = vmul.f32 %v585, %v592
      %v600 = vmul.f32 %v586, %v592
      %v601 = vmul.f32 %v587, %v592
      %v603 = vlaneseq
      %v604 = vshrl.u32 %v603, 7
      %v605 = vsub.s32 0, %v604
      %v606 = vrot.slane %v481, %v605
      %v608 = vadd.f32 %v594, %v606
      %v609 = vadd.f32 %v595, %v606
      %v610 = vadd.f32 %v596, %v606
      %v611 = vadd.f32 %v597, %v606
      %v612 = vadd.f32 %v598, %v606
      %v613 = vadd.f32 %v599, %v606
      %v614 = vadd.f32 %v600, %v606
      %v615 = vadd.f32 %v601, %v606
      %v616 = vpack.c.bf16 %v609, %v608
      %v617 = vpack.c.bf16 %v611, %v610
      %v618 = vpack.c.bf16 %v613, %v612
      %v619 = vpack.c.bf16 %v615, %v614
      %v620 = vld [vmem:[%s4] sm:$0xff]
      %v621 = vld [vmem:[%s4 + $0x8] sm:$0xff]
      %v622 = vld [vmem:[%s4 + $0x10] sm:$0xff]
      %v623 = vld [vmem:[%s4 + $0x18] sm:$0xff]
      %v624 = vld [vmem:[%s4 + $0x20] sm:$0xff]
      %v625 = vld [vmem:[%s4 + $0x28] sm:$0xff]
      %v626 = vld [vmem:[%s4 + $0x30] sm:$0xff]
      %v627 = vld [vmem:[%s4 + $0x38] sm:$0xff]
      %v628 = vld [vmem:[%s5] sm:$0x3]
      %v630 = vlaneseq
      %v631 = vshrl.u32 %v630, 7
      %v632 = vsub.s32 0, %v631
      %v633 = vrot.slane %v628, %v632
      %v634 = vlaneseq
      %v635 = vshrl.u32 %v634, 7
      %v636 = vsub.s32 1, %v635
      %v637 = vrot.slane %v628, %v636
      %v648 = vunpack.c.l.b16 %v620
      %v649 = vunpack.c.h.b16 %v620
      %v650 = vunpack.c.l.b16 %v621
      %v651 = vunpack.c.h.b16 %v621
      %v652 = vunpack.c.l.b16 %v622
      %v653 = vunpack.c.h.b16 %v622
      %v654 = vunpack.c.l.b16 %v623
      %v655 = vunpack.c.h.b16 %v623
      %v656 = vunpack.c.l.b16 %v624
      %v657 = vunpack.c.h.b16 %v624
      %v658 = vunpack.c.l.b16 %v625
      %v659 = vunpack.c.h.b16 %v625
      %v660 = vunpack.c.l.b16 %v626
      %v661 = vunpack.c.h.b16 %v626
      %v662 = vunpack.c.l.b16 %v627
      %v663 = vunpack.c.h.b16 %v627
      %v664 = vpack.c.b16 %v650, %v648
      %v665 = vpack.c.b16 %v651, %v649
      %v666 = vpack.c.b16 %v654, %v652
      %v667 = vpack.c.b16 %v655, %v653
      %v668 = vpack.c.b16 %v658, %v656
      %v669 = vpack.c.b16 %v659, %v657
      %v670 = vpack.c.b16 %v662, %v660
      %v671 = vpack.c.b16 %v663, %v661
      %v681 = vsel %vm482, %v616, 0
      %v684 = vsel %vm482, %v617, 0
      %v687 = vsel %vm482, %v618, 0
      %v690 = vsel %vm482, %v619, 0
      %692 = vmatprep.subr.bf16.mxu0 %v665
      %693 = vmatpush1.bf16.msra.mxu0 %v664
      %694 = vmatprep.subr.bf16.mxu0 %v667
      %695 = vmatpush1.bf16.msra.mxu0 %v666
      %696 = vmatprep.subr.bf16.mxu0 %v669
      %697 = vmatpush1.bf16.msra.mxu0 %v668
      %698 = vmatprep.subr.bf16.mxu0 %v671
      %699 = vmatpush1.bf16.msra.mxu0 %v670
      %700 = vmatprep.subr.bf16.mxu0 0
      %701 = vmatpush1.bf16.msra.mxu0 0
      %702 = vmatprep.subr.bf16.mxu0 0
      %703 = vmatpush1.bf16.msra.mxu0 0
      %704 = vmatprep.subr.bf16.mxu0 0
      %705 = vmatpush1.bf16.msra.mxu0 0
      %706 = vmatprep.subr.bf16.mxu0 0
      %707 = vmatpush1.bf16.msra.mxu0 0
      %708 = vmatprep.subr.bf16.mxu0 0
      %709 = vmatpush1.bf16.msra.mxu0 0
      %710 = vmatprep.subr.bf16.mxu0 0
      %711 = vmatpush1.bf16.msra.mxu0 0
      %712 = vmatprep.subr.bf16.mxu0 0
      %713 = vmatpush1.bf16.msra.mxu0 0
      %714 = vmatprep.subr.bf16.mxu0 0
      %715 = vmatpush1.bf16.msra.mxu0 0
      %716 = vmatprep.subr.bf16.mxu0 0
      %717 = vmatpush1.bf16.msra.mxu0 0
      %718 = vmatprep.subr.bf16.mxu0 0
      %719 = vmatpush1.bf16.msra.mxu0 0
      %720 = vmatprep.subr.bf16.mxu0 0
      %721 = vmatpush1.bf16.msra.mxu0 0
      %722 = vmatprep.subr.bf16.mxu0 0
      %723 = vmatpush1.bf16.msra.mxu0 0
      %724 = vmatprep.mubr.bf16.mxu0 0
      %725 = vmatmul.mubr.bf16.gmra.mrb[0].mxu0 %v681
      %v726 = vpop.f32.mrb[0].mxu0
      %v727 = vadd.f32 %v633, %v726
      %v728 = vpop.f32.mrb[0].mxu0
      %v729 = vadd.f32 %v637, %v728
      %v730 = vpop.f32.mrb[0].mxu0
      %v731 = vadd.f32 %v633, %v730
      %v732 = vpop.f32.mrb[0].mxu0
      %v733 = vadd.f32 %v637, %v732
      %734 = vmatprep.mubr.bf16.mxu0 0
      %735 = vmatmul.mubr.bf16.gmra.mrb[0].mxu0 %v684
      %v736 = vpop.f32.mrb[0].mxu0
      %v737 = vadd.f32 %v633, %v736
      %v738 = vpop.f32.mrb[0].mxu0
      %v739 = vadd.f32 %v637, %v738
      %v740 = vpop.f32.mrb[0].mxu0
      %v741 = vadd.f32 %v633, %v740
      %v742 = vpop.f32.mrb[0].mxu0
      %v743 = vadd.f32 %v637, %v742
      %744 = vmatprep.mubr.bf16.mxu0 0
      %745 = vmatmul.mubr.bf16.gmra.mrb[0].mxu0 %v687
      %v746 = vpop.f32.mrb[0].mxu0
      %v747 = vadd.f32 %v633, %v746
      %v748 = vpop.f32.mrb[0].mxu0
      %v749 = vadd.f32 %v637, %v748
      %v750 = vpop.f32.mrb[0].mxu0
      %v751 = vadd.f32 %v633, %v750
      %v752 = vpop.f32.mrb[0].mxu0
      %v753 = vadd.f32 %v637, %v752
      %754 = vmatprep.mubr.bf16.mxu0 0
      %755 = vmatmul.mubr.bf16.gmra.mrb[0].mxu0 %v690
      %v756 = vpop.f32.mrb[0].mxu0
      %v757 = vadd.f32 %v633, %v756
      %v758 = vpop.f32.mrb[0].mxu0
      %v759 = vadd.f32 %v637, %v758
      %v760 = vpop.f32.mrb[0].mxu0
      %v761 = vadd.f32 %v633, %v760
      %v762 = vpop.f32.mrb[0].mxu0
      %v763 = vadd.f32 %v637, %v762
      %764 = vdwg.mxu0
      %v765 = vld [vmem:[%s1] sm:$0xff]
      %v766 = vld [vmem:[%s1 + $0x8] sm:$0xff]
      %v767 = vld [vmem:[%s1 + $0x10] sm:$0xff]
      %v768 = vld [vmem:[%s1 + $0x18] sm:$0xff]
      %v769 = vld [vmem:[%s1 + $0x20] sm:$0xff]
      %v770 = vld [vmem:[%s1 + $0x28] sm:$0xff]
      %v771 = vld [vmem:[%s1 + $0x30] sm:$0xff]
      %v772 = vld [vmem:[%s1 + $0x38] sm:$0xff]
      %v773 = vpack.c.bf16 %v731, %v727
      %v774 = vpack.c.bf16 %v741, %v737
      %v775 = vpack.c.bf16 %v751, %v747
      %v776 = vpack.c.bf16 %v761, %v757
      %v777 = vpack.c.bf16 %v733, %v729
      %v778 = vpack.c.bf16 %v743, %v739
      %v779 = vpack.c.bf16 %v753, %v749
      %v780 = vpack.c.bf16 %v763, %v759
      %782 = vrot.lane.b32.xlu0 %v773, 64
      %v783 = vpop.permute.xlu0 %782
      %vm784 = vcmask 130048
      %v786 = vsel %vm784, %v773, 0
      %v789 = vsel %vm784, %v783, 0
      %791 = vmatprep.subr.bf16.mxu0 0
      %792 = vmatpush1.bf16.xpose.msra.mxu0 %v789
      %793 = vmatprep.subr.bf16.mxu0 0
      %794 = vmatpush1.bf16.xpose.msra.mxu0 0
      %795 = vmatprep.subr.bf16.mxu0 0
      %796 = vmatpush1.bf16.xpose.msra.mxu0 0
      %797 = vmatprep.subr.bf16.mxu0 0
      %798 = vmatpush1.bf16.xpose.msra.mxu0 0
      %799 = vmatprep.subr.bf16.mxu0 0
      %800 = vmatpush1.bf16.xpose.msra.mxu0 0
      %801 = vmatprep.subr.bf16.mxu0 0
      %802 = vmatpush1.bf16.xpose.msra.mxu0 0
      %803 = vmatprep.subr.bf16.mxu0 0
      %804 = vmatpush1.bf16.xpose.msra.mxu0 0
      %805 = vmatprep.subr.bf16.mxu0 0
      %806 = vmatpush1.bf16.xpose.msra.mxu0 0
      %807 = vmatprep.subr.bf16.mxu0 0
      %808 = vmatpush1.bf16.xpose.msra.mxu0 0
      %809 = vmatprep.subr.bf16.mxu0 0
      %810 = vmatpush1.bf16.xpose.msra.mxu0 0
      %811 = vmatprep.subr.bf16.mxu0 0
      %812 = vmatpush1.bf16.xpose.msra.mxu0 0
      %813 = vmatprep.subr.bf16.mxu0 0
      %814 = vmatpush1.bf16.xpose.msra.mxu0 0
      %815 = vmatprep.subr.bf16.mxu0 0
      %816 = vmatpush1.bf16.xpose.msra.mxu0 0
      %817 = vmatprep.subr.bf16.mxu0 0
      %818 = vmatpush1.bf16.xpose.msra.mxu0 0
      %819 = vmatprep.subr.bf16.mxu0 0
      %820 = vmatpush1.bf16.xpose.msra.mxu0 0
      %821 = vmatprep.subr.bf16.mxu0 0
      %822 = vmatpush1.bf16.xpose.msra.mxu0 0
      %823 = vmatprep.mubr.bf16.mxu0 0
      %824 = vmatmul.mubr.bf16.gmra.mrb[0].mxu0 %v786
      %v825 = vpop.f32.mrb[0].mxu0
      %v826 = vadd.f32 %v765, %v825
      %v827 = vpop.f32.mrb[0].mxu0
      %v828 = vpop.f32.mrb[0].mxu0
      %v829 = vadd.f32 %v766, %v828
      %v830 = vpop.f32.mrb[0].mxu0
      %831 = vdwg.mxu0
      %833 = vrot.lane.b32.xlu0 %v774, 64
      %v834 = vpop.permute.xlu0 %833
      %v836 = vsel %vm784, %v774, 0
      %v839 = vsel %vm784, %v834, 0
      %841 = vmatprep.subr.bf16.mxu0 0
      %842 = vmatpush1.bf16.xpose.msra.mxu0 %v839
      %843 = vmatprep.subr.bf16.mxu0 0
      %844 = vmatpush1.bf16.xpose.msra.mxu0 0
      %845 = vmatprep.subr.bf16.mxu0 0
      %846 = vmatpush1.bf16.xpose.msra.mxu0 0
      %847 = vmatprep.subr.bf16.mxu0 0
      %848 = vmatpush1.bf16.xpose.msra.mxu0 0
      %849 = vmatprep.subr.bf16.mxu0 0
      %850 = vmatpush1.bf16.xpose.msra.mxu0 0
      %851 = vmatprep.subr.bf16.mxu0 0
      %852 = vmatpush1.bf16.xpose.msra.mxu0 0
      %853 = vmatprep.subr.bf16.mxu0 0
      %854 = vmatpush1.bf16.xpose.msra.mxu0 0
      %855 = vmatprep.subr.bf16.mxu0 0
      %856 = vmatpush1.bf16.xpose.msra.mxu0 0
      %857 = vmatprep.subr.bf16.mxu0 0
      %858 = vmatpush1.bf16.xpose.msra.mxu0 0
      %859 = vmatprep.subr.bf16.mxu0 0
      %860 = vmatpush1.bf16.xpose.msra.mxu0 0
      %861 = vmatprep.subr.bf16.mxu0 0
      %862 = vmatpush1.bf16.xpose.msra.mxu0 0
      %863 = vmatprep.subr.bf16.mxu0 0
      %864 = vmatpush1.bf16.xpose.msra.mxu0 0
      %865 = vmatprep.subr.bf16.mxu0 0
      %866 = vmatpush1.bf16.xpose.msra.mxu0 0
      %867 = vmatprep.subr.bf16.mxu0 0
      %868 = vmatpush1.bf16.xpose.msra.mxu0 0
      %869 = vmatprep.subr.bf16.mxu0 0
      %870 = vmatpush1.bf16.xpose.msra.mxu0 0
      %871 = vmatprep.subr.bf16.mxu0 0
      %872 = vmatpush1.bf16.xpose.msra.mxu0 0
      %873 = vmatprep.mubr.bf16.mxu0 0
      %874 = vmatmul.mubr.bf16.gmra.mrb[0].mxu0 %v836
      %v875 = vpop.f32.mrb[0].mxu0
      %v876 = vadd.f32 %v765, %v875
      %v877 = vpop.f32.mrb[0].mxu0
      %v878 = vpop.f32.mrb[0].mxu0
      %v879 = vadd.f32 %v766, %v878
      %v880 = vpop.f32.mrb[0].mxu0
      %881 = vdwg.mxu0
      %883 = vrot.lane.b32.xlu0 %v775, 64
      %v884 = vpop.permute.xlu0 %883
      %v886 = vsel %vm784, %v775, 0
      %v889 = vsel %vm784, %v884, 0
      %891 = vmatprep.subr.bf16.mxu0 0
      %892 = vmatpush1.bf16.xpose.msra.mxu0 %v889
      %893 = vmatprep.subr.bf16.mxu0 0
      %894 = vmatpush1.bf16.xpose.msra.mxu0 0
      %895 = vmatprep.subr.bf16.mxu0 0
      %896 = vmatpush1.bf16.xpose.msra.mxu0 0
      %897 = vmatprep.subr.bf16.mxu0 0
      %898 = vmatpush1.bf16.xpose.msra.mxu0 0
      %899 = vmatprep.subr.bf16.mxu0 0
      %900 = vmatpush1.bf16.xpose.msra.mxu0 0
      %901 = vmatprep.subr.bf16.mxu0 0
      %902 = vmatpush1.bf16.xpose.msra.mxu0 0
      %903 = vmatprep.subr.bf16.mxu0 0
      %904 = vmatpush1.bf16.xpose.msra.mxu0 0
      %905 = vmatprep.subr.bf16.mxu0 0
      %906 = vmatpush1.bf16.xpose.msra.mxu0 0
      %907 = vmatprep.subr.bf16.mxu0 0
      %908 = vmatpush1.bf16.xpose.msra.mxu0 0
      %909 = vmatprep.subr.bf16.mxu0 0
      %910 = vmatpush1.bf16.xpose.msra.mxu0 0
      %911 = vmatprep.subr.bf16.mxu0 0
      %912 = vmatpush1.bf16.xpose.msra.mxu0 0
      %913 = vmatprep.subr.bf16.mxu0 0
      %914 = vmatpush1.bf16.xpose.msra.mxu0 0
      %915 = vmatprep.subr.bf16.mxu0 0
      %916 = vmatpush1.bf16.xpose.msra.mxu0 0
      %917 = vmatprep.subr.bf16.mxu0 0
      %918 = vmatpush1.bf16.xpose.msra.mxu0 0
      %919 = vmatprep.subr.bf16.mxu0 0
      %920 = vmatpush1.bf16.xpose.msra.mxu0 0
      %921 = vmatprep.subr.bf16.mxu0 0
      %922 = vmatpush1.bf16.xpose.msra.mxu0 0
      %923 = vmatprep.mubr.bf16.mxu0 0
      %924 = vmatmul.mubr.bf16.gmra.mrb[0].mxu0 %v886
      %v925 = vpop.f32.mrb[0].mxu0
      %v926 = vadd.f32 %v765, %v925
      %v927 = vpop.f32.mrb[0].mxu0
      %v928 = vpop.f32.mrb[0].mxu0
      %v929 = vadd.f32 %v766, %v928
      %v930 = vpop.f32.mrb[0].mxu0
      %931 = vdwg.mxu0
      %933 = vrot.lane.b32.xlu0 %v776, 64
      %v934 = vpop.permute.xlu0 %933
      %v936 = vsel %vm784, %v776, 0
      %v939 = vsel %vm784, %v934, 0
      %941 = vmatprep.subr.bf16.mxu0 0
      %942 = vmatpush1.bf16.xpose.msra.mxu0 %v939
      %943 = vmatprep.subr.bf16.mxu0 0
      %944 = vmatpush1.bf16.xpose.msra.mxu0 0
      %945 = vmatprep.subr.bf16.mxu0 0
      %946 = vmatpush1.bf16.xpose.msra.mxu0 0
      %947 = vmatprep.subr.bf16.mxu0 0
      %948 = vmatpush1.bf16.xpose.msra.mxu0 0
      %949 = vmatprep.subr.bf16.mxu0 0
      %950 = vmatpush1.bf16.xpose.msra.mxu0 0
      %951 = vmatprep.subr.bf16.mxu0 0
      %952 = vmatpush1.bf16.xpose.msra.mxu0 0
      %953 = vmatprep.subr.bf16.mxu0 0
      %954 = vmatpush1.bf16.xpose.msra.mxu0 0
      %955 = vmatprep.subr.bf16.mxu0 0
      %956 = vmatpush1.bf16.xpose.msra.mxu0 0
      %957 = vmatprep.subr.bf16.mxu0 0
      %958 = vmatpush1.bf16.xpose.msra.mxu0 0
      %959 = vmatprep.subr.bf16.mxu0 0
      %960 = vmatpush1.bf16.xpose.msra.mxu0 0
      %961 = vmatprep.subr.bf16.mxu0 0
      %962 = vmatpush1.bf16.xpose.msra.mxu0 0
      %963 = vmatprep.subr.bf16.mxu0 0
      %964 = vmatpush1.bf16.xpose.msra.mxu0 0
      %965 = vmatprep.subr.bf16.mxu0 0
      %966 = vmatpush1.bf16.xpose.msra.mxu0 0
      %967 = vmatprep.subr.bf16.mxu0 0
      %968 = vmatpush1.bf16.xpose.msra.mxu0 0
      %969 = vmatprep.subr.bf16.mxu0 0
      %970 = vmatpush1.bf16.xpose.msra.mxu0 0
      %971 = vmatprep.subr.bf16.mxu0 0
      %972 = vmatpush1.bf16.xpose.msra.mxu0 0
      %973 = vmatprep.mubr.bf16.mxu0 0
      %974 = vmatmul.mubr.bf16.gmra.mrb[0].mxu0 %v936
      %v975 = vpop.f32.mrb[0].mxu0
      %v976 = vadd.f32 %v765, %v975
      %v977 = vpop.f32.mrb[0].mxu0
      %v978 = vpop.f32.mrb[0].mxu0
      %v979 = vadd.f32 %v766, %v978
      %v980 = vpop.f32.mrb[0].mxu0
      %981 = vdwg.mxu0
      %v982 = vsel %vm784, %v826, -inf
      %983 = vmax.xlane.f32.xlu0 %v982
      %v984 = vpop.xlane.xlu0 %983
      %v985 = vsel %vm784, %v829, -inf
      %986 = vmax.xlane.f32.xlu0 %v985
      %v987 = vpop.xlane.xlu0 %986
      %v988 = vsel %vm784, %v876, -inf
      %989 = vmax.xlane.f32.xlu0 %v988
      %v990 = vpop.xlane.xlu0 %989
      %v991 = vsel %vm784, %v879, -inf
      %992 = vmax.xlane.f32.xlu0 %v991
      %v993 = vpop.xlane.xlu0 %992
      %v994 = vsel %vm784, %v926, -inf
      %995 = vmax.xlane.f32.xlu0 %v994
      %v996 = vpop.xlane.xlu0 %995
      %v997 = vsel %vm784, %v929, -inf
      %998 = vmax.xlane.f32.xlu0 %v997
      %v999 = vpop.xlane.xlu0 %998
      %v1000 = vsel %vm784, %v976, -inf
      %1001 = vmax.xlane.f32.xlu0 %v1000
      %v1002 = vpop.xlane.xlu0 %1001
      %v1003 = vsel %vm784, %v979, -inf
      %1004 = vmax.xlane.f32.xlu0 %v1003
      %v1005 = vpop.xlane.xlu0 %1004
      %v1006 = vsub.f32 %v826, %v984
      %v1007 = vsub.f32 %v829, %v987
      %v1008 = vsub.f32 %v876, %v990
      %v1009 = vsub.f32 %v879, %v993
      %v1010 = vsub.f32 %v926, %v996
      %v1011 = vsub.f32 %v929, %v999
      %v1012 = vsub.f32 %v976, %v1002
      %v1013 = vsub.f32 %v979, %v1005
      %v1014 = vmul.f32 %v1006, 1.442695
      %v1015 = vpow.pop %v1014
      %v1016 = vmul.f32 %v1007, 1.442695
      %v1017 = vpow.pop %v1016
      %v1018 = vmul.f32 %v1008, 1.442695
      %v1019 = vpow.pop %v1018
      %v1020 = vmul.f32 %v1009, 1.442695
      %v1021 = vpow.pop %v1020
      %v1022 = vmul.f32 %v1010, 1.442695
      %v1023 = vpow.pop %v1022
      %v1024 = vmul.f32 %v1011, 1.442695
      %v1025 = vpow.pop %v1024
      %v1026 = vmul.f32 %v1012, 1.442695
      %v1027 = vpow.pop %v1026
      %v1028 = vmul.f32 %v1013, 1.442695
      %v1029 = vpow.pop %v1028
      %v1030 = vsel %vm784, %v1015, 0.0
      %1031 = vadd.xlane.f32.xlu0 %v1030
      %v1032 = vpop.xlane.xlu0 %1031
      %v1033 = vsel %vm784, %v1017, 0.0
      %1034 = vadd.xlane.f32.xlu0 %v1033
      %v1035 = vpop.xlane.xlu0 %1034
      %v1036 = vsel %vm784, %v1019, 0.0
      %1037 = vadd.xlane.f32.xlu0 %v1036
      %v1038 = vpop.xlane.xlu0 %1037
      %v1039 = vsel %vm784, %v1021, 0.0
      %1040 = vadd.xlane.f32.xlu0 %v1039
      %v1041 = vpop.xlane.xlu0 %1040
      %v1042 = vsel %vm784, %v1023, 0.0
      %1043 = vadd.xlane.f32.xlu0 %v1042
      %v1044 = vpop.xlane.xlu0 %1043
      %v1045 = vsel %vm784, %v1025, 0.0
      %1046 = vadd.xlane.f32.xlu0 %v1045
      %v1047 = vpop.xlane.xlu0 %1046
      %v1048 = vsel %vm784, %v1027, 0.0
      %1049 = vadd.xlane.f32.xlu0 %v1048
      %v1050 = vpop.xlane.xlu0 %1049
      %v1051 = vsel %vm784, %v1029, 0.0
      %1052 = vadd.xlane.f32.xlu0 %v1051
      %v1053 = vpop.xlane.xlu0 %1052
      %v1054 = vpack.c.bf16 %v1017, %v1015
      %v1055 = vpack.c.bf16 %v1021, %v1019
      %v1056 = vpack.c.bf16 %v1025, %v1023
      %v1057 = vpack.c.bf16 %v1029, %v1027
      %v1059 = vsel %vm784, %v1054, 0
      %1061 = vmatprep.subr.bf16.mxu0 0
      %1062 = vmatpush1.bf16.msra.mxu0 %v777
      %1063 = vmatprep.subr.bf16.mxu0 0
      %1064 = vmatpush1.bf16.msra.mxu0 0
      %1065 = vmatprep.subr.bf16.mxu0 0
      %1066 = vmatpush1.bf16.msra.mxu0 0
      %1067 = vmatprep.subr.bf16.mxu0 0
      %1068 = vmatpush1.bf16.msra.mxu0 0
      %1069 = vmatprep.subr.bf16.mxu0 0
      %1070 = vmatpush1.bf16.msra.mxu0 0
      %1071 = vmatprep.subr.bf16.mxu0 0
      %1072 = vmatpush1.bf16.msra.mxu0 0
      %1073 = vmatprep.subr.bf16.mxu0 0
      %1074 = vmatpush1.bf16.msra.mxu0 0
      %1075 = vmatprep.subr.bf16.mxu0 0
      %1076 = vmatpush1.bf16.msra.mxu0 0
      %1077 = vmatprep.subr.bf16.mxu0 0
      %1078 = vmatpush1.bf16.msra.mxu0 0
      %1079 = vmatprep.subr.bf16.mxu0 0
      %1080 = vmatpush1.bf16.msra.mxu0 0
      %1081 = vmatprep.subr.bf16.mxu0 0
      %1082 = vmatpush1.bf16.msra.mxu0 0
      %1083 = vmatprep.subr.bf16.mxu0 0
      %1084 = vmatpush1.bf16.msra.mxu0 0
      %1085 = vmatprep.subr.bf16.mxu0 0
      %1086 = vmatpush1.bf16.msra.mxu0 0
      %1087 = vmatprep.subr.bf16.mxu0 0
      %1088 = vmatpush1.bf16.msra.mxu0 0
      %1089 = vmatprep.subr.bf16.mxu0 0
      %1090 = vmatpush1.bf16.msra.mxu0 0
      %1091 = vmatprep.subr.bf16.mxu0 0
      %1092 = vmatpush1.bf16.msra.mxu0 0
      %1093 = vmatprep.mubr.bf16.mxu0 0
      %1094 = vmatmul.mubr.bf16.gmra.mrb[0].mxu0 %v1059
      %v1095 = vpop.f32.mrb[0].mxu0
      %v1096 = vadd.f32 0.0, %v1095
      %v1097 = vpop.f32.mrb[0].mxu0
      %v1098 = vpop.f32.mrb[0].mxu0
      %v1099 = vadd.f32 0.0, %v1098
      %v1100 = vpop.f32.mrb[0].mxu0
      %1101 = vdwg.mxu0
      %v1103 = vsel %vm784, %v1055, 0
      %1105 = vmatprep.subr.bf16.mxu0 0
      %1106 = vmatpush1.bf16.msra.mxu0 %v778
      %1107 = vmatprep.subr.bf16.mxu0 0
      %1108 = vmatpush1.bf16.msra.mxu0 0
      %1109 = vmatprep.subr.bf16.mxu0 0
      %1110 = vmatpush1.bf16.msra.mxu0 0
      %1111 = vmatprep.subr.bf16.mxu0 0
      %1112 = vmatpush1.bf16.msra.mxu0 0
      %1113 = vmatprep.subr.bf16.mxu0 0
      %1114 = vmatpush1.bf16.msra.mxu0 0
      %1115 = vmatprep.subr.bf16.mxu0 0
      %1116 = vmatpush1.bf16.msra.mxu0 0
      %1117 = vmatprep.subr.bf16.mxu0 0
      %1118 = vmatpush1.bf16.msra.mxu0 0
      %1119 = vmatprep.subr.bf16.mxu0 0
      %1120 = vmatpush1.bf16.msra.mxu0 0
      %1121 = vmatprep.subr.bf16.mxu0 0
      %1122 = vmatpush1.bf16.msra.mxu0 0
      %1123 = vmatprep.subr.bf16.mxu0 0
      %1124 = vmatpush1.bf16.msra.mxu0 0
      %1125 = vmatprep.subr.bf16.mxu0 0
      %1126 = vmatpush1.bf16.msra.mxu0 0
      %1127 = vmatprep.subr.bf16.mxu0 0
      %1128 = vmatpush1.bf16.msra.mxu0 0
      %1129 = vmatprep.subr.bf16.mxu0 0
      %1130 = vmatpush1.bf16.msra.mxu0 0
      %1131 = vmatprep.subr.bf16.mxu0 0
      %1132 = vmatpush1.bf16.msra.mxu0 0
      %1133 = vmatprep.subr.bf16.mxu0 0
      %1134 = vmatpush1.bf16.msra.mxu0 0
      %1135 = vmatprep.subr.bf16.mxu0 0
      %1136 = vmatpush1.bf16.msra.mxu0 0
      %1137 = vmatprep.mubr.bf16.mxu0 0
      %1138 = vmatmul.mubr.bf16.gmra.mrb[0].mxu0 %v1103
      %v1139 = vpop.f32.mrb[0].mxu0
      %v1140 = vadd.f32 0.0, %v1139
      %v1141 = vpop.f32.mrb[0].mxu0
      %v1142 = vpop.f32.mrb[0].mxu0
      %v1143 = vadd.f32 0.0, %v1142
      %v1144 = vpop.f32.mrb[0].mxu0
      %1145 = vdwg.mxu0
      %v1147 = vsel %vm784, %v1056, 0
      %1149 = vmatprep.subr.bf16.mxu0 0
      %1150 = vmatpush1.bf16.msra.mxu0 %v779
      %1151 = vmatprep.subr.bf16.mxu0 0
      %1152 = vmatpush1.bf16.msra.mxu0 0
      %1153 = vmatprep.subr.bf16.mxu0 0
      %1154 = vmatpush1.bf16.msra.mxu0 0
      %1155 = vmatprep.subr.bf16.mxu0 0
      %1156 = vmatpush1.bf16.msra.mxu0 0
      %1157 = vmatprep.subr.bf16.mxu0 0
      %1158 = vmatpush1.bf16.msra.mxu0 0
      %1159 = vmatprep.subr.bf16.mxu0 0
      %1160 = vmatpush1.bf16.msra.mxu0 0
      %1161 = vmatprep.subr.bf16.mxu0 0
      %1162 = vmatpush1.bf16.msra.mxu0 0
      %1163 = vmatprep.subr.bf16.mxu0 0
      %1164 = vmatpush1.bf16.msra.mxu0 0
      %1165 = vmatprep.subr.bf16.mxu0 0
      %1166 = vmatpush1.bf16.msra.mxu0 0
      %1167 = vmatprep.subr.bf16.mxu0 0
      %1168 = vmatpush1.bf16.msra.mxu0 0
      %1169 = vmatprep.subr.bf16.mxu0 0
      %1170 = vmatpush1.bf16.msra.mxu0 0
      %1171 = vmatprep.subr.bf16.mxu0 0
      %1172 = vmatpush1.bf16.msra.mxu0 0
      %1173 = vmatprep.subr.bf16.mxu0 0
      %1174 = vmatpush1.bf16.msra.mxu0 0
      %1175 = vmatprep.subr.bf16.mxu0 0
      %1176 = vmatpush1.bf16.msra.mxu0 0
      %1177 = vmatprep.subr.bf16.mxu0 0
      %1178 = vmatpush1.bf16.msra.mxu0 0
      %1179 = vmatprep.subr.bf16.mxu0 0
      %1180 = vmatpush1.bf16.msra.mxu0 0
      %1181 = vmatprep.mubr.bf16.mxu0 0
      %1182 = vmatmul.mubr.bf16.gmra.mrb[0].mxu0 %v1147
      %v1183 = vpop.f32.mrb[0].mxu0
      %v1184 = vadd.f32 0.0, %v1183
      %v1185 = vpop.f32.mrb[0].mxu0
      %v1186 = vpop.f32.mrb[0].mxu0
      %v1187 = vadd.f32 0.0, %v1186
      %v1188 = vpop.f32.mrb[0].mxu0
      %1189 = vdwg.mxu0
      %v1191 = vsel %vm784, %v1057, 0
      %1193 = vmatprep.subr.bf16.mxu0 0
      %1194 = vmatpush1.bf16.msra.mxu0 %v780
      %1195 = vmatprep.subr.bf16.mxu0 0
      %1196 = vmatpush1.bf16.msra.mxu0 0
      %1197 = vmatprep.subr.bf16.mxu0 0
      %1198 = vmatpush1.bf16.msra.mxu0 0
      %1199 = vmatprep.subr.bf16.mxu0 0
      %1200 = vmatpush1.bf16.msra.mxu0 0
      %1201 = vmatprep.subr.bf16.mxu0 0
      %1202 = vmatpush1.bf16.msra.mxu0 0
      %1203 = vmatprep.subr.bf16.mxu0 0
      %1204 = vmatpush1.bf16.msra.mxu0 0
      %1205 = vmatprep.subr.bf16.mxu0 0
      %1206 = vmatpush1.bf16.msra.mxu0 0
      %1207 = vmatprep.subr.bf16.mxu0 0
      %1208 = vmatpush1.bf16.msra.mxu0 0
      %1209 = vmatprep.subr.bf16.mxu0 0
      %1210 = vmatpush1.bf16.msra.mxu0 0
      %1211 = vmatprep.subr.bf16.mxu0 0
      %1212 = vmatpush1.bf16.msra.mxu0 0
      %1213 = vmatprep.subr.bf16.mxu0 0
      %1214 = vmatpush1.bf16.msra.mxu0 0
      %1215 = vmatprep.subr.bf16.mxu0 0
      %1216 = vmatpush1.bf16.msra.mxu0 0
      %1217 = vmatprep.subr.bf16.mxu0 0
      %1218 = vmatpush1.bf16.msra.mxu0 0
      %1219 = vmatprep.subr.bf16.mxu0 0
      %1220 = vmatpush1.bf16.msra.mxu0 0
      %1221 = vmatprep.subr.bf16.mxu0 0
      %1222 = vmatpush1.bf16.msra.mxu0 0
      %1223 = vmatprep.subr.bf16.mxu0 0
      %1224 = vmatpush1.bf16.msra.mxu0 0
      %1225 = vmatprep.mubr.bf16.mxu0 0
      %1226 = vmatmul.mubr.bf16.gmra.mrb[0].mxu0 %v1191
      %v1227 = vpop.f32.mrb[0].mxu0
      %v1228 = vadd.f32 0.0, %v1227
      %v1229 = vpop.f32.mrb[0].mxu0
      %v1230 = vpop.f32.mrb[0].mxu0
      %v1231 = vadd.f32 0.0, %v1230
      %v1232 = vpop.f32.mrb[0].mxu0
      %1233 = vdwg.mxu0
      %v1234 = vrcp.pop %v1032
      %v1235 = vmul.f32 1.0, %v1234
      %v1236 = vrcp.pop %v1035
      %v1237 = vmul.f32 1.0, %v1236
      %v1238 = vrcp.pop %v1038
      %v1239 = vmul.f32 1.0, %v1238
      %v1240 = vrcp.pop %v1041
      %v1241 = vmul.f32 1.0, %v1240
      %v1242 = vrcp.pop %v1044
      %v1243 = vmul.f32 1.0, %v1242
      %v1244 = vrcp.pop %v1047
      %v1245 = vmul.f32 1.0, %v1244
      %v1246 = vrcp.pop %v1050
      %v1247 = vmul.f32 1.0, %v1246
      %v1248 = vrcp.pop %v1053
      %v1249 = vmul.f32 1.0, %v1248
      %v1250 = vmul.f32 %v1096, %v1235
      %v1251 = vmul.f32 %v1099, %v1237
      %v1252 = vmul.f32 %v1140, %v1239
      %v1253 = vmul.f32 %v1143, %v1241
      %v1254 = vmul.f32 %v1184, %v1243
      %v1255 = vmul.f32 %v1187, %v1245
      %v1256 = vmul.f32 %v1228, %v1247
      %v1257 = vmul.f32 %v1231, %v1249
      %1258 = vst.msk [vmem:[#allocation2] sm:$0xff] %vm784, %v1250
      %1259 = vst.msk [vmem:[#allocation2 + $0x8] sm:$0xff] %vm784, %v1251
      %1260 = vst.msk [vmem:[#allocation2 + $0x10] sm:$0xff] %vm784, %v1252
      %1261 = vst.msk [vmem:[#allocation2 + $0x18] sm:$0xff] %vm784, %v1253
      %1262 = vst.msk [vmem:[#allocation2 + $0x20] sm:$0xff] %vm784, %v1254
      %1263 = vst.msk [vmem:[#allocation2 + $0x28] sm:$0xff] %vm784, %v1255
      %1264 = vst.msk [vmem:[#allocation2 + $0x30] sm:$0xff] %vm784, %v1256
      %1265 = vst.msk [vmem:[#allocation2 + $0x38] sm:$0xff] %vm784, %v1257
      %1266 = vrot.lane.b32.xlu0 %v773, 112
      %v1267 = vpop.permute.xlu0 %1266
      %1268 = vrot.lane.b32.xlu0 %v773, 48
      %v1269 = vpop.permute.xlu0 %1268
      %v1271 = vsel %vm784, %v1267, 0
      %v1274 = vsel %vm784, %v1269, 0
      %1276 = vmatprep.subr.bf16.mxu0 0
      %1277 = vmatpush1.bf16.xpose.msra.mxu0 %v1274
      %1278 = vmatprep.subr.bf16.mxu0 0
      %1279 = vmatpush1.bf16.xpose.msra.mxu0 0
      %1280 = vmatprep.subr.bf16.mxu0 0
      %1281 = vmatpush1.bf16.xpose.msra.mxu0 0
      %1282 = vmatprep.subr.bf16.mxu0 0
      %1283 = vmatpush1.bf16.xpose.msra.mxu0 0
      %1284 = vmatprep.subr.bf16.mxu0 0
      %1285 = vmatpush1.bf16.xpose.msra.mxu0 0
      %1286 = vmatprep.subr.bf16.mxu0 0
      %1287 = vmatpush1.bf16.xpose.msra.mxu0 0
      %1288 = vmatprep.subr.bf16.mxu0 0
      %1289 = vmatpush1.bf16.xpose.msra.mxu0 0
      %1290 = vmatprep.subr.bf16.mxu0 0
      %1291 = vmatpush1.bf16.xpose.msra.mxu0 0
      %1292 = vmatprep.subr.bf16.mxu0 0
      %1293 = vmatpush1.bf16.xpose.msra.mxu0 0
      %1294 = vmatprep.subr.bf16.mxu0 0
      %1295 = vmatpush1.bf16.xpose.msra.mxu0 0
      %1296 = vmatprep.subr.bf16.mxu0 0
      %1297 = vmatpush1.bf16.xpose.msra.mxu0 0
      %1298 = vmatprep.subr.bf16.mxu0 0
      %1299 = vmatpush1.bf16.xpose.msra.mxu0 0
      %1300 = vmatprep.subr.bf16.mxu0 0
      %1301 = vmatpush1.bf16.xpose.msra.mxu0 0
      %1302 = vmatprep.subr.bf16.mxu0 0
      %1303 = vmatpush1.bf16.xpose.msra.mxu0 0
      %1304 = vmatprep.subr.bf16.mxu0 0
      %1305 = vmatpush1.bf16.xpose.msra.mxu0 0
      %1306 = vmatprep.subr.bf16.mxu0 0
      %1307 = vmatpush1.bf16.xpose.msra.mxu0 0
      %1308 = vmatprep.mubr.bf16.mxu0 0
      %1309 = vmatmul.mubr.bf16.gmra.mrb[0].mxu0 %v1271
      %v1310 = vpop.f32.mrb[0].mxu0
      %v1311 = vadd.f32 %v767, %v1310
      %v1312 = vpop.f32.mrb[0].mxu0
      %v1313 = vpop.f32.mrb[0].mxu0
      %v1314 = vadd.f32 %v768, %v1313
      %v1315 = vpop.f32.mrb[0].mxu0
      %1316 = vdwg.mxu0
      %1317 = vrot.lane.b32.xlu0 %v774, 112
      %v1318 = vpop.permute.xlu0 %1317
      %1319 = vrot.lane.b32.xlu0 %v774, 48
      %v1320 = vpop.permute.xlu0 %1319
      %v1322 = vsel %vm784, %v1318, 0
      %v1325 = vsel %vm784, %v1320, 0
      %1327 = vmatprep.subr.bf16.mxu0 0
      %1328 = vmatpush1.bf16.xpose.msra.mxu0 %v1325
      %1329 = vmatprep.subr.bf16.mxu0 0
      %1330 = vmatpush1.bf16.xpose.msra.mxu0 0
      %1331 = vmatprep.subr.bf16.mxu0 0
      %1332 = vmatpush1.bf16.xpose.msra.mxu0 0
      %1333 = vmatprep.subr.bf16.mxu0 0
      %1334 = vmatpush1.bf16.xpose.msra.mxu0 0
      %1335 = vmatprep.subr.bf16.mxu0 0
      %1336 = vmatpush1.bf16.xpose.msra.mxu0 0
      %1337 = vmatprep.subr.bf16.mxu0 0
      %1338 = vmatpush1.bf16.xpose.msra.mxu0 0
      %1339 = vmatprep.subr.bf16.mxu0 0
      %1340 = vmatpush1.bf16.xpose.msra.mxu0 0
      %1341 = vmatprep.subr.bf16.mxu0 0
      %1342 = vmatpush1.bf16.xpose.msra.mxu0 0
      %1343 = vmatprep.subr.bf16.mxu0 0
      %1344 = vmatpush1.bf16.xpose.msra.mxu0 0
      %1345 = vmatprep.subr.bf16.mxu0 0
      %1346 = vmatpush1.bf16.xpose.msra.mxu0 0
      %1347 = vmatprep.subr.bf16.mxu0 0
      %1348 = vmatpush1.bf16.xpose.msra.mxu0 0
      %1349 = vmatprep.subr.bf16.mxu0 0
      %1350 = vmatpush1.bf16.xpose.msra.mxu0 0
      %1351 = vmatprep.subr.bf16.mxu0 0
      %1352 = vmatpush1.bf16.xpose.msra.mxu0 0
      %1353 = vmatprep.subr.bf16.mxu0 0
      %1354 = vmatpush1.bf16.xpose.msra.mxu0 0
      %1355 = vmatprep.subr.bf16.mxu0 0
      %1356 = vmatpush1.bf16.xpose.msra.mxu0 0
      %1357 = vmatprep.subr.bf16.mxu0 0
      %1358 = vmatpush1.bf16.xpose.msra.mxu0 0
      %1359 = vmatprep.mubr.bf16.mxu0 0
      %1360 = vmatmul.mubr.bf16.gmra.mrb[0].mxu0 %v1322
      %v1361 = vpop.f32.mrb[0].mxu0
      %v1362 = vadd.f32 %v767, %v1361
      %v1363 = vpop.f32.mrb[0].mxu0
      %v1364 = vpop.f32.mrb[0].mxu0
      %v1365 = vadd.f32 %v768, %v1364
      %v1366 = vpop.f32.mrb[0].mxu0
      %1367 = vdwg.mxu0
      %1368 = vrot.lane.b32.xlu0 %v775, 112
      %v1369 = vpop.permute.xlu0 %1368
      %1370 = vrot.lane.b32.xlu0 %v775, 48
      %v1371 = vpop.permute.xlu0 %1370
      %v1373 = vsel %vm784, %v1369, 0
      %v1376 = vsel %vm784, %v1371, 0
      %1378 = vmatprep.subr.bf16.mxu0 0
      %1379 = vmatpush1.bf16.xpose.msra.mxu0 %v1376
      %1380 = vmatprep.subr.bf16.mxu0 0
      %1381 = vmatpush1.bf16.xpose.msra.mxu0 0
      %1382 = vmatprep.subr.bf16.mxu0 0
      %1383 = vmatpush1.bf16.xpose.msra.mxu0 0
      %1384 = vmatprep.subr.bf16.mxu0 0
      %1385 = vmatpush1.bf16.xpose.msra.mxu0 0
      %1386 = vmatprep.subr.bf16.mxu0 0
      %1387 = vmatpush1.bf16.xpose.msra.mxu0 0
      %1388 = vmatprep.subr.bf16.mxu0 0
      %1389 = vmatpush1.bf16.xpose.msra.mxu0 0
      %1390 = vmatprep.subr.bf16.mxu0 0
      %1391 = vmatpush1.bf16.xpose.msra.mxu0 0
      %1392 = vmatprep.subr.bf16.mxu0 0
      %1393 = vmatpush1.bf16.xpose.msra.mxu0 0
      %1394 = vmatprep.subr.bf16.mxu0 0
      %1395 = vmatpush1.bf16.xpose.msra.mxu0 0
      %1396 = vmatprep.subr.bf16.mxu0 0
      %1397 = vmatpush1.bf16.xpose.msra.mxu0 0
      %1398 = vmatprep.subr.bf16.mxu0 0
      %1399 = vmatpush1.bf16.xpose.msra.mxu0 0
      %1400 = vmatprep.subr.bf16.mxu0 0
      %1401 = vmatpush1.bf16.xpose.msra.mxu0 0
      %1402 = vmatprep.subr.bf16.mxu0 0
      %1403 = vmatpush1.bf16.xpose.msra.mxu0 0
      %1404 = vmatprep.subr.bf16.mxu0 0
      %1405 = vmatpush1.bf16.xpose.msra.mxu0 0
      %1406 = vmatprep.subr.bf16.mxu0 0
      %1407 = vmatpush1.bf16.xpose.msra.mxu0 0
      %1408 = vmatprep.subr.bf16.mxu0 0
      %1409 = vmatpush1.bf16.xpose.msra.mxu0 0
      %1410 = vmatprep.mubr.bf16.mxu0 0
      %1411 = vmatmul.mubr.bf16.gmra.mrb[0].mxu0 %v1373
      %v1412 = vpop.f32.mrb[0].mxu0
      %v1413 = vadd.f32 %v767, %v1412
      %v1414 = vpop.f32.mrb[0].mxu0
      %v1415 = vpop.f32.mrb[0].mxu0
      %v1416 = vadd.f32 %v768, %v1415
      %v1417 = vpop.f32.mrb[0].mxu0
      %1418 = vdwg.mxu0
      %1419 = vrot.lane.b32.xlu0 %v776, 112
      %v1420 = vpop.permute.xlu0 %1419
      %1421 = vrot.lane.b32.xlu0 %v776, 48
      %v1422 = vpop.permute.xlu0 %1421
      %v1424 = vsel %vm784, %v1420, 0
      %v1427 = vsel %vm784, %v1422, 0
      %1429 = vmatprep.subr.bf16.mxu0 0
      %1430 = vmatpush1.bf16.xpose.msra.mxu0 %v1427
      %1431 = vmatprep.subr.bf16.mxu0 0
      %1432 = vmatpush1.bf16.xpose.msra.mxu0 0
      %1433 = vmatprep.subr.bf16.mxu0 0
      %1434 = vmatpush1.bf16.xpose.msra.mxu0 0
      %1435 = vmatprep.subr.bf16.mxu0 0
      %1436 = vmatpush1.bf16.xpose.msra.mxu0 0
      %1437 = vmatprep.subr.bf16.mxu0 0
      %1438 = vmatpush1.bf16.xpose.msra.mxu0 0
      %1439 = vmatprep.subr.bf16.mxu0 0
      %1440 = vmatpush1.bf16.xpose.msra.mxu0 0
      %1441 = vmatprep.subr.bf16.mxu0 0
      %1442 = vmatpush1.bf16.xpose.msra.mxu0 0
      %1443 = vmatprep.subr.bf16.mxu0 0
      %1444 = vmatpush1.bf16.xpose.msra.mxu0 0
      %1445 = vmatprep.subr.bf16.mxu0 0
      %1446 = vmatpush1.bf16.xpose.msra.mxu0 0
      %1447 = vmatprep.subr.bf16.mxu0 0
      %1448 = vmatpush1.bf16.xpose.msra.mxu0 0
      %1449 = vmatprep.subr.bf16.mxu0 0
      %1450 = vmatpush1.bf16.xpose.msra.mxu0 0
      %1451 = vmatprep.subr.bf16.mxu0 0
      %1452 = vmatpush1.bf16.xpose.msra.mxu0 0
      %1453 = vmatprep.subr.bf16.mxu0 0
      %1454 = vmatpush1.bf16.xpose.msra.mxu0 0
      %1455 = vmatprep.subr.bf16.mxu0 0
      %1456 = vmatpush1.bf16.xpose.msra.mxu0 0
      %1457 = vmatprep.subr.bf16.mxu0 0
      %1458 = vmatpush1.bf16.xpose.msra.mxu0 0
      %1459 = vmatprep.subr.bf16.mxu0 0
      %1460 = vmatpush1.bf16.xpose.msra.mxu0 0
      %1461 = vmatprep.mubr.bf16.mxu0 0
      %1462 = vmatmul.mubr.bf16.gmra.mrb[0].mxu0 %v1424
      %v1463 = vpop.f32.mrb[0].mxu0
      %v1464 = vadd.f32 %v767, %v1463
      %v1465 = vpop.f32.mrb[0].mxu0
      %v1466 = vpop.f32.mrb[0].mxu0
      %v1467 = vadd.f32 %v768, %v1466
      %v1468 = vpop.f32.mrb[0].mxu0
      %1469 = vdwg.mxu0
      %v1470 = vsel %vm784, %v1311, -inf
      %1471 = vmax.xlane.f32.xlu0 %v1470
      %v1472 = vpop.xlane.xlu0 %1471
      %v1473 = vsel %vm784, %v1314, -inf
      %1474 = vmax.xlane.f32.xlu0 %v1473
      %v1475 = vpop.xlane.xlu0 %1474
      %v1476 = vsel %vm784, %v1362, -inf
      %1477 = vmax.xlane.f32.xlu0 %v1476
      %v1478 = vpop.xlane.xlu0 %1477
      %v1479 = vsel %vm784, %v1365, -inf
      %1480 = vmax.xlane.f32.xlu0 %v1479
      %v1481 = vpop.xlane.xlu0 %1480
      %v1482 = vsel %vm784, %v1413, -inf
      %1483 = vmax.xlane.f32.xlu0 %v1482
      %v1484 = vpop.xlane.xlu0 %1483
      %v1485 = vsel %vm784, %v1416, -inf
      %1486 = vmax.xlane.f32.xlu0 %v1485
      %v1487 = vpop.xlane.xlu0 %1486
      %v1488 = vsel %vm784, %v1464, -inf
      %1489 = vmax.xlane.f32.xlu0 %v1488
      %v1490 = vpop.xlane.xlu0 %1489
      %v1491 = vsel %vm784, %v1467, -inf
      %1492 = vmax.xlane.f32.xlu0 %v1491
      %v1493 = vpop.xlane.xlu0 %1492
      %v1494 = vsub.f32 %v1311, %v1472
      %v1495 = vsub.f32 %v1314, %v1475
      %v1496 = vsub.f32 %v1362, %v1478
      %v1497 = vsub.f32 %v1365, %v1481
      %v1498 = vsub.f32 %v1413, %v1484
      %v1499 = vsub.f32 %v1416, %v1487
      %v1500 = vsub.f32 %v1464, %v1490
      %v1501 = vsub.f32 %v1467, %v1493
      %v1502 = vmul.f32 %v1494, 1.442695
      %v1503 = vpow.pop %v1502
      %v1504 = vmul.f32 %v1495, 1.442695
      %v1505 = vpow.pop %v1504
      %v1506 = vmul.f32 %v1496, 1.442695
      %v1507 = vpow.pop %v1506
      %v1508 = vmul.f32 %v1497, 1.442695
      %v1509 = vpow.pop %v1508
      %v1510 = vmul.f32 %v1498, 1.442695
      %v1511 = vpow.pop %v1510
      %v1512 = vmul.f32 %v1499, 1.442695
      %v1513 = vpow.pop %v1512
      %v1514 = vmul.f32 %v1500, 1.442695
      %v1515 = vpow.pop %v1514
      %v1516 = vmul.f32 %v1501, 1.442695
      %v1517 = vpow.pop %v1516
      %v1518 = vsel %vm784, %v1503, 0.0
      %1519 = vadd.xlane.f32.xlu0 %v1518
      %v1520 = vpop.xlane.xlu0 %1519
      %v1521 = vsel %vm784, %v1505, 0.0
      %1522 = vadd.xlane.f32.xlu0 %v1521
      %v1523 = vpop.xlane.xlu0 %1522
      %v1524 = vsel %vm784, %v1507, 0.0
      %1525 = vadd.xlane.f32.xlu0 %v1524
      %v1526 = vpop.xlane.xlu0 %1525
      %v1527 = vsel %vm784, %v1509, 0.0
      %1528 = vadd.xlane.f32.xlu0 %v1527
      %v1529 = vpop.xlane.xlu0 %1528
      %v1530 = vsel %vm784, %v1511, 0.0
      %1531 = vadd.xlane.f32.xlu0 %v1530
      %v1532 = vpop.xlane.xlu0 %1531
      %v1533 = vsel %vm784, %v1513, 0.0
      %1534 = vadd.xlane.f32.xlu0 %v1533
      %v1535 = vpop.xlane.xlu0 %1534
      %v1536 = vsel %vm784, %v1515, 0.0
      %1537 = vadd.xlane.f32.xlu0 %v1536
      %v1538 = vpop.xlane.xlu0 %1537
      %v1539 = vsel %vm784, %v1517, 0.0
      %1540 = vadd.xlane.f32.xlu0 %v1539
      %v1541 = vpop.xlane.xlu0 %1540
      %v1542 = vpack.c.bf16 %v1505, %v1503
      %v1543 = vpack.c.bf16 %v1509, %v1507
      %v1544 = vpack.c.bf16 %v1513, %v1511
      %v1545 = vpack.c.bf16 %v1517, %v1515
      %1547 = vrot.lane.b32.xlu0 %v777, 112
      %v1548 = vpop.permute.xlu0 %1547
      %v1551 = vsel %vm784, %v1542, 0
      %1553 = vmatprep.subr.bf16.mxu0 0
      %1554 = vmatpush1.bf16.msra.mxu0 %v1548
      %1555 = vmatprep.subr.bf16.mxu0 0
      %1556 = vmatpush1.bf16.msra.mxu0 0
      %1557 = vmatprep.subr.bf16.mxu0 0
      %1558 = vmatpush1.bf16.msra.mxu0 0
      %1559 = vmatprep.subr.bf16.mxu0 0
      %1560 = vmatpush1.bf16.msra.mxu0 0
      %1561 = vmatprep.subr.bf16.mxu0 0
      %1562 = vmatpush1.bf16.msra.mxu0 0
      %1563 = vmatprep.subr.bf16.mxu0 0
      %1564 = vmatpush1.bf16.msra.mxu0 0
      %1565 = vmatprep.subr.bf16.mxu0 0
      %1566 = vmatpush1.bf16.msra.mxu0 0
      %1567 = vmatprep.subr.bf16.mxu0 0
      %1568 = vmatpush1.bf16.msra.mxu0 0
      %1569 = vmatprep.subr.bf16.mxu0 0
      %1570 = vmatpush1.bf16.msra.mxu0 0
      %1571 = vmatprep.subr.bf16.mxu0 0
      %1572 = vmatpush1.bf16.msra.mxu0 0
      %1573 = vmatprep.subr.bf16.mxu0 0
      %1574 = vmatpush1.bf16.msra.mxu0 0
      %1575 = vmatprep.subr.bf16.mxu0 0
      %1576 = vmatpush1.bf16.msra.mxu0 0
      %1577 = vmatprep.subr.bf16.mxu0 0
      %1578 = vmatpush1.bf16.msra.mxu0 0
      %1579 = vmatprep.subr.bf16.mxu0 0
      %1580 = vmatpush1.bf16.msra.mxu0 0
      %1581 = vmatprep.subr.bf16.mxu0 0
      %1582 = vmatpush1.bf16.msra.mxu0 0
      %1583 = vmatprep.subr.bf16.mxu0 0
      %1584 = vmatpush1.bf16.msra.mxu0 0
      %1585 = vmatprep.mubr.bf16.mxu0 0
      %1586 = vmatmul.mubr.bf16.gmra.mrb[0].mxu0 %v1551
      %v1587 = vpop.f32.mrb[0].mxu0
      %v1588 = vadd.f32 0.0, %v1587
      %v1589 = vpop.f32.mrb[0].mxu0
      %v1590 = vpop.f32.mrb[0].mxu0
      %v1591 = vadd.f32 0.0, %v1590
      %v1592 = vpop.f32.mrb[0].mxu0
      %1593 = vdwg.mxu0
      %1595 = vrot.lane.b32.xlu0 %v778, 112
      %v1596 = vpop.permute.xlu0 %1595
      %v1599 = vsel %vm784, %v1543, 0
      %1601 = vmatprep.subr.bf16.mxu0 0
      %1602 = vmatpush1.bf16.msra.mxu0 %v1596
      %1603 = vmatprep.subr.bf16.mxu0 0
      %1604 = vmatpush1.bf16.msra.mxu0 0
      %1605 = vmatprep.subr.bf16.mxu0 0
      %1606 = vmatpush1.bf16.msra.mxu0 0
      %1607 = vmatprep.subr.bf16.mxu0 0
      %1608 = vmatpush1.bf16.msra.mxu0 0
      %1609 = vmatprep.subr.bf16.mxu0 0
      %1610 = vmatpush1.bf16.msra.mxu0 0
      %1611 = vmatprep.subr.bf16.mxu0 0
      %1612 = vmatpush1.bf16.msra.mxu0 0
      %1613 = vmatprep.subr.bf16.mxu0 0
      %1614 = vmatpush1.bf16.msra.mxu0 0
      %1615 = vmatprep.subr.bf16.mxu0 0
      %1616 = vmatpush1.bf16.msra.mxu0 0
      %1617 = vmatprep.subr.bf16.mxu0 0
      %1618 = vmatpush1.bf16.msra.mxu0 0
      %1619 = vmatprep.subr.bf16.mxu0 0
      %1620 = vmatpush1.bf16.msra.mxu0 0
      %1621 = vmatprep.subr.bf16.mxu0 0
      %1622 = vmatpush1.bf16.msra.mxu0 0
      %1623 = vmatprep.subr.bf16.mxu0 0
      %1624 = vmatpush1.bf16.msra.mxu0 0
      %1625 = vmatprep.subr.bf16.mxu0 0
      %1626 = vmatpush1.bf16.msra.mxu0 0
      %1627 = vmatprep.subr.bf16.mxu0 0
      %1628 = vmatpush1.bf16.msra.mxu0 0
      %1629 = vmatprep.subr.bf16.mxu0 0
      %1630 = vmatpush1.bf16.msra.mxu0 0
      %1631 = vmatprep.subr.bf16.mxu0 0
      %1632 = vmatpush1.bf16.msra.mxu0 0
      %1633 = vmatprep.mubr.bf16.mxu0 0
      %1634 = vmatmul.mubr.bf16.gmra.mrb[0].mxu0 %v1599
      %v1635 = vpop.f32.mrb[0].mxu0
      %v1636 = vadd.f32 0.0, %v1635
      %v1637 = vpop.f32.mrb[0].mxu0
      %v1638 = vpop.f32.mrb[0].mxu0
      %v1639 = vadd.f32 0.0, %v1638
      %v1640 = vpop.f32.mrb[0].mxu0
      %1641 = vdwg.mxu0
      %1643 = vrot.lane.b32.xlu0 %v779, 112
      %v1644 = vpop.permute.xlu0 %1643
      %v1647 = vsel %vm784, %v1544, 0
      %1649 = vmatprep.subr.bf16.mxu0 0
      %1650 = vmatpush1.bf16.msra.mxu0 %v1644
      %1651 = vmatprep.subr.bf16.mxu0 0
      %1652 = vmatpush1.bf16.msra.mxu0 0
      %1653 = vmatprep.subr.bf16.mxu0 0
      %1654 = vmatpush1.bf16.msra.mxu0 0
      %1655 = vmatprep.subr.bf16.mxu0 0
      %1656 = vmatpush1.bf16.msra.mxu0 0
      %1657 = vmatprep.subr.bf16.mxu0 0
      %1658 = vmatpush1.bf16.msra.mxu0 0
      %1659 = vmatprep.subr.bf16.mxu0 0
      %1660 = vmatpush1.bf16.msra.mxu0 0
      %1661 = vmatprep.subr.bf16.mxu0 0
      %1662 = vmatpush1.bf16.msra.mxu0 0
      %1663 = vmatprep.subr.bf16.mxu0 0
      %1664 = vmatpush1.bf16.msra.mxu0 0
      %1665 = vmatprep.subr.bf16.mxu0 0
      %1666 = vmatpush1.bf16.msra.mxu0 0
      %1667 = vmatprep.subr.bf16.mxu0 0
      %1668 = vmatpush1.bf16.msra.mxu0 0
      %1669 = vmatprep.subr.bf16.mxu0 0
      %1670 = vmatpush1.bf16.msra.mxu0 0
      %1671 = vmatprep.subr.bf16.mxu0 0
      %1672 = vmatpush1.bf16.msra.mxu0 0
      %1673 = vmatprep.subr.bf16.mxu0 0
      %1674 = vmatpush1.bf16.msra.mxu0 0
      %1675 = vmatprep.subr.bf16.mxu0 0
      %1676 = vmatpush1.bf16.msra.mxu0 0
      %1677 = vmatprep.subr.bf16.mxu0 0
      %1678 = vmatpush1.bf16.msra.mxu0 0
      %1679 = vmatprep.subr.bf16.mxu0 0
      %1680 = vmatpush1.bf16.msra.mxu0 0
      %1681 = vmatprep.mubr.bf16.mxu0 0
      %1682 = vmatmul.mubr.bf16.gmra.mrb[0].mxu0 %v1647
      %v1683 = vpop.f32.mrb[0].mxu0
      %v1684 = vadd.f32 0.0, %v1683
      %v1685 = vpop.f32.mrb[0].mxu0
      %v1686 = vpop.f32.mrb[0].mxu0
      %v1687 = vadd.f32 0.0, %v1686
      %v1688 = vpop.f32.mrb[0].mxu0
      %1689 = vdwg.mxu0
      %1691 = vrot.lane.b32.xlu0 %v780, 112
      %v1692 = vpop.permute.xlu0 %1691
      %v1695 = vsel %vm784, %v1545, 0
      %1697 = vmatprep.subr.bf16.mxu0 0
      %1698 = vmatpush1.bf16.msra.mxu0 %v1692
      %1699 = vmatprep.subr.bf16.mxu0 0
      %1700 = vmatpush1.bf16.msra.mxu0 0
      %1701 = vmatprep.subr.bf16.mxu0 0
      %1702 = vmatpush1.bf16.msra.mxu0 0
      %1703 = vmatprep.subr.bf16.mxu0 0
      %1704 = vmatpush1.bf16.msra.mxu0 0
      %1705 = vmatprep.subr.bf16.mxu0 0
      %1706 = vmatpush1.bf16.msra.mxu0 0
      %1707 = vmatprep.subr.bf16.mxu0 0
      %1708 = vmatpush1.bf16.msra.mxu0 0
      %1709 = vmatprep.subr.bf16.mxu0 0
      %1710 = vmatpush1.bf16.msra.mxu0 0
      %1711 = vmatprep.subr.bf16.mxu0 0
      %1712 = vmatpush1.bf16.msra.mxu0 0
      %1713 = vmatprep.subr.bf16.mxu0 0
      %1714 = vmatpush1.bf16.msra.mxu0 0
      %1715 = vmatprep.subr.bf16.mxu0 0
      %1716 = vmatpush1.bf16.msra.mxu0 0
      %1717 = vmatprep.subr.bf16.mxu0 0
      %1718 = vmatpush1.bf16.msra.mxu0 0
      %1719 = vmatprep.subr.bf16.mxu0 0
      %1720 = vmatpush1.bf16.msra.mxu0 0
      %1721 = vmatprep.subr.bf16.mxu0 0
      %1722 = vmatpush1.bf16.msra.mxu0 0
      %1723 = vmatprep.subr.bf16.mxu0 0
      %1724 = vmatpush1.bf16.msra.mxu0 0
      %1725 = vmatprep.subr.bf16.mxu0 0
      %1726 = vmatpush1.bf16.msra.mxu0 0
      %1727 = vmatprep.subr.bf16.mxu0 0
      %1728 = vmatpush1.bf16.msra.mxu0 0
      %1729 = vmatprep.mubr.bf16.mxu0 0
      %1730 = vmatmul.mubr.bf16.gmra.mrb[0].mxu0 %v1695
      %v1731 = vpop.f32.mrb[0].mxu0
      %v1732 = vadd.f32 0.0, %v1731
      %v1733 = vpop.f32.mrb[0].mxu0
      %v1734 = vpop.f32.mrb[0].mxu0
      %v1735 = vadd.f32 0.0, %v1734
      %v1736 = vpop.f32.mrb[0].mxu0
      %1737 = vdwg.mxu0
      %v1738 = vrcp.pop %v1520
      %v1739 = vmul.f32 1.0, %v1738
      %v1740 = vrcp.pop %v1523
      %v1741 = vmul.f32 1.0, %v1740
      %v1742 = vrcp.pop %v1526
      %v1743 = vmul.f32 1.0, %v1742
      %v1744 = vrcp.pop %v1529
      %v1745 = vmul.f32 1.0, %v1744
      %v1746 = vrcp.pop %v1532
      %v1747 = vmul.f32 1.0, %v1746
      %v1748 = vrcp.pop %v1535
      %v1749 = vmul.f32 1.0, %v1748
      %v1750 = vrcp.pop %v1538
      %v1751 = vmul.f32 1.0, %v1750
      %v1752 = vrcp.pop %v1541
      %v1753 = vmul.f32 1.0, %v1752
      %v1754 = vmul.f32 %v1588, %v1739
      %v1755 = vmul.f32 %v1591, %v1741
      %v1756 = vmul.f32 %v1636, %v1743
      %v1757 = vmul.f32 %v1639, %v1745
      %v1758 = vmul.f32 %v1684, %v1747
      %v1759 = vmul.f32 %v1687, %v1749
      %v1760 = vmul.f32 %v1732, %v1751
      %v1761 = vmul.f32 %v1735, %v1753
      %1770 = vrot.lane.b32.xlu0 %v1754, 16
      %v1771 = vpop.permute.xlu0 %1770
      %1772 = vrot.lane.b32.xlu0 %v1755, 16
      %v1773 = vpop.permute.xlu0 %1772
      %1774 = vrot.lane.b32.xlu0 %v1756, 16
      %v1775 = vpop.permute.xlu0 %1774
      %1776 = vrot.lane.b32.xlu0 %v1757, 16
      %v1777 = vpop.permute.xlu0 %1776
      %1778 = vrot.lane.b32.xlu0 %v1758, 16
      %v1779 = vpop.permute.xlu0 %1778
      %1780 = vrot.lane.b32.xlu0 %v1759, 16
      %v1781 = vpop.permute.xlu0 %1780
      %1782 = vrot.lane.b32.xlu0 %v1760, 16
      %v1783 = vpop.permute.xlu0 %1782
      %1784 = vrot.lane.b32.xlu0 %v1761, 16
      %v1785 = vpop.permute.xlu0 %1784
      %vm1794 = vcmask 261248
      %1795 = vst.msk [vmem:[#allocation2] sm:$0xff] %vm1794, %v1771
      %1796 = vst.msk [vmem:[#allocation2 + $0x8] sm:$0xff] %vm1794, %v1773
      %1797 = vst.msk [vmem:[#allocation2 + $0x10] sm:$0xff] %vm1794, %v1775
      %1798 = vst.msk [vmem:[#allocation2 + $0x18] sm:$0xff] %vm1794, %v1777
      %1799 = vst.msk [vmem:[#allocation2 + $0x20] sm:$0xff] %vm1794, %v1779
      %1800 = vst.msk [vmem:[#allocation2 + $0x28] sm:$0xff] %vm1794, %v1781
      %1801 = vst.msk [vmem:[#allocation2 + $0x30] sm:$0xff] %vm1794, %v1783
      %1802 = vst.msk [vmem:[#allocation2 + $0x38] sm:$0xff] %vm1794, %v1785
      %1803 = vrot.lane.b32.xlu0 %v773, 96
      %v1804 = vpop.permute.xlu0 %1803
      %1805 = vrot.lane.b32.xlu0 %v773, 32
      %v1806 = vpop.permute.xlu0 %1805
      %v1808 = vsel %vm784, %v1804, 0
      %v1811 = vsel %vm784, %v1806, 0
      %1813 = vmatprep.subr.bf16.mxu0 0
      %1814 = vmatpush1.bf16.xpose.msra.mxu0 %v1811
      %1815 = vmatprep.subr.bf16.mxu0 0
      %1816 = vmatpush1.bf16.xpose.msra.mxu0 0
      %1817 = vmatprep.subr.bf16.mxu0 0
      %1818 = vmatpush1.bf16.xpose.msra.mxu0 0
      %1819 = vmatprep.subr.bf16.mxu0 0
      %1820 = vmatpush1.bf16.xpose.msra.mxu0 0
      %1821 = vmatprep.subr.bf16.mxu0 0
      %1822 = vmatpush1.bf16.xpose.msra.mxu0 0
      %1823 = vmatprep.subr.bf16.mxu0 0
      %1824 = vmatpush1.bf16.xpose.msra.mxu0 0
      %1825 = vmatprep.subr.bf16.mxu0 0
      %1826 = vmatpush1.bf16.xpose.msra.mxu0 0
      %1827 = vmatprep.subr.bf16.mxu0 0
      %1828 = vmatpush1.bf16.xpose.msra.mxu0 0
      %1829 = vmatprep.subr.bf16.mxu0 0
      %1830 = vmatpush1.bf16.xpose.msra.mxu0 0
      %1831 = vmatprep.subr.bf16.mxu0 0
      %1832 = vmatpush1.bf16.xpose.msra.mxu0 0
      %1833 = vmatprep.subr.bf16.mxu0 0
      %1834 = vmatpush1.bf16.xpose.msra.mxu0 0
      %1835 = vmatprep.subr.bf16.mxu0 0
      %1836 = vmatpush1.bf16.xpose.msra.mxu0 0
      %1837 = vmatprep.subr.bf16.mxu0 0
      %1838 = vmatpush1.bf16.xpose.msra.mxu0 0
      %1839 = vmatprep.subr.bf16.mxu0 0
      %1840 = vmatpush1.bf16.xpose.msra.mxu0 0
      %1841 = vmatprep.subr.bf16.mxu0 0
      %1842 = vmatpush1.bf16.xpose.msra.mxu0 0
      %1843 = vmatprep.subr.bf16.mxu0 0
      %1844 = vmatpush1.bf16.xpose.msra.mxu0 0
      %1845 = vmatprep.mubr.bf16.mxu0 0
      %1846 = vmatmul.mubr.bf16.gmra.mrb[0].mxu0 %v1808
      %v1847 = vpop.f32.mrb[0].mxu0
      %v1848 = vadd.f32 %v769, %v1847
      %v1849 = vpop.f32.mrb[0].mxu0
      %v1850 = vpop.f32.mrb[0].mxu0
      %v1851 = vadd.f32 %v770, %v1850
      %v1852 = vpop.f32.mrb[0].mxu0
      %1853 = vdwg.mxu0
      %1854 = vrot.lane.b32.xlu0 %v774, 96
      %v1855 = vpop.permute.xlu0 %1854
      %1856 = vrot.lane.b32.xlu0 %v774, 32
      %v1857 = vpop.permute.xlu0 %1856
      %v1859 = vsel %vm784, %v1855, 0
      %v1862 = vsel %vm784, %v1857, 0
      %1864 = vmatprep.subr.bf16.mxu0 0
      %1865 = vmatpush1.bf16.xpose.msra.mxu0 %v1862
      %1866 = vmatprep.subr.bf16.mxu0 0
      %1867 = vmatpush1.bf16.xpose.msra.mxu0 0
      %1868 = vmatprep.subr.bf16.mxu0 0
      %1869 = vmatpush1.bf16.xpose.msra.mxu0 0
      %1870 = vmatprep.subr.bf16.mxu0 0
      %1871 = vmatpush1.bf16.xpose.msra.mxu0 0
      %1872 = vmatprep.subr.bf16.mxu0 0
      %1873 = vmatpush1.bf16.xpose.msra.mxu0 0
      %1874 = vmatprep.subr.bf16.mxu0 0
      %1875 = vmatpush1.bf16.xpose.msra.mxu0 0
      %1876 = vmatprep.subr.bf16.mxu0 0
      %1877 = vmatpush1.bf16.xpose.msra.mxu0 0
      %1878 = vmatprep.subr.bf16.mxu0 0
      %1879 = vmatpush1.bf16.xpose.msra.mxu0 0
      %1880 = vmatprep.subr.bf16.mxu0 0
      %1881 = vmatpush1.bf16.xpose.msra.mxu0 0
      %1882 = vmatprep.subr.bf16.mxu0 0
      %1883 = vmatpush1.bf16.xpose.msra.mxu0 0
      %1884 = vmatprep.subr.bf16.mxu0 0
      %1885 = vmatpush1.bf16.xpose.msra.mxu0 0
      %1886 = vmatprep.subr.bf16.mxu0 0
      %1887 = vmatpush1.bf16.xpose.msra.mxu0 0
      %1888 = vmatprep.subr.bf16.mxu0 0
      %1889 = vmatpush1.bf16.xpose.msra.mxu0 0
      %1890 = vmatprep.subr.bf16.mxu0 0
      %1891 = vmatpush1.bf16.xpose.msra.mxu0 0
      %1892 = vmatprep.subr.bf16.mxu0 0
      %1893 = vmatpush1.bf16.xpose.msra.mxu0 0
      %1894 = vmatprep.subr.bf16.mxu0 0
      %1895 = vmatpush1.bf16.xpose.msra.mxu0 0
      %1896 = vmatprep.mubr.bf16.mxu0 0
      %1897 = vmatmul.mubr.bf16.gmra.mrb[0].mxu0 %v1859
      %v1898 = vpop.f32.mrb[0].mxu0
      %v1899 = vadd.f32 %v769, %v1898
      %v1900 = vpop.f32.mrb[0].mxu0
      %v1901 = vpop.f32.mrb[0].mxu0
      %v1902 = vadd.f32 %v770, %v1901
      %v1903 = vpop.f32.mrb[0].mxu0
      %1904 = vdwg.mxu0
      %1905 = vrot.lane.b32.xlu0 %v775, 96
      %v1906 = vpop.permute.xlu0 %1905
      %1907 = vrot.lane.b32.xlu0 %v775, 32
      %v1908 = vpop.permute.xlu0 %1907
      %v1910 = vsel %vm784, %v1906, 0
      %v1913 = vsel %vm784, %v1908, 0
      %1915 = vmatprep.subr.bf16.mxu0 0
      %1916 = vmatpush1.bf16.xpose.msra.mxu0 %v1913
      %1917 = vmatprep.subr.bf16.mxu0 0
      %1918 = vmatpush1.bf16.xpose.msra.mxu0 0
      %1919 = vmatprep.subr.bf16.mxu0 0
      %1920 = vmatpush1.bf16.xpose.msra.mxu0 0
      %1921 = vmatprep.subr.bf16.mxu0 0
      %1922 = vmatpush1.bf16.xpose.msra.mxu0 0
      %1923 = vmatprep.subr.bf16.mxu0 0
      %1924 = vmatpush1.bf16.xpose.msra.mxu0 0
      %1925 = vmatprep.subr.bf16.mxu0 0
      %1926 = vmatpush1.bf16.xpose.msra.mxu0 0
      %1927 = vmatprep.subr.bf16.mxu0 0
      %1928 = vmatpush1.bf16.xpose.msra.mxu0 0
      %1929 = vmatprep.subr.bf16.mxu0 0
      %1930 = vmatpush1.bf16.xpose.msra.mxu0 0
      %1931 = vmatprep.subr.bf16.mxu0 0
      %1932 = vmatpush1.bf16.xpose.msra.mxu0 0
      %1933 = vmatprep.subr.bf16.mxu0 0
      %1934 = vmatpush1.bf16.xpose.msra.mxu0 0
      %1935 = vmatprep.subr.bf16.mxu0 0
      %1936 = vmatpush1.bf16.xpose.msra.mxu0 0
      %1937 = vmatprep.subr.bf16.mxu0 0
      %1938 = vmatpush1.bf16.xpose.msra.mxu0 0
      %1939 = vmatprep.subr.bf16.mxu0 0
      %1940 = vmatpush1.bf16.xpose.msra.mxu0 0
      %1941 = vmatprep.subr.bf16.mxu0 0
      %1942 = vmatpush1.bf16.xpose.msra.mxu0 0
      %1943 = vmatprep.subr.bf16.mxu0 0
      %1944 = vmatpush1.bf16.xpose.msra.mxu0 0
      %1945 = vmatprep.subr.bf16.mxu0 0
      %1946 = vmatpush1.bf16.xpose.msra.mxu0 0
      %1947 = vmatprep.mubr.bf16.mxu0 0
      %1948 = vmatmul.mubr.bf16.gmra.mrb[0].mxu0 %v1910
      %v1949 = vpop.f32.mrb[0].mxu0
      %v1950 = vadd.f32 %v769, %v1949
      %v1951 = vpop.f32.mrb[0].mxu0
      %v1952 = vpop.f32.mrb[0].mxu0
      %v1953 = vadd.f32 %v770, %v1952
      %v1954 = vpop.f32.mrb[0].mxu0
      %1955 = vdwg.mxu0
      %1956 = vrot.lane.b32.xlu0 %v776, 96
      %v1957 = vpop.permute.xlu0 %1956
      %1958 = vrot.lane.b32.xlu0 %v776, 32
      %v1959 = vpop.permute.xlu0 %1958
      %v1961 = vsel %vm784, %v1957, 0
      %v1964 = vsel %vm784, %v1959, 0
      %1966 = vmatprep.subr.bf16.mxu0 0
      %1967 = vmatpush1.bf16.xpose.msra.mxu0 %v1964
      %1968 = vmatprep.subr.bf16.mxu0 0
      %1969 = vmatpush1.bf16.xpose.msra.mxu0 0
      %1970 = vmatprep.subr.bf16.mxu0 0
      %1971 = vmatpush1.bf16.xpose.msra.mxu0 0
      %1972 = vmatprep.subr.bf16.mxu0 0
      %1973 = vmatpush1.bf16.xpose.msra.mxu0 0
      %1974 = vmatprep.subr.bf16.mxu0 0
      %1975 = vmatpush1.bf16.xpose.msra.mxu0 0
      %1976 = vmatprep.subr.bf16.mxu0 0
      %1977 = vmatpush1.bf16.xpose.msra.mxu0 0
      %1978 = vmatprep.subr.bf16.mxu0 0
      %1979 = vmatpush1.bf16.xpose.msra.mxu0 0
      %1980 = vmatprep.subr.bf16.mxu0 0
      %1981 = vmatpush1.bf16.xpose.msra.mxu0 0
      %1982 = vmatprep.subr.bf16.mxu0 0
      %1983 = vmatpush1.bf16.xpose.msra.mxu0 0
      %1984 = vmatprep.subr.bf16.mxu0 0
      %1985 = vmatpush1.bf16.xpose.msra.mxu0 0
      %1986 = vmatprep.subr.bf16.mxu0 0
      %1987 = vmatpush1.bf16.xpose.msra.mxu0 0
      %1988 = vmatprep.subr.bf16.mxu0 0
      %1989 = vmatpush1.bf16.xpose.msra.mxu0 0
      %1990 = vmatprep.subr.bf16.mxu0 0
      %1991 = vmatpush1.bf16.xpose.msra.mxu0 0
      %1992 = vmatprep.subr.bf16.mxu0 0
      %1993 = vmatpush1.bf16.xpose.msra.mxu0 0
      %1994 = vmatprep.subr.bf16.mxu0 0
      %1995 = vmatpush1.bf16.xpose.msra.mxu0 0
      %1996 = vmatprep.subr.bf16.mxu0 0
      %1997 = vmatpush1.bf16.xpose.msra.mxu0 0
      %1998 = vmatprep.mubr.bf16.mxu0 0
      %1999 = vmatmul.mubr.bf16.gmra.mrb[0].mxu0 %v1961
      %v2000 = vpop.f32.mrb[0].mxu0
      %v2001 = vadd.f32 %v769, %v2000
      %v2002 = vpop.f32.mrb[0].mxu0
      %v2003 = vpop.f32.mrb[0].mxu0
      %v2004 = vadd.f32 %v770, %v2003
      %v2005 = vpop.f32.mrb[0].mxu0
      %2006 = vdwg.mxu0
      %v2007 = vsel %vm784, %v1848, -inf
      %2008 = vmax.xlane.f32.xlu0 %v2007
      %v2009 = vpop.xlane.xlu0 %2008
      %v2010 = vsel %vm784, %v1851, -inf
      %2011 = vmax.xlane.f32.xlu0 %v2010
      %v2012 = vpop.xlane.xlu0 %2011
      %v2013 = vsel %vm784, %v1899, -inf
      %2014 = vmax.xlane.f32.xlu0 %v2013
      %v2015 = vpop.xlane.xlu0 %2014
      %v2016 = vsel %vm784, %v1902, -inf
      %2017 = vmax.xlane.f32.xlu0 %v2016
      %v2018 = vpop.xlane.xlu0 %2017
      %v2019 = vsel %vm784, %v1950, -inf
      %2020 = vmax.xlane.f32.xlu0 %v2019
      %v2021 = vpop.xlane.xlu0 %2020
      %v2022 = vsel %vm784, %v1953, -inf
      %2023 = vmax.xlane.f32.xlu0 %v2022
      %v2024 = vpop.xlane.xlu0 %2023
      %v2025 = vsel %vm784, %v2001, -inf
      %2026 = vmax.xlane.f32.xlu0 %v2025
      %v2027 = vpop.xlane.xlu0 %2026
      %v2028 = vsel %vm784, %v2004, -inf
      %2029 = vmax.xlane.f32.xlu0 %v2028
      %v2030 = vpop.xlane.xlu0 %2029
      %v2031 = vsub.f32 %v1848, %v2009
      %v2032 = vsub.f32 %v1851, %v2012
      %v2033 = vsub.f32 %v1899, %v2015
      %v2034 = vsub.f32 %v1902, %v2018
      %v2035 = vsub.f32 %v1950, %v2021
      %v2036 = vsub.f32 %v1953, %v2024
      %v2037 = vsub.f32 %v2001, %v2027
      %v2038 = vsub.f32 %v2004, %v2030
      %v2039 = vmul.f32 %v2031, 1.442695
      %v2040 = vpow.pop %v2039
      %v2041 = vmul.f32 %v2032, 1.442695
      %v2042 = vpow.pop %v2041
      %v2043 = vmul.f32 %v2033, 1.442695
      %v2044 = vpow.pop %v2043
      %v2045 = vmul.f32 %v2034, 1.442695
      %v2046 = vpow.pop %v2045
      %v2047 = vmul.f32 %v2035, 1.442695
      %v2048 = vpow.pop %v2047
      %v2049 = vmul.f32 %v2036, 1.442695
      %v2050 = vpow.pop %v2049
      %v2051 = vmul.f32 %v2037, 1.442695
      %v2052 = vpow.pop %v2051
      %v2053 = vmul.f32 %v2038, 1.442695
      %v2054 = vpow.pop %v2053
      %v2055 = vsel %vm784, %v2040, 0.0
      %2056 = vadd.xlane.f32.xlu0 %v2055
      %v2057 = vpop.xlane.xlu0 %2056
      %v2058 = vsel %vm784, %v2042, 0.0
      %2059 = vadd.xlane.f32.xlu0 %v2058
      %v2060 = vpop.xlane.xlu0 %2059
      %v2061 = vsel %vm784, %v2044, 0.0
      %2062 = vadd.xlane.f32.xlu0 %v2061
      %v2063 = vpop.xlane.xlu0 %2062
      %v2064 = vsel %vm784, %v2046, 0.0
      %2065 = vadd.xlane.f32.xlu0 %v2064
      %v2066 = vpop.xlane.xlu0 %2065
      %v2067 = vsel %vm784, %v2048, 0.0
      %2068 = vadd.xlane.f32.xlu0 %v2067
      %v2069 = vpop.xlane.xlu0 %2068
      %v2070 = vsel %vm784, %v2050, 0.0
      %2071 = vadd.xlane.f32.xlu0 %v2070
      %v2072 = vpop.xlane.xlu0 %2071
      %v2073 = vsel %vm784, %v2052, 0.0
      %2074 = vadd.xlane.f32.xlu0 %v2073
      %v2075 = vpop.xlane.xlu0 %2074
      %v2076 = vsel %vm784, %v2054, 0.0
      %2077 = vadd.xlane.f32.xlu0 %v2076
      %v2078 = vpop.xlane.xlu0 %2077
      %v2079 = vpack.c.bf16 %v2042, %v2040
      %v2080 = vpack.c.bf16 %v2046, %v2044
      %v2081 = vpack.c.bf16 %v2050, %v2048
      %v2082 = vpack.c.bf16 %v2054, %v2052
      %2083 = vrot.lane.b32.xlu0 %v777, 96
      %v2084 = vpop.permute.xlu0 %2083
      %v2087 = vsel %vm784, %v2079, 0
      %2089 = vmatprep.subr.bf16.mxu0 0
      %2090 = vmatpush1.bf16.msra.mxu0 %v2084
      %2091 = vmatprep.subr.bf16.mxu0 0
      %2092 = vmatpush1.bf16.msra.mxu0 0
      %2093 = vmatprep.subr.bf16.mxu0 0
      %2094 = vmatpush1.bf16.msra.mxu0 0
      %2095 = vmatprep.subr.bf16.mxu0 0
      %2096 = vmatpush1.bf16.msra.mxu0 0
      %2097 = vmatprep.subr.bf16.mxu0 0
      %2098 = vmatpush1.bf16.msra.mxu0 0
      %2099 = vmatprep.subr.bf16.mxu0 0
      %2100 = vmatpush1.bf16.msra.mxu0 0
      %2101 = vmatprep.subr.bf16.mxu0 0
      %2102 = vmatpush1.bf16.msra.mxu0 0
      %2103 = vmatprep.subr.bf16.mxu0 0
      %2104 = vmatpush1.bf16.msra.mxu0 0
      %2105 = vmatprep.subr.bf16.mxu0 0
      %2106 = vmatpush1.bf16.msra.mxu0 0
      %2107 = vmatprep.subr.bf16.mxu0 0
      %2108 = vmatpush1.bf16.msra.mxu0 0
      %2109 = vmatprep.subr.bf16.mxu0 0
      %2110 = vmatpush1.bf16.msra.mxu0 0
      %2111 = vmatprep.subr.bf16.mxu0 0
      %2112 = vmatpush1.bf16.msra.mxu0 0
      %2113 = vmatprep.subr.bf16.mxu0 0
      %2114 = vmatpush1.bf16.msra.mxu0 0
      %2115 = vmatprep.subr.bf16.mxu0 0
      %2116 = vmatpush1.bf16.msra.mxu0 0
      %2117 = vmatprep.subr.bf16.mxu0 0
      %2118 = vmatpush1.bf16.msra.mxu0 0
      %2119 = vmatprep.subr.bf16.mxu0 0
      %2120 = vmatpush1.bf16.msra.mxu0 0
      %2121 = vmatprep.mubr.bf16.mxu0 0
      %2122 = vmatmul.mubr.bf16.gmra.mrb[0].mxu0 %v2087
      %v2123 = vpop.f32.mrb[0].mxu0
      %v2124 = vadd.f32 0.0, %v2123
      %v2125 = vpop.f32.mrb[0].mxu0
      %v2126 = vpop.f32.mrb[0].mxu0
      %v2127 = vadd.f32 0.0, %v2126
      %v2128 = vpop.f32.mrb[0].mxu0
      %2129 = vdwg.mxu0
      %2130 = vrot.lane.b32.xlu0 %v778, 96
      %v2131 = vpop.permute.xlu0 %2130
      %v2134 = vsel %vm784, %v2080, 0
      %2136 = vmatprep.subr.bf16.mxu0 0
      %2137 = vmatpush1.bf16.msra.mxu0 %v2131
      %2138 = vmatprep.subr.bf16.mxu0 0
      %2139 = vmatpush1.bf16.msra.mxu0 0
      %2140 = vmatprep.subr.bf16.mxu0 0
      %2141 = vmatpush1.bf16.msra.mxu0 0
      %2142 = vmatprep.subr.bf16.mxu0 0
      %2143 = vmatpush1.bf16.msra.mxu0 0
      %2144 = vmatprep.subr.bf16.mxu0 0
      %2145 = vmatpush1.bf16.msra.mxu0 0
      %2146 = vmatprep.subr.bf16.mxu0 0
      %2147 = vmatpush1.bf16.msra.mxu0 0
      %2148 = vmatprep.subr.bf16.mxu0 0
      %2149 = vmatpush1.bf16.msra.mxu0 0
      %2150 = vmatprep.subr.bf16.mxu0 0
      %2151 = vmatpush1.bf16.msra.mxu0 0
      %2152 = vmatprep.subr.bf16.mxu0 0
      %2153 = vmatpush1.bf16.msra.mxu0 0
      %2154 = vmatprep.subr.bf16.mxu0 0
      %2155 = vmatpush1.bf16.msra.mxu0 0
      %2156 = vmatprep.subr.bf16.mxu0 0
      %2157 = vmatpush1.bf16.msra.mxu0 0
      %2158 = vmatprep.subr.bf16.mxu0 0
      %2159 = vmatpush1.bf16.msra.mxu0 0
      %2160 = vmatprep.subr.bf16.mxu0 0
      %2161 = vmatpush1.bf16.msra.mxu0 0
      %2162 = vmatprep.subr.bf16.mxu0 0
      %2163 = vmatpush1.bf16.msra.mxu0 0
      %2164 = vmatprep.subr.bf16.mxu0 0
      %2165 = vmatpush1.bf16.msra.mxu0 0
      %2166 = vmatprep.subr.bf16.mxu0 0
      %2167 = vmatpush1.bf16.msra.mxu0 0
      %2168 = vmatprep.mubr.bf16.mxu0 0
      %2169 = vmatmul.mubr.bf16.gmra.mrb[0].mxu0 %v2134
      %v2170 = vpop.f32.mrb[0].mxu0
      %v2171 = vadd.f32 0.0, %v2170
      %v2172 = vpop.f32.mrb[0].mxu0
      %v2173 = vpop.f32.mrb[0].mxu0
      %v2174 = vadd.f32 0.0, %v2173
      %v2175 = vpop.f32.mrb[0].mxu0
      %2176 = vdwg.mxu0
      %2177 = vrot.lane.b32.xlu0 %v779, 96
      %v2178 = vpop.permute.xlu0 %2177
      %v2181 = vsel %vm784, %v2081, 0
      %2183 = vmatprep.subr.bf16.mxu0 0
      %2184 = vmatpush1.bf16.msra.mxu0 %v2178
      %2185 = vmatprep.subr.bf16.mxu0 0
      %2186 = vmatpush1.bf16.msra.mxu0 0
      %2187 = vmatprep.subr.bf16.mxu0 0
      %2188 = vmatpush1.bf16.msra.mxu0 0
      %2189 = vmatprep.subr.bf16.mxu0 0
      %2190 = vmatpush1.bf16.msra.mxu0 0
      %2191 = vmatprep.subr.bf16.mxu0 0
      %2192 = vmatpush1.bf16.msra.mxu0 0
      %2193 = vmatprep.subr.bf16.mxu0 0
      %2194 = vmatpush1.bf16.msra.mxu0 0
      %2195 = vmatprep.subr.bf16.mxu0 0
      %2196 = vmatpush1.bf16.msra.mxu0 0
      %2197 = vmatprep.subr.bf16.mxu0 0
      %2198 = vmatpush1.bf16.msra.mxu0 0
      %2199 = vmatprep.subr.bf16.mxu0 0
      %2200 = vmatpush1.bf16.msra.mxu0 0
      %2201 = vmatprep.subr.bf16.mxu0 0
      %2202 = vmatpush1.bf16.msra.mxu0 0
      %2203 = vmatprep.subr.bf16.mxu0 0
      %2204 = vmatpush1.bf16.msra.mxu0 0
      %2205 = vmatprep.subr.bf16.mxu0 0
      %2206 = vmatpush1.bf16.msra.mxu0 0
      %2207 = vmatprep.subr.bf16.mxu0 0
      %2208 = vmatpush1.bf16.msra.mxu0 0
      %2209 = vmatprep.subr.bf16.mxu0 0
      %2210 = vmatpush1.bf16.msra.mxu0 0
      %2211 = vmatprep.subr.bf16.mxu0 0
      %2212 = vmatpush1.bf16.msra.mxu0 0
      %2213 = vmatprep.subr.bf16.mxu0 0
      %2214 = vmatpush1.bf16.msra.mxu0 0
      %2215 = vmatprep.mubr.bf16.mxu0 0
      %2216 = vmatmul.mubr.bf16.gmra.mrb[0].mxu0 %v2181
      %v2217 = vpop.f32.mrb[0].mxu0
      %v2218 = vadd.f32 0.0, %v2217
      %v2219 = vpop.f32.mrb[0].mxu0
      %v2220 = vpop.f32.mrb[0].mxu0
      %v2221 = vadd.f32 0.0, %v2220
      %v2222 = vpop.f32.mrb[0].mxu0
      %2223 = vdwg.mxu0
      %2224 = vrot.lane.b32.xlu0 %v780, 96
      %v2225 = vpop.permute.xlu0 %2224
      %v2228 = vsel %vm784, %v2082, 0
      %2230 = vmatprep.subr.bf16.mxu0 0
      %2231 = vmatpush1.bf16.msra.mxu0 %v2225
      %2232 = vmatprep.subr.bf16.mxu0 0
      %2233 = vmatpush1.bf16.msra.mxu0 0
      %2234 = vmatprep.subr.bf16.mxu0 0
      %2235 = vmatpush1.bf16.msra.mxu0 0
      %2236 = vmatprep.subr.bf16.mxu0 0
      %2237 = vmatpush1.bf16.msra.mxu0 0
      %2238 = vmatprep.subr.bf16.mxu0 0
      %2239 = vmatpush1.bf16.msra.mxu0 0
      %2240 = vmatprep.subr.bf16.mxu0 0
      %2241 = vmatpush1.bf16.msra.mxu0 0
      %2242 = vmatprep.subr.bf16.mxu0 0
      %2243 = vmatpush1.bf16.msra.mxu0 0
      %2244 = vmatprep.subr.bf16.mxu0 0
      %2245 = vmatpush1.bf16.msra.mxu0 0
      %2246 = vmatprep.subr.bf16.mxu0 0
      %2247 = vmatpush1.bf16.msra.mxu0 0
      %2248 = vmatprep.subr.bf16.mxu0 0
      %2249 = vmatpush1.bf16.msra.mxu0 0
      %2250 = vmatprep.subr.bf16.mxu0 0
      %2251 = vmatpush1.bf16.msra.mxu0 0
      %2252 = vmatprep.subr.bf16.mxu0 0
      %2253 = vmatpush1.bf16.msra.mxu0 0
      %2254 = vmatprep.subr.bf16.mxu0 0
      %2255 = vmatpush1.bf16.msra.mxu0 0
      %2256 = vmatprep.subr.bf16.mxu0 0
      %2257 = vmatpush1.bf16.msra.mxu0 0
      %2258 = vmatprep.subr.bf16.mxu0 0
      %2259 = vmatpush1.bf16.msra.mxu0 0
      %2260 = vmatprep.subr.bf16.mxu0 0
      %2261 = vmatpush1.bf16.msra.mxu0 0
      %2262 = vmatprep.mubr.bf16.mxu0 0
      %2263 = vmatmul.mubr.bf16.gmra.mrb[0].mxu0 %v2228
      %v2264 = vpop.f32.mrb[0].mxu0
      %v2265 = vadd.f32 0.0, %v2264
      %v2266 = vpop.f32.mrb[0].mxu0
      %v2267 = vpop.f32.mrb[0].mxu0
      %v2268 = vadd.f32 0.0, %v2267
      %v2269 = vpop.f32.mrb[0].mxu0
      %2270 = vdwg.mxu0
      %v2271 = vrcp.pop %v2057
      %v2272 = vmul.f32 1.0, %v2271
      %v2273 = vrcp.pop %v2060
      %v2274 = vmul.f32 1.0, %v2273
      %v2275 = vrcp.pop %v2063
      %v2276 = vmul.f32 1.0, %v2275
      %v2277 = vrcp.pop %v2066
      %v2278 = vmul.f32 1.0, %v2277
      %v2279 = vrcp.pop %v2069
      %v2280 = vmul.f32 1.0, %v2279
      %v2281 = vrcp.pop %v2072
      %v2282 = vmul.f32 1.0, %v2281
      %v2283 = vrcp.pop %v2075
      %v2284 = vmul.f32 1.0, %v2283
      %v2285 = vrcp.pop %v2078
      %v2286 = vmul.f32 1.0, %v2285
      %v2287 = vmul.f32 %v2124, %v2272
      %v2288 = vmul.f32 %v2127, %v2274
      %v2289 = vmul.f32 %v2171, %v2276
      %v2290 = vmul.f32 %v2174, %v2278
      %v2291 = vmul.f32 %v2218, %v2280
      %v2292 = vmul.f32 %v2221, %v2282
      %v2293 = vmul.f32 %v2265, %v2284
      %v2294 = vmul.f32 %v2268, %v2286
      %2303 = vrot.lane.b32.xlu0 %v2287, 32
      %v2304 = vpop.permute.xlu0 %2303
      %2305 = vrot.lane.b32.xlu0 %v2288, 32
      %v2306 = vpop.permute.xlu0 %2305
      %2307 = vrot.lane.b32.xlu0 %v2289, 32
      %v2308 = vpop.permute.xlu0 %2307
      %2309 = vrot.lane.b32.xlu0 %v2290, 32
      %v2310 = vpop.permute.xlu0 %2309
      %2311 = vrot.lane.b32.xlu0 %v2291, 32
      %v2312 = vpop.permute.xlu0 %2311
      %2313 = vrot.lane.b32.xlu0 %v2292, 32
      %v2314 = vpop.permute.xlu0 %2313
      %2315 = vrot.lane.b32.xlu0 %v2293, 32
      %v2316 = vpop.permute.xlu0 %2315
      %2317 = vrot.lane.b32.xlu0 %v2294, 32
      %v2318 = vpop.permute.xlu0 %2317
      %vm2327 = vcmask 392448
      %2328 = vst.msk [vmem:[#allocation2] sm:$0xff] %vm2327, %v2304
      %2329 = vst.msk [vmem:[#allocation2 + $0x8] sm:$0xff] %vm2327, %v2306
      %2330 = vst.msk [vmem:[#allocation2 + $0x10] sm:$0xff] %vm2327, %v2308
      %2331 = vst.msk [vmem:[#allocation2 + $0x18] sm:$0xff] %vm2327, %v2310
      %2332 = vst.msk [vmem:[#allocation2 + $0x20] sm:$0xff] %vm2327, %v2312
      %2333 = vst.msk [vmem:[#allocation2 + $0x28] sm:$0xff] %vm2327, %v2314
      %2334 = vst.msk [vmem:[#allocation2 + $0x30] sm:$0xff] %vm2327, %v2316
      %2335 = vst.msk [vmem:[#allocation2 + $0x38] sm:$0xff] %vm2327, %v2318
      %2336 = vrot.lane.b32.xlu0 %v773, 80
      %v2337 = vpop.permute.xlu0 %2336
      %2338 = vrot.lane.b32.xlu0 %v773, 16
      %v2339 = vpop.permute.xlu0 %2338
      %v2341 = vsel %vm784, %v2337, 0
      %v2344 = vsel %vm784, %v2339, 0
      %2346 = vmatprep.subr.bf16.mxu0 0
      %2347 = vmatpush1.bf16.xpose.msra.mxu0 %v2344
      %2348 = vmatprep.subr.bf16.mxu0 0
      %2349 = vmatpush1.bf16.xpose.msra.mxu0 0
      %2350 = vmatprep.subr.bf16.mxu0 0
      %2351 = vmatpush1.bf16.xpose.msra.mxu0 0
      %2352 = vmatprep.subr.bf16.mxu0 0
      %2353 = vmatpush1.bf16.xpose.msra.mxu0 0
      %2354 = vmatprep.subr.bf16.mxu0 0
      %2355 = vmatpush1.bf16.xpose.msra.mxu0 0
      %2356 = vmatprep.subr.bf16.mxu0 0
      %2357 = vmatpush1.bf16.xpose.msra.mxu0 0
      %2358 = vmatprep.subr.bf16.mxu0 0
      %2359 = vmatpush1.bf16.xpose.msra.mxu0 0
      %2360 = vmatprep.subr.bf16.mxu0 0
      %2361 = vmatpush1.bf16.xpose.msra.mxu0 0
      %2362 = vmatprep.subr.bf16.mxu0 0
      %2363 = vmatpush1.bf16.xpose.msra.mxu0 0
      %2364 = vmatprep.subr.bf16.mxu0 0
      %2365 = vmatpush1.bf16.xpose.msra.mxu0 0
      %2366 = vmatprep.subr.bf16.mxu0 0
      %2367 = vmatpush1.bf16.xpose.msra.mxu0 0
      %2368 = vmatprep.subr.bf16.mxu0 0
      %2369 = vmatpush1.bf16.xpose.msra.mxu0 0
      %2370 = vmatprep.subr.bf16.mxu0 0
      %2371 = vmatpush1.bf16.xpose.msra.mxu0 0
      %2372 = vmatprep.subr.bf16.mxu0 0
      %2373 = vmatpush1.bf16.xpose.msra.mxu0 0
      %2374 = vmatprep.subr.bf16.mxu0 0
      %2375 = vmatpush1.bf16.xpose.msra.mxu0 0
      %2376 = vmatprep.subr.bf16.mxu0 0
      %2377 = vmatpush1.bf16.xpose.msra.mxu0 0
      %2378 = vmatprep.mubr.bf16.mxu0 0
      %2379 = vmatmul.mubr.bf16.gmra.mrb[0].mxu0 %v2341
      %v2380 = vpop.f32.mrb[0].mxu0
      %v2381 = vadd.f32 %v771, %v2380
      %v2382 = vpop.f32.mrb[0].mxu0
      %v2383 = vpop.f32.mrb[0].mxu0
      %v2384 = vadd.f32 %v772, %v2383
      %v2385 = vpop.f32.mrb[0].mxu0
      %2386 = vdwg.mxu0
      %2387 = vrot.lane.b32.xlu0 %v774, 80
      %v2388 = vpop.permute.xlu0 %2387
      %2389 = vrot.lane.b32.xlu0 %v774, 16
      %v2390 = vpop.permute.xlu0 %2389
      %v2392 = vsel %vm784, %v2388, 0
      %v2395 = vsel %vm784, %v2390, 0
      %2397 = vmatprep.subr.bf16.mxu0 0
      %2398 = vmatpush1.bf16.xpose.msra.mxu0 %v2395
      %2399 = vmatprep.subr.bf16.mxu0 0
      %2400 = vmatpush1.bf16.xpose.msra.mxu0 0
      %2401 = vmatprep.subr.bf16.mxu0 0
      %2402 = vmatpush1.bf16.xpose.msra.mxu0 0
      %2403 = vmatprep.subr.bf16.mxu0 0
      %2404 = vmatpush1.bf16.xpose.msra.mxu0 0
      %2405 = vmatprep.subr.bf16.mxu0 0
      %2406 = vmatpush1.bf16.xpose.msra.mxu0 0
      %2407 = vmatprep.subr.bf16.mxu0 0
      %2408 = vmatpush1.bf16.xpose.msra.mxu0 0
      %2409 = vmatprep.subr.bf16.mxu0 0
      %2410 = vmatpush1.bf16.xpose.msra.mxu0 0
      %2411 = vmatprep.subr.bf16.mxu0 0
      %2412 = vmatpush1.bf16.xpose.msra.mxu0 0
      %2413 = vmatprep.subr.bf16.mxu0 0
      %2414 = vmatpush1.bf16.xpose.msra.mxu0 0
      %2415 = vmatprep.subr.bf16.mxu0 0
      %2416 = vmatpush1.bf16.xpose.msra.mxu0 0
      %2417 = vmatprep.subr.bf16.mxu0 0
      %2418 = vmatpush1.bf16.xpose.msra.mxu0 0
      %2419 = vmatprep.subr.bf16.mxu0 0
      %2420 = vmatpush1.bf16.xpose.msra.mxu0 0
      %2421 = vmatprep.subr.bf16.mxu0 0
      %2422 = vmatpush1.bf16.xpose.msra.mxu0 0
      %2423 = vmatprep.subr.bf16.mxu0 0
      %2424 = vmatpush1.bf16.xpose.msra.mxu0 0
      %2425 = vmatprep.subr.bf16.mxu0 0
      %2426 = vmatpush1.bf16.xpose.msra.mxu0 0
      %2427 = vmatprep.subr.bf16.mxu0 0
      %2428 = vmatpush1.bf16.xpose.msra.mxu0 0
      %2429 = vmatprep.mubr.bf16.mxu0 0
      %2430 = vmatmul.mubr.bf16.gmra.mrb[0].mxu0 %v2392
      %v2431 = vpop.f32.mrb[0].mxu0
      %v2432 = vadd.f32 %v771, %v2431
      %v2433 = vpop.f32.mrb[0].mxu0
      %v2434 = vpop.f32.mrb[0].mxu0
      %v2435 = vadd.f32 %v772, %v2434
      %v2436 = vpop.f32.mrb[0].mxu0
      %2437 = vdwg.mxu0
      %2438 = vrot.lane.b32.xlu0 %v775, 80
      %v2439 = vpop.permute.xlu0 %2438
      %2440 = vrot.lane.b32.xlu0 %v775, 16
      %v2441 = vpop.permute.xlu0 %2440
      %v2443 = vsel %vm784, %v2439, 0
      %v2446 = vsel %vm784, %v2441, 0
      %2448 = vmatprep.subr.bf16.mxu0 0
      %2449 = vmatpush1.bf16.xpose.msra.mxu0 %v2446
      %2450 = vmatprep.subr.bf16.mxu0 0
      %2451 = vmatpush1.bf16.xpose.msra.mxu0 0
      %2452 = vmatprep.subr.bf16.mxu0 0
      %2453 = vmatpush1.bf16.xpose.msra.mxu0 0
      %2454 = vmatprep.subr.bf16.mxu0 0
      %2455 = vmatpush1.bf16.xpose.msra.mxu0 0
      %2456 = vmatprep.subr.bf16.mxu0 0
      %2457 = vmatpush1.bf16.xpose.msra.mxu0 0
      %2458 = vmatprep.subr.bf16.mxu0 0
      %2459 = vmatpush1.bf16.xpose.msra.mxu0 0
      %2460 = vmatprep.subr.bf16.mxu0 0
      %2461 = vmatpush1.bf16.xpose.msra.mxu0 0
      %2462 = vmatprep.subr.bf16.mxu0 0
      %2463 = vmatpush1.bf16.xpose.msra.mxu0 0
      %2464 = vmatprep.subr.bf16.mxu0 0
      %2465 = vmatpush1.bf16.xpose.msra.mxu0 0
      %2466 = vmatprep.subr.bf16.mxu0 0
      %2467 = vmatpush1.bf16.xpose.msra.mxu0 0
      %2468 = vmatprep.subr.bf16.mxu0 0
      %2469 = vmatpush1.bf16.xpose.msra.mxu0 0
      %2470 = vmatprep.subr.bf16.mxu0 0
      %2471 = vmatpush1.bf16.xpose.msra.mxu0 0
      %2472 = vmatprep.subr.bf16.mxu0 0
      %2473 = vmatpush1.bf16.xpose.msra.mxu0 0
      %2474 = vmatprep.subr.bf16.mxu0 0
      %2475 = vmatpush1.bf16.xpose.msra.mxu0 0
      %2476 = vmatprep.subr.bf16.mxu0 0
      %2477 = vmatpush1.bf16.xpose.msra.mxu0 0
      %2478 = vmatprep.subr.bf16.mxu0 0
      %2479 = vmatpush1.bf16.xpose.msra.mxu0 0
      %2480 = vmatprep.mubr.bf16.mxu0 0
      %2481 = vmatmul.mubr.bf16.gmra.mrb[0].mxu0 %v2443
      %v2482 = vpop.f32.mrb[0].mxu0
      %v2483 = vadd.f32 %v771, %v2482
      %v2484 = vpop.f32.mrb[0].mxu0
      %v2485 = vpop.f32.mrb[0].mxu0
      %v2486 = vadd.f32 %v772, %v2485
      %v2487 = vpop.f32.mrb[0].mxu0
      %2488 = vdwg.mxu0
      %2489 = vrot.lane.b32.xlu0 %v776, 80
      %v2490 = vpop.permute.xlu0 %2489
      %2491 = vrot.lane.b32.xlu0 %v776, 16
      %v2492 = vpop.permute.xlu0 %2491
      %v2494 = vsel %vm784, %v2490, 0
      %v2497 = vsel %vm784, %v2492, 0
      %2499 = vmatprep.subr.bf16.mxu0 0
      %2500 = vmatpush1.bf16.xpose.msra.mxu0 %v2497
      %2501 = vmatprep.subr.bf16.mxu0 0
      %2502 = vmatpush1.bf16.xpose.msra.mxu0 0
      %2503 = vmatprep.subr.bf16.mxu0 0
      %2504 = vmatpush1.bf16.xpose.msra.mxu0 0
      %2505 = vmatprep.subr.bf16.mxu0 0
      %2506 = vmatpush1.bf16.xpose.msra.mxu0 0
      %2507 = vmatprep.subr.bf16.mxu0 0
      %2508 = vmatpush1.bf16.xpose.msra.mxu0 0
      %2509 = vmatprep.subr.bf16.mxu0 0
      %2510 = vmatpush1.bf16.xpose.msra.mxu0 0
      %2511 = vmatprep.subr.bf16.mxu0 0
      %2512 = vmatpush1.bf16.xpose.msra.mxu0 0
      %2513 = vmatprep.subr.bf16.mxu0 0
      %2514 = vmatpush1.bf16.xpose.msra.mxu0 0
      %2515 = vmatprep.subr.bf16.mxu0 0
      %2516 = vmatpush1.bf16.xpose.msra.mxu0 0
      %2517 = vmatprep.subr.bf16.mxu0 0
      %2518 = vmatpush1.bf16.xpose.msra.mxu0 0
      %2519 = vmatprep.subr.bf16.mxu0 0
      %2520 = vmatpush1.bf16.xpose.msra.mxu0 0
      %2521 = vmatprep.subr.bf16.mxu0 0
      %2522 = vmatpush1.bf16.xpose.msra.mxu0 0
      %2523 = vmatprep.subr.bf16.mxu0 0
      %2524 = vmatpush1.bf16.xpose.msra.mxu0 0
      %2525 = vmatprep.subr.bf16.mxu0 0
      %2526 = vmatpush1.bf16.xpose.msra.mxu0 0
      %2527 = vmatprep.subr.bf16.mxu0 0
      %2528 = vmatpush1.bf16.xpose.msra.mxu0 0
      %2529 = vmatprep.subr.bf16.mxu0 0
      %2530 = vmatpush1.bf16.xpose.msra.mxu0 0
      %2531 = vmatprep.mubr.bf16.mxu0 0
      %2532 = vmatmul.mubr.bf16.gmra.mrb[0].mxu0 %v2494
      %v2533 = vpop.f32.mrb[0].mxu0
      %v2534 = vadd.f32 %v771, %v2533
      %v2535 = vpop.f32.mrb[0].mxu0
      %v2536 = vpop.f32.mrb[0].mxu0
      %v2537 = vadd.f32 %v772, %v2536
      %v2538 = vpop.f32.mrb[0].mxu0
      %2539 = vdwg.mxu0
      %v2540 = vsel %vm784, %v2381, -inf
      %2541 = vmax.xlane.f32.xlu0 %v2540
      %v2542 = vpop.xlane.xlu0 %2541
      %v2543 = vsel %vm784, %v2384, -inf
      %2544 = vmax.xlane.f32.xlu0 %v2543
      %v2545 = vpop.xlane.xlu0 %2544
      %v2546 = vsel %vm784, %v2432, -inf
      %2547 = vmax.xlane.f32.xlu0 %v2546
      %v2548 = vpop.xlane.xlu0 %2547
      %v2549 = vsel %vm784, %v2435, -inf
      %2550 = vmax.xlane.f32.xlu0 %v2549
      %v2551 = vpop.xlane.xlu0 %2550
      %v2552 = vsel %vm784, %v2483, -inf
      %2553 = vmax.xlane.f32.xlu0 %v2552
      %v2554 = vpop.xlane.xlu0 %2553
      %v2555 = vsel %vm784, %v2486, -inf
      %2556 = vmax.xlane.f32.xlu0 %v2555
      %v2557 = vpop.xlane.xlu0 %2556
      %v2558 = vsel %vm784, %v2534, -inf
      %2559 = vmax.xlane.f32.xlu0 %v2558
      %v2560 = vpop.xlane.xlu0 %2559
      %v2561 = vsel %vm784, %v2537, -inf
      %2562 = vmax.xlane.f32.xlu0 %v2561
      %v2563 = vpop.xlane.xlu0 %2562
      %v2564 = vsub.f32 %v2381, %v2542
      %v2565 = vsub.f32 %v2384, %v2545
      %v2566 = vsub.f32 %v2432, %v2548
      %v2567 = vsub.f32 %v2435, %v2551
      %v2568 = vsub.f32 %v2483, %v2554
      %v2569 = vsub.f32 %v2486, %v2557
      %v2570 = vsub.f32 %v2534, %v2560
      %v2571 = vsub.f32 %v2537, %v2563
      %v2572 = vmul.f32 %v2564, 1.442695
      %v2573 = vpow.pop %v2572
      %v2574 = vmul.f32 %v2565, 1.442695
      %v2575 = vpow.pop %v2574
      %v2576 = vmul.f32 %v2566, 1.442695
      %v2577 = vpow.pop %v2576
      %v2578 = vmul.f32 %v2567, 1.442695
      %v2579 = vpow.pop %v2578
      %v2580 = vmul.f32 %v2568, 1.442695
      %v2581 = vpow.pop %v2580
      %v2582 = vmul.f32 %v2569, 1.442695
      %v2583 = vpow.pop %v2582
      %v2584 = vmul.f32 %v2570, 1.442695
      %v2585 = vpow.pop %v2584
      %v2586 = vmul.f32 %v2571, 1.442695
      %v2587 = vpow.pop %v2586
      %v2588 = vsel %vm784, %v2573, 0.0
      %2589 = vadd.xlane.f32.xlu0 %v2588
      %v2590 = vpop.xlane.xlu0 %2589
      %v2591 = vsel %vm784, %v2575, 0.0
      %2592 = vadd.xlane.f32.xlu0 %v2591
      %v2593 = vpop.xlane.xlu0 %2592
      %v2594 = vsel %vm784, %v2577, 0.0
      %2595 = vadd.xlane.f32.xlu0 %v2594
      %v2596 = vpop.xlane.xlu0 %2595
      %v2597 = vsel %vm784, %v2579, 0.0
      %2598 = vadd.xlane.f32.xlu0 %v2597
      %v2599 = vpop.xlane.xlu0 %2598
      %v2600 = vsel %vm784, %v2581, 0.0
      %2601 = vadd.xlane.f32.xlu0 %v2600
      %v2602 = vpop.xlane.xlu0 %2601
      %v2603 = vsel %vm784, %v2583, 0.0
      %2604 = vadd.xlane.f32.xlu0 %v2603
      %v2605 = vpop.xlane.xlu0 %2604
      %v2606 = vsel %vm784, %v2585, 0.0
      %2607 = vadd.xlane.f32.xlu0 %v2606
      %v2608 = vpop.xlane.xlu0 %2607
      %v2609 = vsel %vm784, %v2587, 0.0
      %2610 = vadd.xlane.f32.xlu0 %v2609
      %v2611 = vpop.xlane.xlu0 %2610
      %v2612 = vpack.c.bf16 %v2575, %v2573
      %v2613 = vpack.c.bf16 %v2579, %v2577
      %v2614 = vpack.c.bf16 %v2583, %v2581
      %v2615 = vpack.c.bf16 %v2587, %v2585
      %2616 = vrot.lane.b32.xlu0 %v777, 80
      %v2617 = vpop.permute.xlu0 %2616
      %v2620 = vsel %vm784, %v2612, 0
      %2622 = vmatprep.subr.bf16.mxu0 0
      %2623 = vmatpush1.bf16.msra.mxu0 %v2617
      %2624 = vmatprep.subr.bf16.mxu0 0
      %2625 = vmatpush1.bf16.msra.mxu0 0
      %2626 = vmatprep.subr.bf16.mxu0 0
      %2627 = vmatpush1.bf16.msra.mxu0 0
      %2628 = vmatprep.subr.bf16.mxu0 0
      %2629 = vmatpush1.bf16.msra.mxu0 0
      %2630 = vmatprep.subr.bf16.mxu0 0
      %2631 = vmatpush1.bf16.msra.mxu0 0
      %2632 = vmatprep.subr.bf16.mxu0 0
      %2633 = vmatpush1.bf16.msra.mxu0 0
      %2634 = vmatprep.subr.bf16.mxu0 0
      %2635 = vmatpush1.bf16.msra.mxu0 0
      %2636 = vmatprep.subr.bf16.mxu0 0
      %2637 = vmatpush1.bf16.msra.mxu0 0
      %2638 = vmatprep.subr.bf16.mxu0 0
      %2639 = vmatpush1.bf16.msra.mxu0 0
      %2640 = vmatprep.subr.bf16.mxu0 0
      %2641 = vmatpush1.bf16.msra.mxu0 0
      %2642 = vmatprep.subr.bf16.mxu0 0
      %2643 = vmatpush1.bf16.msra.mxu0 0
      %2644 = vmatprep.subr.bf16.mxu0 0
      %2645 = vmatpush1.bf16.msra.mxu0 0
      %2646 = vmatprep.subr.bf16.mxu0 0
      %2647 = vmatpush1.bf16.msra.mxu0 0
      %2648 = vmatprep.subr.bf16.mxu0 0
      %2649 = vmatpush1.bf16.msra.mxu0 0
      %2650 = vmatprep.subr.bf16.mxu0 0
      %2651 = vmatpush1.bf16.msra.mxu0 0
      %2652 = vmatprep.subr.bf16.mxu0 0
      %2653 = vmatpush1.bf16.msra.mxu0 0
      %2654 = vmatprep.mubr.bf16.mxu0 0
      %2655 = vmatmul.mubr.bf16.gmra.mrb[0].mxu0 %v2620
      %v2656 = vpop.f32.mrb[0].mxu0
      %v2657 = vadd.f32 0.0, %v2656
      %v2658 = vpop.f32.mrb[0].mxu0
      %v2659 = vpop.f32.mrb[0].mxu0
      %v2660 = vadd.f32 0.0, %v2659
      %v2661 = vpop.f32.mrb[0].mxu0
      %2662 = vdwg.mxu0
      %2663 = vrot.lane.b32.xlu0 %v778, 80
      %v2664 = vpop.permute.xlu0 %2663
      %v2667 = vsel %vm784, %v2613, 0
      %2669 = vmatprep.subr.bf16.mxu0 0
      %2670 = vmatpush1.bf16.msra.mxu0 %v2664
      %2671 = vmatprep.subr.bf16.mxu0 0
      %2672 = vmatpush1.bf16.msra.mxu0 0
      %2673 = vmatprep.subr.bf16.mxu0 0
      %2674 = vmatpush1.bf16.msra.mxu0 0
      %2675 = vmatprep.subr.bf16.mxu0 0
      %2676 = vmatpush1.bf16.msra.mxu0 0
      %2677 = vmatprep.subr.bf16.mxu0 0
      %2678 = vmatpush1.bf16.msra.mxu0 0
      %2679 = vmatprep.subr.bf16.mxu0 0
      %2680 = vmatpush1.bf16.msra.mxu0 0
      %2681 = vmatprep.subr.bf16.mxu0 0
      %2682 = vmatpush1.bf16.msra.mxu0 0
      %2683 = vmatprep.subr.bf16.mxu0 0
      %2684 = vmatpush1.bf16.msra.mxu0 0
      %2685 = vmatprep.subr.bf16.mxu0 0
      %2686 = vmatpush1.bf16.msra.mxu0 0
      %2687 = vmatprep.subr.bf16.mxu0 0
      %2688 = vmatpush1.bf16.msra.mxu0 0
      %2689 = vmatprep.subr.bf16.mxu0 0
      %2690 = vmatpush1.bf16.msra.mxu0 0
      %2691 = vmatprep.subr.bf16.mxu0 0
      %2692 = vmatpush1.bf16.msra.mxu0 0
      %2693 = vmatprep.subr.bf16.mxu0 0
      %2694 = vmatpush1.bf16.msra.mxu0 0
      %2695 = vmatprep.subr.bf16.mxu0 0
      %2696 = vmatpush1.bf16.msra.mxu0 0
      %2697 = vmatprep.subr.bf16.mxu0 0
      %2698 = vmatpush1.bf16.msra.mxu0 0
      %2699 = vmatprep.subr.bf16.mxu0 0
      %2700 = vmatpush1.bf16.msra.mxu0 0
      %2701 = vmatprep.mubr.bf16.mxu0 0
      %2702 = vmatmul.mubr.bf16.gmra.mrb[0].mxu0 %v2667
      %v2703 = vpop.f32.mrb[0].mxu0
      %v2704 = vadd.f32 0.0, %v2703
      %v2705 = vpop.f32.mrb[0].mxu0
      %v2706 = vpop.f32.mrb[0].mxu0
      %v2707 = vadd.f32 0.0, %v2706
      %v2708 = vpop.f32.mrb[0].mxu0
      %2709 = vdwg.mxu0
      %2710 = vrot.lane.b32.xlu0 %v779, 80
      %v2711 = vpop.permute.xlu0 %2710
      %v2714 = vsel %vm784, %v2614, 0
      %2716 = vmatprep.subr.bf16.mxu0 0
      %2717 = vmatpush1.bf16.msra.mxu0 %v2711
      %2718 = vmatprep.subr.bf16.mxu0 0
      %2719 = vmatpush1.bf16.msra.mxu0 0
      %2720 = vmatprep.subr.bf16.mxu0 0
      %2721 = vmatpush1.bf16.msra.mxu0 0
      %2722 = vmatprep.subr.bf16.mxu0 0
      %2723 = vmatpush1.bf16.msra.mxu0 0
      %2724 = vmatprep.subr.bf16.mxu0 0
      %2725 = vmatpush1.bf16.msra.mxu0 0
      %2726 = vmatprep.subr.bf16.mxu0 0
      %2727 = vmatpush1.bf16.msra.mxu0 0
      %2728 = vmatprep.subr.bf16.mxu0 0
      %2729 = vmatpush1.bf16.msra.mxu0 0
      %2730 = vmatprep.subr.bf16.mxu0 0
      %2731 = vmatpush1.bf16.msra.mxu0 0
      %2732 = vmatprep.subr.bf16.mxu0 0
      %2733 = vmatpush1.bf16.msra.mxu0 0
      %2734 = vmatprep.subr.bf16.mxu0 0
      %2735 = vmatpush1.bf16.msra.mxu0 0
      %2736 = vmatprep.subr.bf16.mxu0 0
      %2737 = vmatpush1.bf16.msra.mxu0 0
      %2738 = vmatprep.subr.bf16.mxu0 0
      %2739 = vmatpush1.bf16.msra.mxu0 0
      %2740 = vmatprep.subr.bf16.mxu0 0
      %2741 = vmatpush1.bf16.msra.mxu0 0
      %2742 = vmatprep.subr.bf16.mxu0 0
      %2743 = vmatpush1.bf16.msra.mxu0 0
      %2744 = vmatprep.subr.bf16.mxu0 0
      %2745 = vmatpush1.bf16.msra.mxu0 0
      %2746 = vmatprep.subr.bf16.mxu0 0
      %2747 = vmatpush1.bf16.msra.mxu0 0
      %2748 = vmatprep.mubr.bf16.mxu0 0
      %2749 = vmatmul.mubr.bf16.gmra.mrb[0].mxu0 %v2714
      %v2750 = vpop.f32.mrb[0].mxu0
      %v2751 = vadd.f32 0.0, %v2750
      %v2752 = vpop.f32.mrb[0].mxu0
      %v2753 = vpop.f32.mrb[0].mxu0
      %v2754 = vadd.f32 0.0, %v2753
      %v2755 = vpop.f32.mrb[0].mxu0
      %2756 = vdwg.mxu0
      %2757 = vrot.lane.b32.xlu0 %v780, 80
      %v2758 = vpop.permute.xlu0 %2757
      %v2761 = vsel %vm784, %v2615, 0
      %2763 = vmatprep.subr.bf16.mxu0 0
      %2764 = vmatpush1.bf16.msra.mxu0 %v2758
      %2765 = vmatprep.subr.bf16.mxu0 0
      %2766 = vmatpush1.bf16.msra.mxu0 0
      %2767 = vmatprep.subr.bf16.mxu0 0
      %2768 = vmatpush1.bf16.msra.mxu0 0
      %2769 = vmatprep.subr.bf16.mxu0 0
      %2770 = vmatpush1.bf16.msra.mxu0 0
      %2771 = vmatprep.subr.bf16.mxu0 0
      %2772 = vmatpush1.bf16.msra.mxu0 0
      %2773 = vmatprep.subr.bf16.mxu0 0
      %2774 = vmatpush1.bf16.msra.mxu0 0
      %2775 = vmatprep.subr.bf16.mxu0 0
      %2776 = vmatpush1.bf16.msra.mxu0 0
      %2777 = vmatprep.subr.bf16.mxu0 0
      %2778 = vmatpush1.bf16.msra.mxu0 0
      %2779 = vmatprep.subr.bf16.mxu0 0
      %2780 = vmatpush1.bf16.msra.mxu0 0
      %2781 = vmatprep.subr.bf16.mxu0 0
      %2782 = vmatpush1.bf16.msra.mxu0 0
      %2783 = vmatprep.subr.bf16.mxu0 0
      %2784 = vmatpush1.bf16.msra.mxu0 0
      %2785 = vmatprep.subr.bf16.mxu0 0
      %2786 = vmatpush1.bf16.msra.mxu0 0
      %2787 = vmatprep.subr.bf16.mxu0 0
      %2788 = vmatpush1.bf16.msra.mxu0 0
      %2789 = vmatprep.subr.bf16.mxu0 0
      %2790 = vmatpush1.bf16.msra.mxu0 0
      %2791 = vmatprep.subr.bf16.mxu0 0
      %2792 = vmatpush1.bf16.msra.mxu0 0
      %2793 = vmatprep.subr.bf16.mxu0 0
      %2794 = vmatpush1.bf16.msra.mxu0 0
      %2795 = vmatprep.mubr.bf16.mxu0 0
      %2796 = vmatmul.mubr.bf16.gmra.mrb[0].mxu0 %v2761
      %v2797 = vpop.f32.mrb[0].mxu0
      %v2798 = vadd.f32 0.0, %v2797
      %v2799 = vpop.f32.mrb[0].mxu0
      %v2800 = vpop.f32.mrb[0].mxu0
      %v2801 = vadd.f32 0.0, %v2800
      %v2802 = vpop.f32.mrb[0].mxu0
      %2803 = vdwg.mxu0
      %v2804 = vrcp.pop %v2590
      %v2805 = vmul.f32 1.0, %v2804
      %v2806 = vrcp.pop %v2593
      %v2807 = vmul.f32 1.0, %v2806
      %v2808 = vrcp.pop %v2596
      %v2809 = vmul.f32 1.0, %v2808
      %v2810 = vrcp.pop %v2599
      %v2811 = vmul.f32 1.0, %v2810
      %v2812 = vrcp.pop %v2602
      %v2813 = vmul.f32 1.0, %v2812
      %v2814 = vrcp.pop %v2605
      %v2815 = vmul.f32 1.0, %v2814
      %v2816 = vrcp.pop %v2608
      %v2817 = vmul.f32 1.0, %v2816
      %v2818 = vrcp.pop %v2611
      %v2819 = vmul.f32 1.0, %v2818
      %v2820 = vmul.f32 %v2657, %v2805
      %v2821 = vmul.f32 %v2660, %v2807
      %v2822 = vmul.f32 %v2704, %v2809
      %v2823 = vmul.f32 %v2707, %v2811
      %v2824 = vmul.f32 %v2751, %v2813
      %v2825 = vmul.f32 %v2754, %v2815
      %v2826 = vmul.f32 %v2798, %v2817
      %v2827 = vmul.f32 %v2801, %v2819
      %2836 = vrot.lane.b32.xlu0 %v2820, 48
      %v2837 = vpop.permute.xlu0 %2836
      %2838 = vrot.lane.b32.xlu0 %v2821, 48
      %v2839 = vpop.permute.xlu0 %2838
      %2840 = vrot.lane.b32.xlu0 %v2822, 48
      %v2841 = vpop.permute.xlu0 %2840
      %2842 = vrot.lane.b32.xlu0 %v2823, 48
      %v2843 = vpop.permute.xlu0 %2842
      %2844 = vrot.lane.b32.xlu0 %v2824, 48
      %v2845 = vpop.permute.xlu0 %2844
      %2846 = vrot.lane.b32.xlu0 %v2825, 48
      %v2847 = vpop.permute.xlu0 %2846
      %2848 = vrot.lane.b32.xlu0 %v2826, 48
      %v2849 = vpop.permute.xlu0 %2848
      %2850 = vrot.lane.b32.xlu0 %v2827, 48
      %v2851 = vpop.permute.xlu0 %2850
      %vm2860 = vcmask 523648
      %2861 = vst.msk [vmem:[#allocation2] sm:$0xff] %vm2860, %v2837
      %2862 = vst.msk [vmem:[#allocation2 + $0x8] sm:$0xff] %vm2860, %v2839
      %2863 = vst.msk [vmem:[#allocation2 + $0x10] sm:$0xff] %vm2860, %v2841
      %2864 = vst.msk [vmem:[#allocation2 + $0x18] sm:$0xff] %vm2860, %v2843
      %2865 = vst.msk [vmem:[#allocation2 + $0x20] sm:$0xff] %vm2860, %v2845
      %2866 = vst.msk [vmem:[#allocation2 + $0x28] sm:$0xff] %vm2860, %v2847
      %2867 = vst.msk [vmem:[#allocation2 + $0x30] sm:$0xff] %vm2860, %v2849
      %2868 = vst.msk [vmem:[#allocation2 + $0x38] sm:$0xff] %vm2860, %v2851
      %v2869 = vld [vmem:[#allocation2] sm:$0xff]
      %v2870 = vld [vmem:[#allocation2 + $0x8] sm:$0xff]
      %v2871 = vld [vmem:[#allocation2 + $0x10] sm:$0xff]
      %v2872 = vld [vmem:[#allocation2 + $0x18] sm:$0xff]
      %v2873 = vld [vmem:[#allocation2 + $0x20] sm:$0xff]
      %v2874 = vld [vmem:[#allocation2 + $0x28] sm:$0xff]
      %v2875 = vld [vmem:[#allocation2 + $0x30] sm:$0xff]
      %v2876 = vld [vmem:[#allocation2 + $0x38] sm:$0xff]
      %v2877 = vpack.c.bf16 %v2870, %v2869
      %v2878 = vpack.c.bf16 %v2872, %v2871
      %v2879 = vpack.c.bf16 %v2874, %v2873
      %v2880 = vpack.c.bf16 %v2876, %v2875
      %v2881 = vld [vmem:[%s6] sm:$0xf]
      %v2882 = vld [vmem:[%s6 + $0x4] sm:$0xf]
      %v2883 = vld [vmem:[%s6 + $0x8] sm:$0xf]
      %v2884 = vld [vmem:[%s6 + $0xc] sm:$0xf]
      %v2885 = vld [vmem:[%s6 + $0x10] sm:$0xf]
      %v2886 = vld [vmem:[%s6 + $0x14] sm:$0xf]
      %v2887 = vld [vmem:[%s6 + $0x18] sm:$0xf]
      %v2888 = vld [vmem:[%s6 + $0x1c] sm:$0xf]
      %v2889 = vld [vmem:[%s7] sm:$0x1]
      %v2891 = vlaneseq
      %v2892 = vshrl.u32 %v2891, 7
      %v2893 = vsub.s32 0, %v2892
      %v2894 = vrot.slane %v2889, %v2893
      %v2904 = vunpack.c.l.b16 %v2881
      %v2905 = vunpack.c.l.b16 %v2882
      %v2906 = vunpack.c.l.b16 %v2883
      %v2907 = vunpack.c.l.b16 %v2884
      %v2908 = vunpack.c.l.b16 %v2885
      %v2909 = vunpack.c.l.b16 %v2886
      %v2910 = vunpack.c.l.b16 %v2887
      %v2911 = vunpack.c.l.b16 %v2888
      %v2912 = vpack.c.b16 %v2905, %v2904
      %v2913 = vpack.c.b16 %v2907, %v2906
      %v2914 = vpack.c.b16 %v2909, %v2908
      %v2915 = vpack.c.b16 %v2911, %v2910
      %v2921 = vsel %vm482, %v2877, 0
      %v2924 = vsel %vm482, %v2878, 0
      %v2927 = vsel %vm482, %v2879, 0
      %v2930 = vsel %vm482, %v2880, 0
      %2932 = vmatprep.subr.bf16.mxu0 0
      %2933 = vmatpush1.bf16.msra.mxu0 %v2912
      %2934 = vmatprep.subr.bf16.mxu0 0
      %2935 = vmatpush1.bf16.msra.mxu0 %v2913
      %2936 = vmatprep.subr.bf16.mxu0 0
      %2937 = vmatpush1.bf16.msra.mxu0 %v2914
      %2938 = vmatprep.subr.bf16.mxu0 0
      %2939 = vmatpush1.bf16.msra.mxu0 %v2915
      %2940 = vmatprep.subr.bf16.mxu0 0
      %2941 = vmatpush1.bf16.msra.mxu0 0
      %2942 = vmatprep.subr.bf16.mxu0 0
      %2943 = vmatpush1.bf16.msra.mxu0 0
      %2944 = vmatprep.subr.bf16.mxu0 0
      %2945 = vmatpush1.bf16.msra.mxu0 0
      %2946 = vmatprep.subr.bf16.mxu0 0
      %2947 = vmatpush1.bf16.msra.mxu0 0
      %2948 = vmatprep.subr.bf16.mxu0 0
      %2949 = vmatpush1.bf16.msra.mxu0 0
      %2950 = vmatprep.subr.bf16.mxu0 0
      %2951 = vmatpush1.bf16.msra.mxu0 0
      %2952 = vmatprep.subr.bf16.mxu0 0
      %2953 = vmatpush1.bf16.msra.mxu0 0
      %2954 = vmatprep.subr.bf16.mxu0 0
      %2955 = vmatpush1.bf16.msra.mxu0 0
      %2956 = vmatprep.subr.bf16.mxu0 0
      %2957 = vmatpush1.bf16.msra.mxu0 0
      %2958 = vmatprep.subr.bf16.mxu0 0
      %2959 = vmatpush1.bf16.msra.mxu0 0
      %2960 = vmatprep.subr.bf16.mxu0 0
      %2961 = vmatpush1.bf16.msra.mxu0 0
      %2962 = vmatprep.subr.bf16.mxu0 0
      %2963 = vmatpush1.bf16.msra.mxu0 0
      %2964 = vmatprep.mubr.bf16.mxu0 0
      %2965 = vmatmul.mubr.bf16.gmra.mrb[0].mxu0 %v2921
      %v2966 = vpop.f32.mrb[0].mxu0
      %v2967 = vadd.f32 %v2894, %v2966
      %v2968 = vpop.f32.mrb[0].mxu0
      %v2969 = vpop.f32.mrb[0].mxu0
      %v2970 = vadd.f32 %v2894, %v2969
      %v2971 = vpop.f32.mrb[0].mxu0
      %2972 = vmatprep.mubr.bf16.mxu0 0
      %2973 = vmatmul.mubr.bf16.gmra.mrb[0].mxu0 %v2924
      %v2974 = vpop.f32.mrb[0].mxu0
      %v2975 = vadd.f32 %v2894, %v2974
      %v2976 = vpop.f32.mrb[0].mxu0
      %v2977 = vpop.f32.mrb[0].mxu0
      %v2978 = vadd.f32 %v2894, %v2977
      %v2979 = vpop.f32.mrb[0].mxu0
      %2980 = vmatprep.mubr.bf16.mxu0 0
      %2981 = vmatmul.mubr.bf16.gmra.mrb[0].mxu0 %v2927
      %v2982 = vpop.f32.mrb[0].mxu0
      %v2983 = vadd.f32 %v2894, %v2982
      %v2984 = vpop.f32.mrb[0].mxu0
      %v2985 = vpop.f32.mrb[0].mxu0
      %v2986 = vadd.f32 %v2894, %v2985
      %v2987 = vpop.f32.mrb[0].mxu0
      %2988 = vmatprep.mubr.bf16.mxu0 0
      %2989 = vmatmul.mubr.bf16.gmra.mrb[0].mxu0 %v2930
      %v2990 = vpop.f32.mrb[0].mxu0
      %v2991 = vadd.f32 %v2894, %v2990
      %v2992 = vpop.f32.mrb[0].mxu0
      %v2993 = vpop.f32.mrb[0].mxu0
      %v2994 = vadd.f32 %v2894, %v2993
      %v2995 = vpop.f32.mrb[0].mxu0
      %2996 = vdwg.mxu0
      %v2997 = vadd.f32 %v472, %v2967
      %v2998 = vadd.f32 %v473, %v2970
      %v2999 = vadd.f32 %v474, %v2975
      %v3000 = vadd.f32 %v475, %v2978
      %v3001 = vadd.f32 %v476, %v2983
      %v3002 = vadd.f32 %v477, %v2986
      %v3003 = vadd.f32 %v478, %v2991
      %v3004 = vadd.f32 %v479, %v2994
      %v3005 = vld [vmem:[%s8] sm:$0x1]
      %v3006 = vld [vmem:[%s9] sm:$0x1]
      %v3007 = vsel %vm482, %v2997, 0.0
      %3008 = vadd.xlane.f32.xlu0 %v3007
      %v3009 = vpop.xlane.xlu0 %3008
      %v3010 = vsel %vm482, %v2998, 0.0
      %3011 = vadd.xlane.f32.xlu0 %v3010
      %v3012 = vpop.xlane.xlu0 %3011
      %v3013 = vsel %vm482, %v2999, 0.0
      %3014 = vadd.xlane.f32.xlu0 %v3013
      %v3015 = vpop.xlane.xlu0 %3014
      %v3016 = vsel %vm482, %v3000, 0.0
      %3017 = vadd.xlane.f32.xlu0 %v3016
      %v3018 = vpop.xlane.xlu0 %3017
      %v3019 = vsel %vm482, %v3001, 0.0
      %3020 = vadd.xlane.f32.xlu0 %v3019
      %v3021 = vpop.xlane.xlu0 %3020
      %v3022 = vsel %vm482, %v3002, 0.0
      %3023 = vadd.xlane.f32.xlu0 %v3022
      %v3024 = vpop.xlane.xlu0 %3023
      %v3025 = vsel %vm482, %v3003, 0.0
      %3026 = vadd.xlane.f32.xlu0 %v3025
      %v3027 = vpop.xlane.xlu0 %3026
      %v3028 = vsel %vm482, %v3004, 0.0
      %3029 = vadd.xlane.f32.xlu0 %v3028
      %v3030 = vpop.xlane.xlu0 %3029
      %v3031 = vmul.f32 %v3009, %v507
      %v3032 = vmul.f32 %v3012, %v507
      %v3033 = vmul.f32 %v3015, %v507
      %v3034 = vmul.f32 %v3018, %v507
      %v3035 = vmul.f32 %v3021, %v507
      %v3036 = vmul.f32 %v3024, %v507
      %v3037 = vmul.f32 %v3027, %v507
      %v3038 = vmul.f32 %v3030, %v507
      %v3039 = vsub.f32 %v2997, %v3031
      %v3040 = vsub.f32 %v2998, %v3032
      %v3041 = vsub.f32 %v2999, %v3033
      %v3042 = vsub.f32 %v3000, %v3034
      %v3043 = vsub.f32 %v3001, %v3035
      %v3044 = vsub.f32 %v3002, %v3036
      %v3045 = vsub.f32 %v3003, %v3037
      %v3046 = vsub.f32 %v3004, %v3038
      %v3047 = vmul.f32 %v3039, %v3039
      %v3048 = vmul.f32 %v3040, %v3040
      %v3049 = vmul.f32 %v3041, %v3041
      %v3050 = vmul.f32 %v3042, %v3042
      %v3051 = vmul.f32 %v3043, %v3043
      %v3052 = vmul.f32 %v3044, %v3044
      %v3053 = vmul.f32 %v3045, %v3045
      %v3054 = vmul.f32 %v3046, %v3046
      %v3055 = vsel %vm482, %v3047, 0.0
      %3056 = vadd.xlane.f32.xlu0 %v3055
      %v3057 = vpop.xlane.xlu0 %3056
      %v3058 = vsel %vm482, %v3048, 0.0
      %3059 = vadd.xlane.f32.xlu0 %v3058
      %v3060 = vpop.xlane.xlu0 %3059
      %v3061 = vsel %vm482, %v3049, 0.0
      %3062 = vadd.xlane.f32.xlu0 %v3061
      %v3063 = vpop.xlane.xlu0 %3062
      %v3064 = vsel %vm482, %v3050, 0.0
      %3065 = vadd.xlane.f32.xlu0 %v3064
      %v3066 = vpop.xlane.xlu0 %3065
      %v3067 = vsel %vm482, %v3051, 0.0
      %3068 = vadd.xlane.f32.xlu0 %v3067
      %v3069 = vpop.xlane.xlu0 %3068
      %v3070 = vsel %vm482, %v3052, 0.0
      %3071 = vadd.xlane.f32.xlu0 %v3070
      %v3072 = vpop.xlane.xlu0 %3071
      %v3073 = vsel %vm482, %v3053, 0.0
      %3074 = vadd.xlane.f32.xlu0 %v3073
      %v3075 = vpop.xlane.xlu0 %3074
      %v3076 = vsel %vm482, %v3054, 0.0
      %3077 = vadd.xlane.f32.xlu0 %v3076
      %v3078 = vpop.xlane.xlu0 %3077
      %v3079 = vmul.f32 %v3057, %v507
      %v3080 = vmul.f32 %v3060, %v507
      %v3081 = vmul.f32 %v3063, %v507
      %v3082 = vmul.f32 %v3066, %v507
      %v3083 = vmul.f32 %v3069, %v507
      %v3084 = vmul.f32 %v3072, %v507
      %v3085 = vmul.f32 %v3075, %v507
      %v3086 = vmul.f32 %v3078, %v507
      %v3087 = vadd.f32 %v3079, 1e-05
      %v3088 = vadd.f32 %v3080, 1e-05
      %v3089 = vadd.f32 %v3081, 1e-05
      %v3090 = vadd.f32 %v3082, 1e-05
      %v3091 = vadd.f32 %v3083, 1e-05
      %v3092 = vadd.f32 %v3084, 1e-05
      %v3093 = vadd.f32 %v3085, 1e-05
      %v3094 = vadd.f32 %v3086, 1e-05
      %v3095 = vrsqrt.pop %v3087
      %v3096 = vrsqrt.pop %v3088
      %v3097 = vrsqrt.pop %v3089
      %v3098 = vrsqrt.pop %v3090
      %v3099 = vrsqrt.pop %v3091
      %v3100 = vrsqrt.pop %v3092
      %v3101 = vrsqrt.pop %v3093
      %v3102 = vrsqrt.pop %v3094
      %v3103 = vmul.f32 %v3039, %v3095
      %v3104 = vmul.f32 %v3040, %v3096
      %v3105 = vmul.f32 %v3041, %v3097
      %v3106 = vmul.f32 %v3042, %v3098
      %v3107 = vmul.f32 %v3043, %v3099
      %v3108 = vmul.f32 %v3044, %v3100
      %v3109 = vmul.f32 %v3045, %v3101
      %v3110 = vmul.f32 %v3046, %v3102
      %v3112 = vlaneseq
      %v3113 = vshrl.u32 %v3112, 7
      %v3114 = vsub.s32 0, %v3113
      %v3115 = vrot.slane %v3005, %v3114
      %v3117 = vmul.f32 %v3103, %v3115
      %v3118 = vmul.f32 %v3104, %v3115
      %v3119 = vmul.f32 %v3105, %v3115
      %v3120 = vmul.f32 %v3106, %v3115
      %v3121 = vmul.f32 %v3107, %v3115
      %v3122 = vmul.f32 %v3108, %v3115
      %v3123 = vmul.f32 %v3109, %v3115
      %v3124 = vmul.f32 %v3110, %v3115
      %v3126 = vlaneseq
      %v3127 = vshrl.u32 %v3126, 7
      %v3128 = vsub.s32 0, %v3127
      %v3129 = vrot.slane %v3006, %v3128
      %v3131 = vadd.f32 %v3117, %v3129
      %v3132 = vadd.f32 %v3118, %v3129
      %v3133 = vadd.f32 %v3119, %v3129
      %v3134 = vadd.f32 %v3120, %v3129
      %v3135 = vadd.f32 %v3121, %v3129
      %v3136 = vadd.f32 %v3122, %v3129
      %v3137 = vadd.f32 %v3123, %v3129
      %v3138 = vadd.f32 %v3124, %v3129
      %v3139 = vpack.c.bf16 %v3132, %v3131
      %v3140 = vpack.c.bf16 %v3134, %v3133
      %v3141 = vpack.c.bf16 %v3136, %v3135
      %v3142 = vpack.c.bf16 %v3138, %v3137
      %v3143 = vld [vmem:[%s10] sm:$0xff]
      %v3144 = vld [vmem:[%s10 + $0x8] sm:$0xff]
      %v3145 = vld [vmem:[%s10 + $0x10] sm:$0xff]
      %v3146 = vld [vmem:[%s10 + $0x18] sm:$0xff]
      %v3147 = vld [vmem:[%s10 + $0x20] sm:$0xff]
      %v3148 = vld [vmem:[%s10 + $0x28] sm:$0xff]
      %v3149 = vld [vmem:[%s10 + $0x30] sm:$0xff]
      %v3150 = vld [vmem:[%s10 + $0x38] sm:$0xff]
      %v3151 = vld [vmem:[%s11] sm:$0x3]
      %v3153 = vlaneseq
      %v3154 = vshrl.u32 %v3153, 7
      %v3155 = vsub.s32 0, %v3154
      %v3156 = vrot.slane %v3151, %v3155
      %v3157 = vlaneseq
      %v3158 = vshrl.u32 %v3157, 7
      %v3159 = vsub.s32 1, %v3158
      %v3160 = vrot.slane %v3151, %v3159
      %v3171 = vunpack.c.l.b16 %v3143
      %v3172 = vunpack.c.h.b16 %v3143
      %v3173 = vunpack.c.l.b16 %v3144
      %v3174 = vunpack.c.h.b16 %v3144
      %v3175 = vunpack.c.l.b16 %v3145
      %v3176 = vunpack.c.h.b16 %v3145
      %v3177 = vunpack.c.l.b16 %v3146
      %v3178 = vunpack.c.h.b16 %v3146
      %v3179 = vunpack.c.l.b16 %v3147
      %v3180 = vunpack.c.h.b16 %v3147
      %v3181 = vunpack.c.l.b16 %v3148
      %v3182 = vunpack.c.h.b16 %v3148
      %v3183 = vunpack.c.l.b16 %v3149
      %v3184 = vunpack.c.h.b16 %v3149
      %v3185 = vunpack.c.l.b16 %v3150
      %v3186 = vunpack.c.h.b16 %v3150
      %v3187 = vpack.c.b16 %v3173, %v3171
      %v3188 = vpack.c.b16 %v3174, %v3172
      %v3189 = vpack.c.b16 %v3177, %v3175
      %v3190 = vpack.c.b16 %v3178, %v3176
      %v3191 = vpack.c.b16 %v3181, %v3179
      %v3192 = vpack.c.b16 %v3182, %v3180
      %v3193 = vpack.c.b16 %v3185, %v3183
      %v3194 = vpack.c.b16 %v3186, %v3184
      %v3204 = vsel %vm482, %v3139, 0
      %v3207 = vsel %vm482, %v3140, 0
      %v3210 = vsel %vm482, %v3141, 0
      %v3213 = vsel %vm482, %v3142, 0
      %3215 = vmatprep.subr.bf16.mxu0 %v3188
      %3216 = vmatpush1.bf16.msra.mxu0 %v3187
      %3217 = vmatprep.subr.bf16.mxu0 %v3190
      %3218 = vmatpush1.bf16.msra.mxu0 %v3189
      %3219 = vmatprep.subr.bf16.mxu0 %v3192
      %3220 = vmatpush1.bf16.msra.mxu0 %v3191
      %3221 = vmatprep.subr.bf16.mxu0 %v3194
      %3222 = vmatpush1.bf16.msra.mxu0 %v3193
      %3223 = vmatprep.subr.bf16.mxu0 0
      %3224 = vmatpush1.bf16.msra.mxu0 0
      %3225 = vmatprep.subr.bf16.mxu0 0
      %3226 = vmatpush1.bf16.msra.mxu0 0
      %3227 = vmatprep.subr.bf16.mxu0 0
      %3228 = vmatpush1.bf16.msra.mxu0 0
      %3229 = vmatprep.subr.bf16.mxu0 0
      %3230 = vmatpush1.bf16.msra.mxu0 0
      %3231 = vmatprep.subr.bf16.mxu0 0
      %3232 = vmatpush1.bf16.msra.mxu0 0
      %3233 = vmatprep.subr.bf16.mxu0 0
      %3234 = vmatpush1.bf16.msra.mxu0 0
      %3235 = vmatprep.subr.bf16.mxu0 0
      %3236 = vmatpush1.bf16.msra.mxu0 0
      %3237 = vmatprep.subr.bf16.mxu0 0
      %3238 = vmatpush1.bf16.msra.mxu0 0
      %3239 = vmatprep.subr.bf16.mxu0 0
      %3240 = vmatpush1.bf16.msra.mxu0 0
      %3241 = vmatprep.subr.bf16.mxu0 0
      %3242 = vmatpush1.bf16.msra.mxu0 0
      %3243 = vmatprep.subr.bf16.mxu0 0
      %3244 = vmatpush1.bf16.msra.mxu0 0
      %3245 = vmatprep.subr.bf16.mxu0 0
      %3246 = vmatpush1.bf16.msra.mxu0 0
      %3247 = vmatprep.mubr.bf16.mxu0 0
      %3248 = vmatmul.mubr.bf16.gmra.mrb[0].mxu0 %v3204
      %v3249 = vpop.f32.mrb[0].mxu0
      %v3250 = vadd.f32 %v3156, %v3249
      %v3251 = vpop.f32.mrb[0].mxu0
      %v3252 = vadd.f32 %v3160, %v3251
      %v3253 = vpop.f32.mrb[0].mxu0
      %v3254 = vadd.f32 %v3156, %v3253
      %v3255 = vpop.f32.mrb[0].mxu0
      %v3256 = vadd.f32 %v3160, %v3255
      %3257 = vmatprep.mubr.bf16.mxu0 0
      %3258 = vmatmul.mubr.bf16.gmra.mrb[0].mxu0 %v3207
      %v3259 = vpop.f32.mrb[0].mxu0
      %v3260 = vadd.f32 %v3156, %v3259
      %v3261 = vpop.f32.mrb[0].mxu0
      %v3262 = vadd.f32 %v3160, %v3261
      %v3263 = vpop.f32.mrb[0].mxu0
      %v3264 = vadd.f32 %v3156, %v3263
      %v3265 = vpop.f32.mrb[0].mxu0
      %v3266 = vadd.f32 %v3160, %v3265
      %3267 = vmatprep.mubr.bf16.mxu0 0
      %3268 = vmatmul.mubr.bf16.gmra.mrb[0].mxu0 %v3210
      %v3269 = vpop.f32.mrb[0].mxu0
      %v3270 = vadd.f32 %v3156, %v3269
      %v3271 = vpop.f32.mrb[0].mxu0
      %v3272 = vadd.f32 %v3160, %v3271
      %v3273 = vpop.f32.mrb[0].mxu0
      %v3274 = vadd.f32 %v3156, %v3273
      %v3275 = vpop.f32.mrb[0].mxu0
      %v3276 = vadd.f32 %v3160, %v3275
      %3277 = vmatprep.mubr.bf16.mxu0 0
      %3278 = vmatmul.mubr.bf16.gmra.mrb[0].mxu0 %v3213
      %v3279 = vpop.f32.mrb[0].mxu0
      %v3280 = vadd.f32 %v3156, %v3279
      %v3281 = vpop.f32.mrb[0].mxu0
      %v3282 = vadd.f32 %v3160, %v3281
      %v3283 = vpop.f32.mrb[0].mxu0
      %v3284 = vadd.f32 %v3156, %v3283
      %v3285 = vpop.f32.mrb[0].mxu0
      %v3286 = vadd.f32 %v3160, %v3285
      %3287 = vdwg.mxu0
      %v3288 = vmul.f32 %v3250, 0.5
      %v3289 = vmul.f32 %v3252, 0.5
      %v3290 = vmul.f32 %v3254, 0.5
      %v3291 = vmul.f32 %v3256, 0.5
      %v3292 = vmul.f32 %v3260, 0.5
      %v3293 = vmul.f32 %v3262, 0.5
      %v3294 = vmul.f32 %v3264, 0.5
      %v3295 = vmul.f32 %v3266, 0.5
      %v3296 = vmul.f32 %v3270, 0.5
      %v3297 = vmul.f32 %v3272, 0.5
      %v3298 = vmul.f32 %v3274, 0.5
      %v3299 = vmul.f32 %v3276, 0.5
      %v3300 = vmul.f32 %v3280, 0.5
      %v3301 = vmul.f32 %v3282, 0.5
      %v3302 = vmul.f32 %v3284, 0.5
      %v3303 = vmul.f32 %v3286, 0.5
      %v3304 = vmul.f32 %v3250, %v3250
      %v3305 = vmul.f32 %v3252, %v3252
      %v3306 = vmul.f32 %v3254, %v3254
      %v3307 = vmul.f32 %v3256, %v3256
      %v3308 = vmul.f32 %v3260, %v3260
      %v3309 = vmul.f32 %v3262, %v3262
      %v3310 = vmul.f32 %v3264, %v3264
      %v3311 = vmul.f32 %v3266, %v3266
      %v3312 = vmul.f32 %v3270, %v3270
      %v3313 = vmul.f32 %v3272, %v3272
      %v3314 = vmul.f32 %v3274, %v3274
      %v3315 = vmul.f32 %v3276, %v3276
      %v3316 = vmul.f32 %v3280, %v3280
      %v3317 = vmul.f32 %v3282, %v3282
      %v3318 = vmul.f32 %v3284, %v3284
      %v3319 = vmul.f32 %v3286, %v3286
      %v3320 = vmul.f32 %v3304, %v3250
      %v3321 = vmul.f32 %v3305, %v3252
      %v3322 = vmul.f32 %v3306, %v3254
      %v3323 = vmul.f32 %v3307, %v3256
      %v3324 = vmul.f32 %v3308, %v3260
      %v3325 = vmul.f32 %v3309, %v3262
      %v3326 = vmul.f32 %v3310, %v3264
      %v3327 = vmul.f32 %v3311, %v3266
      %v3328 = vmul.f32 %v3312, %v3270
      %v3329 = vmul.f32 %v3313, %v3272
      %v3330 = vmul.f32 %v3314, %v3274
      %v3331 = vmul.f32 %v3315, %v3276
      %v3332 = vmul.f32 %v3316, %v3280
      %v3333 = vmul.f32 %v3317, %v3282
      %v3334 = vmul.f32 %v3318, %v3284
      %v3335 = vmul.f32 %v3319, %v3286
      %v3336 = vmul.f32 %v3320, 0.044715
      %v3337 = vmul.f32 %v3321, 0.044715
      %v3338 = vmul.f32 %v3322, 0.044715
      %v3339 = vmul.f32 %v3323, 0.044715
      %v3340 = vmul.f32 %v3324, 0.044715
      %v3341 = vmul.f32 %v3325, 0.044715
      %v3342 = vmul.f32 %v3326, 0.044715
      %v3343 = vmul.f32 %v3327, 0.044715
      %v3344 = vmul.f32 %v3328, 0.044715
      %v3345 = vmul.f32 %v3329, 0.044715
      %v3346 = vmul.f32 %v3330, 0.044715
      %v3347 = vmul.f32 %v3331, 0.044715
      %v3348 = vmul.f32 %v3332, 0.044715
      %v3349 = vmul.f32 %v3333, 0.044715
      %v3350 = vmul.f32 %v3334, 0.044715
      %v3351 = vmul.f32 %v3335, 0.044715
      %v3352 = vadd.f32 %v3250, %v3336
      %v3353 = vadd.f32 %v3252, %v3337
      %v3354 = vadd.f32 %v3254, %v3338
      %v3355 = vadd.f32 %v3256, %v3339
      %v3356 = vadd.f32 %v3260, %v3340
      %v3357 = vadd.f32 %v3262, %v3341
      %v3358 = vadd.f32 %v3264, %v3342
      %v3359 = vadd.f32 %v3266, %v3343
      %v3360 = vadd.f32 %v3270, %v3344
      %v3361 = vadd.f32 %v3272, %v3345
      %v3362 = vadd.f32 %v3274, %v3346
      %v3363 = vadd.f32 %v3276, %v3347
      %v3364 = vadd.f32 %v3280, %v3348
      %v3365 = vadd.f32 %v3282, %v3349
      %v3366 = vadd.f32 %v3284, %v3350
      %v3367 = vadd.f32 %v3286, %v3351
      %v3368 = vmul.f32 %v3352, 0.7978846
      %v3369 = vmul.f32 %v3353, 0.7978846
      %v3370 = vmul.f32 %v3354, 0.7978846
      %v3371 = vmul.f32 %v3355, 0.7978846
      %v3372 = vmul.f32 %v3356, 0.7978846
      %v3373 = vmul.f32 %v3357, 0.7978846
      %v3374 = vmul.f32 %v3358, 0.7978846
      %v3375 = vmul.f32 %v3359, 0.7978846
      %v3376 = vmul.f32 %v3360, 0.7978846
      %v3377 = vmul.f32 %v3361, 0.7978846
      %v3378 = vmul.f32 %v3362, 0.7978846
      %v3379 = vmul.f32 %v3363, 0.7978846
      %v3380 = vmul.f32 %v3364, 0.7978846
      %v3381 = vmul.f32 %v3365, 0.7978846
      %v3382 = vmul.f32 %v3366, 0.7978846
      %v3383 = vmul.f32 %v3367, 0.7978846
      %v3384 = vtanh.pop %v3368
      %v3385 = vtanh.pop %v3369
      %v3386 = vtanh.pop %v3370
      %v3387 = vtanh.pop %v3371
      %v3388 = vtanh.pop %v3372
      %v3389 = vtanh.pop %v3373
      %v3390 = vtanh.pop %v3374
      %v3391 = vtanh.pop %v3375
      %v3392 = vtanh.pop %v3376
      %v3393 = vtanh.pop %v3377
      %v3394 = vtanh.pop %v3378
      %v3395 = vtanh.pop %v3379
      %v3396 = vtanh.pop %v3380
      %v3397 = vtanh.pop %v3381
      %v3398 = vtanh.pop %v3382
      %v3399 = vtanh.pop %v3383
      %v3400 = vadd.f32 %v3384, 1.0
      %v3401 = vadd.f32 %v3385, 1.0
      %v3402 = vadd.f32 %v3386, 1.0
      %v3403 = vadd.f32 %v3387, 1.0
      %v3404 = vadd.f32 %v3388, 1.0
      %v3405 = vadd.f32 %v3389, 1.0
      %v3406 = vadd.f32 %v3390, 1.0
      %v3407 = vadd.f32 %v3391, 1.0
      %v3408 = vadd.f32 %v3392, 1.0
      %v3409 = vadd.f32 %v3393, 1.0
      %v3410 = vadd.f32 %v3394, 1.0
      %v3411 = vadd.f32 %v3395, 1.0
      %v3412 = vadd.f32 %v3396, 1.0
      %v3413 = vadd.f32 %v3397, 1.0
      %v3414 = vadd.f32 %v3398, 1.0
      %v3415 = vadd.f32 %v3399, 1.0
      %v3416 = vmul.f32 %v3288, %v3400
      %v3417 = vmul.f32 %v3289, %v3401
      %v3418 = vmul.f32 %v3290, %v3402
      %v3419 = vmul.f32 %v3291, %v3403
      %v3420 = vmul.f32 %v3292, %v3404
      %v3421 = vmul.f32 %v3293, %v3405
      %v3422 = vmul.f32 %v3294, %v3406
      %v3423 = vmul.f32 %v3295, %v3407
      %v3424 = vmul.f32 %v3296, %v3408
      %v3425 = vmul.f32 %v3297, %v3409
      %v3426 = vmul.f32 %v3298, %v3410
      %v3427 = vmul.f32 %v3299, %v3411
      %v3428 = vmul.f32 %v3300, %v3412
      %v3429 = vmul.f32 %v3301, %v3413
      %v3430 = vmul.f32 %v3302, %v3414
      %v3431 = vmul.f32 %v3303, %v3415
      %v3432 = vpack.c.bf16 %v3418, %v3416
      %v3433 = vpack.c.bf16 %v3419, %v3417
      %v3434 = vpack.c.bf16 %v3422, %v3420
      %v3435 = vpack.c.bf16 %v3423, %v3421
      %v3436 = vpack.c.bf16 %v3426, %v3424
      %v3437 = vpack.c.bf16 %v3427, %v3425
      %v3438 = vpack.c.bf16 %v3430, %v3428
      %v3439 = vpack.c.bf16 %v3431, %v3429
      %v3440 = vld [vmem:[%s12] sm:$0xf]
      %v3441 = vld [vmem:[%s12 + $0x4] sm:$0xf]
      %v3442 = vld [vmem:[%s12 + $0x8] sm:$0xf]
      %v3443 = vld [vmem:[%s12 + $0xc] sm:$0xf]
      %v3444 = vld [vmem:[%s12 + $0x10] sm:$0xf]
      %v3445 = vld [vmem:[%s12 + $0x14] sm:$0xf]
      %v3446 = vld [vmem:[%s12 + $0x18] sm:$0xf]
      %v3447 = vld [vmem:[%s12 + $0x1c] sm:$0xf]
      %v3448 = vld [vmem:[%s12 + $0x20] sm:$0xf]
      %v3449 = vld [vmem:[%s12 + $0x24] sm:$0xf]
      %v3450 = vld [vmem:[%s12 + $0x28] sm:$0xf]
      %v3451 = vld [vmem:[%s12 + $0x2c] sm:$0xf]
      %v3452 = vld [vmem:[%s12 + $0x30] sm:$0xf]
      %v3453 = vld [vmem:[%s12 + $0x34] sm:$0xf]
      %v3454 = vld [vmem:[%s12 + $0x38] sm:$0xf]
      %v3455 = vld [vmem:[%s12 + $0x3c] sm:$0xf]
      %v3456 = vld [vmem:[%s12 + $0x40] sm:$0xf]
      %v3457 = vld [vmem:[%s12 + $0x44] sm:$0xf]
      %v3458 = vld [vmem:[%s12 + $0x48] sm:$0xf]
      %v3459 = vld [vmem:[%s12 + $0x4c] sm:$0xf]
      %v3460 = vld [vmem:[%s12 + $0x50] sm:$0xf]
      %v3461 = vld [vmem:[%s12 + $0x54] sm:$0xf]
      %v3462 = vld [vmem:[%s12 + $0x58] sm:$0xf]
      %v3463 = vld [vmem:[%s12 + $0x5c] sm:$0xf]
      %v3464 = vld [vmem:[%s12 + $0x60] sm:$0xf]
      %v3465 = vld [vmem:[%s12 + $0x64] sm:$0xf]
      %v3466 = vld [vmem:[%s12 + $0x68] sm:$0xf]
      %v3467 = vld [vmem:[%s12 + $0x6c] sm:$0xf]
      %v3468 = vld [vmem:[%s12 + $0x70] sm:$0xf]
      %v3469 = vld [vmem:[%s12 + $0x74] sm:$0xf]
      %v3470 = vld [vmem:[%s12 + $0x78] sm:$0xf]
      %v3471 = vld [vmem:[%s12 + $0x7c] sm:$0xf]
      %v3472 = vld [vmem:[%s13] sm:$0x1]
      %v3474 = vlaneseq
      %v3475 = vshrl.u32 %v3474, 7
      %v3476 = vsub.s32 0, %v3475
      %v3477 = vrot.slane %v3472, %v3476
      %v3511 = vunpack.c.l.b16 %v3440
      %v3512 = vunpack.c.l.b16 %v3441
      %v3513 = vunpack.c.l.b16 %v3442
      %v3514 = vunpack.c.l.b16 %v3443
      %v3515 = vunpack.c.l.b16 %v3444
      %v3516 = vunpack.c.l.b16 %v3445
      %v3517 = vunpack.c.l.b16 %v3446
      %v3518 = vunpack.c.l.b16 %v3447
      %v3519 = vunpack.c.l.b16 %v3448
      %v3520 = vunpack.c.l.b16 %v3449
      %v3521 = vunpack.c.l.b16 %v3450
      %v3522 = vunpack.c.l.b16 %v3451
      %v3523 = vunpack.c.l.b16 %v3452
      %v3524 = vunpack.c.l.b16 %v3453
      %v3525 = vunpack.c.l.b16 %v3454
      %v3526 = vunpack.c.l.b16 %v3455
      %v3527 = vunpack.c.l.b16 %v3456
      %v3528 = vunpack.c.l.b16 %v3457
      %v3529 = vunpack.c.l.b16 %v3458
      %v3530 = vunpack.c.l.b16 %v3459
      %v3531 = vunpack.c.l.b16 %v3460
      %v3532 = vunpack.c.l.b16 %v3461
      %v3533 = vunpack.c.l.b16 %v3462
      %v3534 = vunpack.c.l.b16 %v3463
      %v3535 = vunpack.c.l.b16 %v3464
      %v3536 = vunpack.c.l.b16 %v3465
      %v3537 = vunpack.c.l.b16 %v3466
      %v3538 = vunpack.c.l.b16 %v3467
      %v3539 = vunpack.c.l.b16 %v3468
      %v3540 = vunpack.c.l.b16 %v3469
      %v3541 = vunpack.c.l.b16 %v3470
      %v3542 = vunpack.c.l.b16 %v3471
      %v3543 = vpack.c.b16 %v3512, %v3511
      %v3544 = vpack.c.b16 %v3514, %v3513
      %v3545 = vpack.c.b16 %v3516, %v3515
      %v3546 = vpack.c.b16 %v3518, %v3517
      %v3547 = vpack.c.b16 %v3520, %v3519
      %v3548 = vpack.c.b16 %v3522, %v3521
      %v3549 = vpack.c.b16 %v3524, %v3523
      %v3550 = vpack.c.b16 %v3526, %v3525
      %v3551 = vpack.c.b16 %v3528, %v3527
      %v3552 = vpack.c.b16 %v3530, %v3529
      %v3553 = vpack.c.b16 %v3532, %v3531
      %v3554 = vpack.c.b16 %v3534, %v3533
      %v3555 = vpack.c.b16 %v3536, %v3535
      %v3556 = vpack.c.b16 %v3538, %v3537
      %v3557 = vpack.c.b16 %v3540, %v3539
      %v3558 = vpack.c.b16 %v3542, %v3541
      %3575 = vmatprep.subr.bf16.mxu0 0
      %3576 = vmatpush1.bf16.msra.mxu0 %v3543
      %3577 = vmatprep.subr.bf16.mxu0 0
      %3578 = vmatpush1.bf16.msra.mxu0 %v3544
      %3579 = vmatprep.subr.bf16.mxu0 0
      %3580 = vmatpush1.bf16.msra.mxu0 %v3545
      %3581 = vmatprep.subr.bf16.mxu0 0
      %3582 = vmatpush1.bf16.msra.mxu0 %v3546
      %3583 = vmatprep.subr.bf16.mxu0 0
      %3584 = vmatpush1.bf16.msra.mxu0 %v3547
      %3585 = vmatprep.subr.bf16.mxu0 0
      %3586 = vmatpush1.bf16.msra.mxu0 %v3548
      %3587 = vmatprep.subr.bf16.mxu0 0
      %3588 = vmatpush1.bf16.msra.mxu0 %v3549
      %3589 = vmatprep.subr.bf16.mxu0 0
      %3590 = vmatpush1.bf16.msra.mxu0 %v3550
      %3591 = vmatprep.subr.bf16.mxu0 0
      %3592 = vmatpush1.bf16.msra.mxu0 %v3551
      %3593 = vmatprep.subr.bf16.mxu0 0
      %3594 = vmatpush1.bf16.msra.mxu0 %v3552
      %3595 = vmatprep.subr.bf16.mxu0 0
      %3596 = vmatpush1.bf16.msra.mxu0 %v3553
      %3597 = vmatprep.subr.bf16.mxu0 0
      %3598 = vmatpush1.bf16.msra.mxu0 %v3554
      %3599 = vmatprep.subr.bf16.mxu0 0
      %3600 = vmatpush1.bf16.msra.mxu0 %v3555
      %3601 = vmatprep.subr.bf16.mxu0 0
      %3602 = vmatpush1.bf16.msra.mxu0 %v3556
      %3603 = vmatprep.subr.bf16.mxu0 0
      %3604 = vmatpush1.bf16.msra.mxu0 %v3557
      %3605 = vmatprep.subr.bf16.mxu0 0
      %3606 = vmatpush1.bf16.msra.mxu0 %v3558
      %3607 = vmatprep.mubr.bf16.mxu0 %v3433
      %3608 = vmatmul.mubr.bf16.gmra.mrb[0].mxu0 %v3432
      %v3609 = vpop.f32.mrb[0].mxu0
      %v3610 = vadd.f32 %v3477, %v3609
      %v3611 = vpop.f32.mrb[0].mxu0
      %v3612 = vpop.f32.mrb[0].mxu0
      %v3613 = vadd.f32 %v3477, %v3612
      %v3614 = vpop.f32.mrb[0].mxu0
      %3615 = vmatprep.mubr.bf16.mxu0 %v3435
      %3616 = vmatmul.mubr.bf16.gmra.mrb[0].mxu0 %v3434
      %v3617 = vpop.f32.mrb[0].mxu0
      %v3618 = vadd.f32 %v3477, %v3617
      %v3619 = vpop.f32.mrb[0].mxu0
      %v3620 = vpop.f32.mrb[0].mxu0
      %v3621 = vadd.f32 %v3477, %v3620
      %v3622 = vpop.f32.mrb[0].mxu0
      %3623 = vmatprep.mubr.bf16.mxu0 %v3437
      %3624 = vmatmul.mubr.bf16.gmra.mrb[0].mxu0 %v3436
      %v3625 = vpop.f32.mrb[0].mxu0
      %v3626 = vadd.f32 %v3477, %v3625
      %v3627 = vpop.f32.mrb[0].mxu0
      %v3628 = vpop.f32.mrb[0].mxu0
      %v3629 = vadd.f32 %v3477, %v3628
      %v3630 = vpop.f32.mrb[0].mxu0
      %3631 = vmatprep.mubr.bf16.mxu0 %v3439
      %3632 = vmatmul.mubr.bf16.gmra.mrb[0].mxu0 %v3438
      %v3633 = vpop.f32.mrb[0].mxu0
      %v3634 = vadd.f32 %v3477, %v3633
      %v3635 = vpop.f32.mrb[0].mxu0
      %v3636 = vpop.f32.mrb[0].mxu0
      %v3637 = vadd.f32 %v3477, %v3636
      %v3638 = vpop.f32.mrb[0].mxu0
      %3639 = vdwg.mxu0
      %v3640 = vadd.f32 %v2997, %v3610
      %v3641 = vadd.f32 %v2998, %v3613
      %v3642 = vadd.f32 %v2999, %v3618
      %v3643 = vadd.f32 %v3000, %v3621
      %v3644 = vadd.f32 %v3001, %v3626
      %v3645 = vadd.f32 %v3002, %v3629
      %v3646 = vadd.f32 %v3003, %v3634
      %v3647 = vadd.f32 %v3004, %v3637
      %3648 = vst.msk [vmem:[%s469] sm:$0xff] %vm482, %v3640
      %3649 = vst.msk [vmem:[%s469 + $0x8] sm:$0xff] %vm482, %v3641
      %3650 = vst.msk [vmem:[%s469 + $0x10] sm:$0xff] %vm482, %v3642
      %3651 = vst.msk [vmem:[%s469 + $0x18] sm:$0xff] %vm482, %v3643
      %3652 = vst.msk [vmem:[%s469 + $0x20] sm:$0xff] %vm482, %v3644
      %3653 = vst.msk [vmem:[%s469 + $0x28] sm:$0xff] %vm482, %v3645
      %3654 = vst.msk [vmem:[%s469 + $0x30] sm:$0xff] %vm482, %v3646
      %3655 = vst.msk [vmem:[%s469 + $0x38] sm:$0xff] %vm482, %v3647
      %s3656 = smul.u32 8, %s25
      %p3657 = scmp.lt.s32.totalorder %s3656, 15
      %s3658 = scalar_select %p3657, %s3656, 15
      %s3659 = smul.addr %s3658, 8
      %s3660 = scalar_lea.vmem %s14, %s3659
      // Predicated region
      $region77: #{stage_forward_pallas.2} parent=75 // pred_check
        %p3661 = pneg %p342
      $region78: #{stage_forward_pallas.2} parent=75 // pred_check_branch
        %3663 = sbr.rel (%p3661) target = $region80
      $region79: #{stage_forward_pallas.2} parent=75 // pred_region
        %s3664 = smul.u32 8, %s25
      $region80: #{stage_forward_pallas.2} parent=75 // pred_fallthru
        _
    $region76: #{stage_forward_pallas.2} parent=5 // pred_fallthru
      _
    %p3665 = scmp.le.s32.totalorder 2, %s20
    // Predicated region
    $region81: #{stage_forward_pallas.2} parent=5 // pred_check
      %p3666 = pneg %p3665
    $region82: #{stage_forward_pallas.2} parent=5 // pred_check_branch
      %3668 = sbr.rel (%p3666) target = $region84
    $region83: #{stage_forward_pallas.2} parent=5 // pred_region
      %s3669 = ssub.s32 %s20, 2
      // Predicated region
      $region85: #{stage_forward_pallas.2} parent=83 // pred_check
        %p3670 = pneg %p348
      $region86: #{stage_forward_pallas.2} parent=83 // pred_check_branch
        %3672 = sbr.rel (%p3670) target = $region88
      $region87: #{stage_forward_pallas.2} parent=83 // pred_region
        %s3673 = smul.u32 8, %s26
        %p3674 = scmp.lt.s32.totalorder %s3673, 15
        %s3675 = scalar_select %p3674, %s3673, 15
        %s3676 = smul.addr %s3675, 8
        %s3677 = scalar_lea.vmem %s14, %s3676
      $region88: #{stage_forward_pallas.2} parent=83 // pred_fallthru
        _
    $region84: #{stage_forward_pallas.2} parent=5 // pred_fallthru
      _
  $region6: #{stage_forward_pallas.2} parent=0 // loop_footer
    %s24 = sadd.s32 1, %s20
  $region7: #{stage_forward_pallas.2} parent=0 // loop_footer_branch
    %19 = sbr.rel target = $region3
  $region8: #{stage_forward_pallas.2} parent=0 // loop_exit
    _

</llo_original>
